<compile_context>
chip_gen: v7x
topology: tpu7x:2x2x1
jax: 0.10.0
libtpu: 0.0.40
codegen_flags: <defaults>
</compile_context>

<pallas_src>
import functools

import numpy as np
import jax
import jax.numpy as jnp
from jax import lax
from jax.experimental import pallas as pl
from jax.experimental.pallas import tpu as pltpu

_LN_EPS = 1e-5  # PyTorch nn.LayerNorm default
_VMEM_LIMIT = 32 * 1024 * 1024


# ----------------------------------------------------------------------------
# Small host-side helpers (layout only).
# ----------------------------------------------------------------------------
def window_partition(x, ws):
    """(B, H, W, C) -> (num_windows*B, ws, ws, C)."""
    B, H, W, C = x.shape
    x = x.reshape(B, H // ws, ws, W // ws, ws, C)
    return x.transpose(0, 1, 3, 2, 4, 5).reshape(-1, ws, ws, C)


def window_reverse(windows, ws, H, W):
    """(num_windows*B, ws, ws, C) -> (B, H, W, C)."""
    B = windows.shape[0] // ((H // ws) * (W // ws))
    x = windows.reshape(B, H // ws, W // ws, ws, ws, -1)
    return x.transpose(0, 1, 3, 2, 4, 5).reshape(B, H, W, -1)


def _relative_position_index(ws):
    coords = np.stack(np.meshgrid(np.arange(ws), np.arange(ws), indexing="ij"))
    flat = coords.reshape(2, -1)                      # (2, N)
    rel = flat[:, :, None] - flat[:, None, :]         # (2, N, N)
    rel = rel.transpose(1, 2, 0).astype(np.int64)     # (N, N, 2)
    rel[:, :, 0] += ws - 1
    rel[:, :, 1] += ws - 1
    rel[:, :, 0] *= 2 * ws - 1
    return rel.sum(-1)                                # (N, N)


def _gather_rel_bias(table, ws, num_heads):
    """(table_size, nH) -> (nH, N, N) bias, gathered once per layer call."""
    N = ws * ws
    idx = _relative_position_index(ws).reshape(-1)
    return table[idx].reshape(N, N, num_heads).transpose(2, 0, 1)


def _build_attn_mask(H, W, ws, shift):
    """Shifted-window attention mask (nW, N, N) with 0 / -100 entries."""
    Hp = int(np.ceil(H / ws)) * ws
    Wp = int(np.ceil(W / ws)) * ws
    img = np.zeros((1, Hp, Wp, 1), np.float32)
    cnt = 0
    for h in (slice(0, -ws), slice(-ws, -shift), slice(-shift, None)):
        for w in (slice(0, -ws), slice(-ws, -shift), slice(-shift, None)):
            img[:, h, w, :] = cnt
            cnt += 1
    mw = (img.reshape(1, Hp // ws, ws, Wp // ws, ws, 1)
             .transpose(0, 1, 3, 2, 4, 5).reshape(-1, ws * ws))
    am = mw[:, None, :] - mw[:, :, None]
    am = np.where(am != 0, -100.0, 0.0).astype(np.float32)
    return jnp.asarray(am)                            # (nW, N, N)


def _gelu_tanh(x):
    # TODO(synk): exact erf-based GELU (PyTorch nn.GELU default).
    return 0.5 * x * (1.0 + jnp.tanh(0.7978845608028654 * (x + 0.044715 * x * x * x)))


def _pick_window_batch(num_windows, n_tok, n_mask, masked,
                       target_rows=128, max_rows=1024):
    """Windows per grid step: multiple of n_mask when masked; ~128 rows per step."""
    step = n_mask if masked else 1
    best = None
    wb = step
    while wb <= num_windows:
        if num_windows % wb == 0 and wb * n_tok <= max_rows:
            best = wb
            if wb * n_tok >= target_rows:
                break
        wb += step
    if best is None:
        best = step if (step <= num_windows and num_windows % step == 0) else 1
    return best


def _pick_row_tile(T):
    """Largest row tile (<=512) dividing T while keeping >=2 grid steps."""
    for cand in (512, 256, 128, 64, 32, 16, 8):
        if T % cand == 0 and T // cand >= 2:
            return cand
    return T


# ----------------------------------------------------------------------------
# Kernel 1: fused LN1 + QKV + window attention (+ bias + mask) + proj + residual
#   Processes `wb` windows (wb*N rows) per grid step, flat (wb*N, C) layout.
# ----------------------------------------------------------------------------
def _window_attn_kernel(*refs, num_heads, head_dim, scale, eps, wb, n_tok,
                        n_mask, has_mask, has_valid):
    it = iter(refs)
    x_ref = next(it)
    valid_ref = next(it) if has_valid else None
    mask_ref = next(it) if has_mask else None
    bias_ref = next(it)
    g1_ref = next(it)
    b1_ref = next(it)
    wqkv_ref = next(it)
    bqkv_ref = next(it)
    wproj_ref = next(it)
    bproj_ref = next(it)
    o_ref = next(it)
    acc_ref = next(it)                                # (wb*N, C) f32 VMEM scratch

    x = x_ref[...]                                    # (M, C) f32, M = wb*N (residual)
    C = x.shape[-1]

    # LayerNorm over channels (f32).
    mu = jnp.mean(x, axis=-1, keepdims=True)
    xc = x - mu
    var = jnp.mean(xc * xc, axis=-1, keepdims=True)
    xn = xc * lax.rsqrt(var + eps) * g1_ref[...] + b1_ref[...]
    if has_valid:
        # Zero padded tokens (matches PyTorch's zero-pad applied *after* norm1).
        xn = xn * valid_ref[...]

    # QKV projection: bf16 MXU operands, f32 accumulation.
    qkv = jnp.dot(xn.astype(jnp.bfloat16), wqkv_ref[...],
                  preferred_element_type=jnp.float32) + bqkv_ref[...]
    q = qkv[:, :C] * scale                            # scale in f32 (pre bf16 cast)
    k = qkv[:, C:2 * C]
    v = qkv[:, 2 * C:]
    q3 = q.reshape(wb, n_tok, C)
    k3 = k.reshape(wb, n_tok, C)
    v3 = v.reshape(wb, n_tok, C)

    if has_mask:
        m_all = mask_ref[...]                         # (n_mask, N, N), VMEM-resident

    for h in range(num_heads):                        # static unroll over heads
        sl = slice(h * head_dim, (h + 1) * head_dim)
        qh = q3[:, :, sl].astype(jnp.bfloat16)
        kh = k3[:, :, sl].astype(jnp.bfloat16)
        s = jnp.einsum("wnd,wmd->wnm", qh, kh,
                       preferred_element_type=jnp.float32)   # (wb, N, N) f32
        s = s + bias_ref[h]
        if has_mask:
            # wb % n_mask == 0 by construction -> static per-window mask index.
            if wb == n_mask:
                s = s + m_all
            else:
                s = (s.reshape(wb // n_mask, n_mask, n_tok, n_tok)
                     + m_all[None]).reshape(wb, n_tok, n_tok)
        s = s - jnp.max(s, axis=-1, keepdims=True)
        e = jnp.exp(s)
        p = e * pl.reciprocal(jnp.sum(e, axis=-1, keepdims=True), approx=True)
        oh = jnp.einsum("wnm,wmd->wnd", p.astype(jnp.bfloat16),
                        v3[:, :, sl].astype(jnp.bfloat16),
                        preferred_element_type=jnp.float32)  # (wb, N, hd)
        acc_ref[:, sl] = oh.reshape(wb * n_tok, head_dim)    # scratch write (no concat)

    y = jnp.dot(acc_ref[...].astype(jnp.bfloat16), wproj_ref[...],
                preferred_element_type=jnp.float32) + bproj_ref[...]
    o_ref[...] = (x + y).astype(o_ref.dtype)          # fused residual add


def _window_attention_pallas(x2d, valid2d, mask, rel_bias, bp, num_heads, wb):
    M_total, C = x2d.shape
    num_heads_, n_tok, _ = rel_bias.shape
    assert num_heads_ == num_heads
    num_windows = M_total // n_tok
    head_dim = C // num_heads
    has_mask = mask is not None
    has_valid = valid2d is not None
    n_mask = mask.shape[0] if has_mask else 1
    rows = wb * n_tok

    kernel = functools.partial(
        _window_attn_kernel, num_heads=num_heads, head_dim=head_dim,
        scale=float(head_dim) ** -0.5, eps=_LN_EPS, wb=wb, n_tok=n_tok,
        n_mask=n_mask, has_mask=has_mask, has_valid=has_valid)

    in_specs = [pl.BlockSpec((rows, C), lambda i: (i, 0))]        # x windows (flat)
    operands = [x2d]
    if has_valid:
        in_specs.append(pl.BlockSpec((rows, 1), lambda i: (i, 0)))  # validity mask
        operands.append(valid2d)
    if has_mask:
        # Full shift mask, resident in VMEM (constant index map, no per-step DMA).
        in_specs.append(pl.BlockSpec((n_mask, n_tok, n_tok), lambda i: (0, 0, 0)))
        operands.append(mask)
    # Constant-index_map blocks: resident across the whole grid.
    # TODO(synk): pipeline_mode=pl.Buffered(1) on these constant blocks to drop
    # the double-buffered VMEM copies at production sizes.
    in_specs += [
        pl.BlockSpec((num_heads, n_tok, n_tok), lambda i: (0, 0, 0)),  # rel-pos bias
        pl.BlockSpec((1, C), lambda i: (0, 0)),                        # ln1 gamma
        pl.BlockSpec((1, C), lambda i: (0, 0)),                        # ln1 beta
        pl.BlockSpec((C, 3 * C), lambda i: (0, 0)),                    # W_qkv (bf16)
        pl.BlockSpec((1, 3 * C), lambda i: (0, 0)),                    # b_qkv
        pl.BlockSpec((C, C), lambda i: (0, 0)),                        # W_proj (bf16)
        pl.BlockSpec((1, C), lambda i: (0, 0)),                        # b_proj
    ]
    operands += [rel_bias, bp["ln1_g"], bp["ln1_b"], bp["w_qkv_bf16"],
                 bp["b_qkv"], bp["w_proj_bf16"], bp["b_proj"]]

    return pl.pallas_call(
        kernel,
        out_shape=jax.ShapeDtypeStruct((M_total, C), jnp.float32),
        grid_spec=pltpu.PrefetchScalarGridSpec(
            num_scalar_prefetch=0,
            grid=(num_windows // wb,),
            in_specs=in_specs,
            out_specs=pl.BlockSpec((rows, C), lambda i: (i, 0)),
            scratch_shapes=[pltpu.VMEM((rows, C), jnp.float32)]),
        compiler_params=pltpu.CompilerParams(
            dimension_semantics=("parallel",),
            vmem_limit_bytes=_VMEM_LIMIT),
    )(*operands)


# ----------------------------------------------------------------------------
# Kernel 2: fused LN2 + fc1 + GELU + fc2 + residual
# ----------------------------------------------------------------------------
def _mlp_kernel(x_ref, g_ref, b_ref, w1_ref, b1_ref, w2_ref, b2_ref, o_ref, *, eps):
    x = x_ref[...]                                    # (TM, C) f32 (residual)
    mu = jnp.mean(x, axis=-1, keepdims=True)
    xc = x - mu
    var = jnp.mean(xc * xc, axis=-1, keepdims=True)
    xn = xc * lax.rsqrt(var + eps) * g_ref[...] + b_ref[...]
    h = jnp.dot(xn.astype(jnp.bfloat16), w1_ref[...],
                preferred_element_type=jnp.float32) + b1_ref[...]
    h = _gelu_tanh(h)                                 # f32 elementwise
    y = jnp.dot(h.astype(jnp.bfloat16), w2_ref[...],
                preferred_element_type=jnp.float32) + b2_ref[...]
    o_ref[...] = (x + y).astype(o_ref.dtype)          # fused residual add


def _mlp_pallas(x2d, bp):
    T, C = x2d.shape
    Hd = bp["w_fc1_bf16"].shape[1]
    tm = _pick_row_tile(T)                            # >=2 grid steps when possible

    # TODO(synk): at production C (weights >> VMEM on v7x's 64 MiB), add a grid
    # axis over the hidden dim with an f32 accumulator + pl.when init/finalize.
    kernel = functools.partial(_mlp_kernel, eps=_LN_EPS)
    return pl.pallas_call(
        kernel,
        out_shape=jax.ShapeDtypeStruct((T, C), jnp.float32),
        grid_spec=pltpu.PrefetchScalarGridSpec(
            num_scalar_prefetch=0,
            grid=(T // tm,),
            in_specs=[
                pl.BlockSpec((tm, C), lambda i: (i, 0)),
                pl.BlockSpec((1, C), lambda i: (0, 0)),
                pl.BlockSpec((1, C), lambda i: (0, 0)),
                pl.BlockSpec((C, Hd), lambda i: (0, 0)),   # W_fc1 (bf16)
                pl.BlockSpec((1, Hd), lambda i: (0, 0)),
                pl.BlockSpec((Hd, C), lambda i: (0, 0)),   # W_fc2 (bf16)
                pl.BlockSpec((1, C), lambda i: (0, 0)),
            ],
            out_specs=pl.BlockSpec((tm, C), lambda i: (i, 0)),
        ),
        compiler_params=pltpu.CompilerParams(
            dimension_semantics=("parallel",),
            vmem_limit_bytes=_VMEM_LIMIT),
    )(x2d, bp["ln2_g"], bp["ln2_b"],
      bp["w_fc1_bf16"], bp["b_fc1"], bp["w_fc2_bf16"], bp["b_fc2"])


# ----------------------------------------------------------------------------
# Block / layer forward (Pallas path)
# ----------------------------------------------------------------------------
def _prep_block_params(bp):
    """Cast matmul weights to bf16 once; reshape 1-D params to (1, D)."""
    return dict(
        ln1_g=bp["ln1_g"].reshape(1, -1), ln1_b=bp["ln1_b"].reshape(1, -1),
        ln2_g=bp["ln2_g"].reshape(1, -1), ln2_b=bp["ln2_b"].reshape(1, -1),
        w_qkv_bf16=bp["w_qkv"].astype(jnp.bfloat16),
        b_qkv=bp["b_qkv"].reshape(1, -1),
        w_proj_bf16=bp["w_proj"].astype(jnp.bfloat16),
        b_proj=bp["b_proj"].reshape(1, -1),
        w_fc1_bf16=bp["w_fc1"].astype(jnp.bfloat16),
        b_fc1=bp["b_fc1"].reshape(1, -1),
        w_fc2_bf16=bp["w_fc2"].astype(jnp.bfloat16),
        b_fc2=bp["b_fc2"].reshape(1, -1),
        rel_table=bp["rel_table"],
    )


def _swin_block_pallas(x, H, W, bp, ws, shift, attn_mask, num_heads):
    B, L, C = x.shape
    N = ws * ws

    xi = x.reshape(B, H, W, C)                        # pre-norm (also the residual)
    pad_b = (-H) % ws
    pad_r = (-W) % ws
    has_pad = bool(pad_b or pad_r)
    if has_pad:
        xi = jnp.pad(xi, ((0, 0), (0, pad_b), (0, pad_r), (0, 0)))
        valid = jnp.pad(jnp.ones((B, H, W, 1), jnp.float32),
                        ((0, 0), (0, pad_b), (0, pad_r), (0, 0)))
    Hp, Wp = H + pad_b, W + pad_r

    if shift > 0:
        xi = jnp.roll(xi, (-shift, -shift), axis=(1, 2))
        if has_pad:
            valid = jnp.roll(valid, (-shift, -shift), axis=(1, 2))
        mask = attn_mask
    else:
        mask = None                                   # trace-time specialization

    # TODO(synk): at production sizes express window partition/reverse via
    # BlockSpec index maps on the padded (B,Hp,Wp,C) tensor (no HBM transpose).
    x2d = window_partition(xi, ws).reshape(-1, C)                 # (B_*N, C)
    valid2d = window_partition(valid, ws).reshape(-1, 1) if has_pad else None
    rel_bias = _gather_rel_bias(bp["rel_table"], ws, num_heads)

    num_windows = x2d.shape[0] // N
    wb = _pick_window_batch(num_windows, N, attn_mask.shape[0], masked=(shift > 0))

    # Fused LN1 + attention + proj + residual (residual = x2d itself).
    out2d = _window_attention_pallas(x2d, valid2d, mask, rel_bias, bp, num_heads, wb)

    oi = window_reverse(out2d.reshape(-1, ws, ws, C), ws, Hp, Wp)
    if shift > 0:
        oi = jnp.roll(oi, (shift, shift), axis=(1, 2))
    x = oi[:, :H, :W, :].reshape(B, L, C)

    # Fused LN2 + MLP + residual.
    return _mlp_pallas(x.reshape(B * L, C), bp).reshape(B, L, C)


def basic_layer_forward(x, H, W, params, window_size, num_heads):
    """BasicLayer.forward (downsample=None). x: (B, H*W, C) float32."""
    shift = window_size // 2
    attn_mask = _build_attn_mask(H, W, window_size, shift)
    prepped = [_prep_block_params(bp) for bp in params]
    for i, bp in enumerate(prepped):
        s = 0 if i % 2 == 0 else shift
        x = _swin_block_pallas(x, H, W, bp, window_size, s, attn_mask, num_heads)
    return x, H, W, x, H, W


# ----------------------------------------------------------------------------
# Pure-JAX reference (mirrors the PyTorch module in eval mode; matmul operands
# are cast to bf16 to mirror the kernel's MXU precision; tanh GELU).
# ----------------------------------------------------------------------------
def _layer_norm(x, g, b, eps=_LN_EPS):
    mu = jnp.mean(x, axis=-1, keepdims=True)
    var = jnp.mean((x - mu) ** 2, axis=-1, keepdims=True)
    return (x - mu) * lax.rsqrt(var + eps) * g + b


def _mm(a, b):
    return jnp.dot(a.astype(jnp.bfloat16), b.astype(jnp.bfloat16),
                   preferred_element_type=jnp.float32)


def _ref_block(x, H, W, bp, ws, shift, attn_mask, num_heads):
    B, L, C = x.shape
    hd = C // num_heads
    scale = hd ** -0.5
    N = ws * ws

    shortcut = x
    xn = _layer_norm(x, bp["ln1_g"], bp["ln1_b"]).reshape(B, H, W, C)
    pad_b = (-H) % ws
    pad_r = (-W) % ws
    if pad_b or pad_r:
        xn = jnp.pad(xn, ((0, 0), (0, pad_b), (0, pad_r), (0, 0)))
    Hp, Wp = H + pad_b, W + pad_r
    if shift > 0:
        xn = jnp.roll(xn, (-shift, -shift), axis=(1, 2))

    xw = window_partition(xn, ws).reshape(-1, N, C)
    B_ = xw.shape[0]

    qkv = _mm(xw.reshape(-1, C), bp["w_qkv"]) + bp["b_qkv"]
    qkv = qkv.reshape(B_, N, 3, num_heads, hd).transpose(2, 0, 3, 1, 4)
    q, k, v = qkv[0] * scale, qkv[1], qkv[2]          # (B_, nH, N, hd) f32
    attn = jnp.einsum("bhnd,bhmd->bhnm", q.astype(jnp.bfloat16),
                      k.astype(jnp.bfloat16), preferred_element_type=jnp.float32)
    attn = attn + _gather_rel_bias(bp["rel_table"], ws, num_heads)[None]
    if shift > 0:
        nW = attn_mask.shape[0]
        attn = attn.reshape(B_ // nW, nW, num_heads, N, N) + attn_mask[None, :, None]
        attn = attn.reshape(B_, num_heads, N, N)
    attn = jax.nn.softmax(attn, axis=-1)
    out = jnp.einsum("bhnm,bhmd->bhnd", attn.astype(jnp.bfloat16),
                     v.astype(jnp.bfloat16), preferred_element_type=jnp.float32)
    out = out.transpose(0, 2, 1, 3).reshape(B_, N, C)
    out = _mm(out.reshape(-1, C), bp["w_proj"]).reshape(B_, N, C) + bp["b_proj"]

    oi = window_reverse(out.reshape(-1, ws, ws, C), ws, Hp, Wp)
    if shift > 0:
        oi = jnp.roll(oi, (shift, shift), axis=(1, 2))
    x = shortcut + oi[:, :H, :W, :].reshape(B, L, C)

    xn2 = _layer_norm(x, bp["ln2_g"], bp["ln2_b"]).reshape(-1, C)
    h = _gelu_tanh(_mm(xn2, bp["w_fc1"]) + bp["b_fc1"])
    y = (_mm(h, bp["w_fc2"]) + bp["b_fc2"]).reshape(B, L, C)
    return x + y


def reference_forward(x, H, W, params, window_size, num_heads):
    shift = window_size // 2
    attn_mask = _build_attn_mask(H, W, window_size, shift)
    for i, bp in enumerate(params):
        s = 0 if i % 2 == 0 else shift
        x = _ref_block(x, H, W, bp, window_size, s, attn_mask, num_heads)
    return x


# ----------------------------------------------------------------------------
# Parameters
# ----------------------------------------------------------------------------
def make_params(key, dim, depth, num_heads, window_size, mlp_ratio):
    hidden = int(dim * mlp_ratio)
    tbl = (2 * window_size - 1) ** 2
    blocks = []
    for kb in jax.random.split(key, depth):
        ks = jax.random.split(kb, 13)
        blocks.append(dict(
            ln1_g=1.0 + 0.1 * jax.random.normal(ks[0], (dim,), jnp.float32),
            ln1_b=0.1 * jax.random.normal(ks[1], (dim,), jnp.float32),
            w_qkv=0.1 * jax.random.normal(ks[2], (dim, 3 * dim), jnp.float32),
            b_qkv=0.1 * jax.random.normal(ks[3], (3 * dim,), jnp.float32),
            rel_table=0.02 * jax.random.normal(ks[4], (tbl, num_heads), jnp.float32),
            w_proj=0.1 * jax.random.normal(ks[5], (dim, dim), jnp.float32),
            b_proj=0.1 * jax.random.normal(ks[6], (dim,), jnp.float32),
            ln2_g=1.0 + 0.1 * jax.random.normal(ks[7], (dim,), jnp.float32),
            ln2_b=0.1 * jax.random.normal(ks[8], (dim,), jnp.float32),
            w_fc1=0.1 * jax.random.normal(ks[9], (dim, hidden), jnp.float32),
            b_fc1=0.1 * jax.random.normal(ks[10], (hidden,), jnp.float32),
            w_fc2=0.1 * jax.random.normal(ks[11], (hidden, dim), jnp.float32),
            b_fc2=0.1 * jax.random.normal(ks[12], (dim,), jnp.float32),
        ))
    return blocks


if __name__ == "__main__":
    # BasicLayer(dim=32, depth=2, num_heads=4, window_size=4, mlp_ratio=4.0,
    #            downsample=None) on a (B=2, H=W=8) feature map.
    B, H, W, C = 2, 8, 8, 32
    depth, num_heads, window_size, mlp_ratio = 2, 4, 4, 4.0

    key = jax.random.PRNGKey(0)
    kx, kp = jax.random.split(key)
    x = jax.random.normal(kx, (B, H * W, C), jnp.float32)
    params = make_params(kp, C, depth, num_heads, window_size, mlp_ratio)

    out = basic_layer_forward(x, H, W, params, window_size, num_heads)[0]
    out = jax.block_until_ready(out)
    ref = jax.block_until_ready(
        reference_forward(x, H, W, params, window_size, num_heads))

    assert out.shape == (B, H * W, C)
    err = float(jnp.max(jnp.abs(out - ref)))
    # bf16 MXU operands + approx-reciprocal softmax -> 1e-2 tolerance.
    assert jnp.allclose(out, ref, atol=1e-2, rtol=1e-2), f"max abs err = {err}"
    print("KERNEL_OK")
</pallas_src>

<mosaic_0001>
module attributes {stable_mosaic.version = 11 : i64} {
  func.func @_window_attn_kernel(%arg0: i32, %arg1: memref<128x32xf32, #tpu.memory_space<vmem>>, %arg2: memref<4x16x16xf32, #tpu.memory_space<vmem>>, %arg3: memref<1x32xf32, #tpu.memory_space<vmem>>, %arg4: memref<1x32xf32, #tpu.memory_space<vmem>>, %arg5: memref<32x96xbf16, #tpu.memory_space<vmem>>, %arg6: memref<1x96xf32, #tpu.memory_space<vmem>>, %arg7: memref<32x32xbf16, #tpu.memory_space<vmem>>, %arg8: memref<1x32xf32, #tpu.memory_space<vmem>>, %arg9: memref<128x32xf32, #tpu.memory_space<vmem>>, %arg10: memref<128x32xf32, #tpu.memory_space<vmem>>) attributes {dimension_semantics = [#tpu.dimension_semantics<parallel>], iteration_bounds = array<i64: 1>, scalar_prefetch = 0 : i64, scratch_operands = 1 : i64, tpu.core_type = #tpu.core_type<tc>, window_params = [{transform_indices = @transform_0, window_bounds = array<i64: 128, 32>}, {pipeline_mode = #tpu.pipeline_mode<synchronous>, transform_indices = @transform_1, window_bounds = array<i64: 4, 16, 16>}, {pipeline_mode = #tpu.pipeline_mode<synchronous>, transform_indices = @transform_2, window_bounds = array<i64: 1, 32>}, {pipeline_mode = #tpu.pipeline_mode<synchronous>, transform_indices = @transform_3, window_bounds = array<i64: 1, 32>}, {pipeline_mode = #tpu.pipeline_mode<synchronous>, transform_indices = @transform_4, window_bounds = array<i64: 32, 96>}, {pipeline_mode = #tpu.pipeline_mode<synchronous>, transform_indices = @transform_5, window_bounds = array<i64: 1, 96>}, {pipeline_mode = #tpu.pipeline_mode<synchronous>, transform_indices = @transform_6, window_bounds = array<i64: 32, 32>}, {pipeline_mode = #tpu.pipeline_mode<synchronous>, transform_indices = @transform_7, window_bounds = array<i64: 1, 32>}, {transform_indices = @transform_8, window_bounds = array<i64: 128, 32>}]} {
    %c0 = arith.constant 0 : index
    %c0_0 = arith.constant 0 : index
    %0 = vector.load %arg1[%c0, %c0_0] : memref<128x32xf32, #tpu.memory_space<vmem>>, vector<128x32xf32>
    %cst = arith.constant dense<0.000000e+00> : vector<128xf32>
    %1 = vector.multi_reduction <add>, %0, %cst [1] : vector<128x32xf32> to vector<128xf32>
    %2 = vector.shape_cast %1 : vector<128xf32> to vector<128x1xf32>
    %cst_1 = arith.constant 3.200000e+01 : f32
    %3 = vector.broadcast %cst_1 : f32 to vector<128x1xf32>
    %4 = arith.divf %2, %3 : vector<128x1xf32>
    %5 = vector.broadcast %4 : vector<128x1xf32> to vector<128x32xf32>
    %6 = arith.subf %0, %5 : vector<128x32xf32>
    %7 = arith.mulf %6, %6 : vector<128x32xf32>
    %cst_2 = arith.constant dense<0.000000e+00> : vector<128xf32>
    %8 = vector.multi_reduction <add>, %7, %cst_2 [1] : vector<128x32xf32> to vector<128xf32>
    %9 = vector.shape_cast %8 : vector<128xf32> to vector<128x1xf32>
    %cst_3 = arith.constant 3.200000e+01 : f32
    %10 = vector.broadcast %cst_3 : f32 to vector<128x1xf32>
    %11 = arith.divf %9, %10 : vector<128x1xf32>
    %cst_4 = arith.constant 9.99999974E-6 : f32
    %12 = vector.broadcast %cst_4 : f32 to vector<128x1xf32>
    %13 = arith.addf %11, %12 : vector<128x1xf32>
    %14 = math.rsqrt %13 : vector<128x1xf32>
    %15 = vector.broadcast %14 : vector<128x1xf32> to vector<128x32xf32>
    %16 = arith.mulf %6, %15 : vector<128x32xf32>
    %c0_5 = arith.constant 0 : index
    %c0_6 = arith.constant 0 : index
    %17 = vector.load %arg3[%c0_5, %c0_6] : memref<1x32xf32, #tpu.memory_space<vmem>>, vector<1x32xf32>
    %18 = vector.broadcast %17 : vector<1x32xf32> to vector<128x32xf32>
    %19 = arith.mulf %16, %18 : vector<128x32xf32>
    %c0_7 = arith.constant 0 : index
    %c0_8 = arith.constant 0 : index
    %20 = vector.load %arg4[%c0_7, %c0_8] : memref<1x32xf32, #tpu.memory_space<vmem>>, vector<1x32xf32>
    %21 = vector.broadcast %20 : vector<1x32xf32> to vector<128x32xf32>
    %22 = arith.addf %19, %21 : vector<128x32xf32>
    %23 = arith.truncf %22 : vector<128x32xf32> to vector<128x32xbf16>
    %c0_9 = arith.constant 0 : index
    %c0_10 = arith.constant 0 : index
    %24 = vector.load %arg5[%c0_9, %c0_10] : memref<32x96xbf16, #tpu.memory_space<vmem>>, vector<32x96xbf16>
    %cst_11 = arith.constant dense<0.000000e+00> : vector<128x96xf32>
    %25 = tpu.matmul %23, %24, %cst_11 {dimension_numbers = #tpu.dot_dimension_numbers<[1], [0], [0], [1], [0, 0, 1, 1], [], []>} : vector<128x32xbf16>, vector<32x96xbf16>, vector<128x96xf32> -> vector<128x96xf32>
    %c0_12 = arith.constant 0 : index
    %c0_13 = arith.constant 0 : index
    %26 = vector.load %arg6[%c0_12, %c0_13] : memref<1x96xf32, #tpu.memory_space<vmem>>, vector<1x96xf32>
    %27 = vector.broadcast %26 : vector<1x96xf32> to vector<128x96xf32>
    %28 = arith.addf %25, %27 : vector<128x96xf32>
    %29 = vector.extract_strided_slice %28 {offsets = [0, 0], sizes = [128, 32], strides = [1, 1]} : vector<128x96xf32> to vector<128x32xf32>
    %cst_14 = arith.constant 0.353553385 : f32
    %30 = vector.broadcast %cst_14 : f32 to vector<128x32xf32>
    %31 = arith.mulf %29, %30 : vector<128x32xf32>
    %32 = vector.extract_strided_slice %28 {offsets = [0, 32], sizes = [128, 32], strides = [1, 1]} : vector<128x96xf32> to vector<128x32xf32>
    %33 = vector.extract_strided_slice %28 {offsets = [0, 64], sizes = [128, 32], strides = [1, 1]} : vector<128x96xf32> to vector<128x32xf32>
    %34 = vector.shape_cast %31 : vector<128x32xf32> to vector<8x16x32xf32>
    %35 = vector.shape_cast %32 : vector<128x32xf32> to vector<8x16x32xf32>
    %36 = vector.shape_cast %33 : vector<128x32xf32> to vector<8x16x32xf32>
    %37 = vector.extract_strided_slice %34 {offsets = [0, 0, 0], sizes = [8, 16, 8], strides = [1, 1, 1]} : vector<8x16x32xf32> to vector<8x16x8xf32>
    %38 = arith.truncf %37 : vector<8x16x8xf32> to vector<8x16x8xbf16>
    %39 = vector.extract_strided_slice %35 {offsets = [0, 0, 0], sizes = [8, 16, 8], strides = [1, 1, 1]} : vector<8x16x32xf32> to vector<8x16x8xf32>
    %40 = arith.truncf %39 : vector<8x16x8xf32> to vector<8x16x8xbf16>
    "tpu.trace_start"() <{level = 10 : i32, message = "wnd,wmd->wnm"}> : () -> ()
    %cst_15 = arith.constant dense<0.000000e+00> : vector<8x16x16xf32>
    %41 = tpu.matmul %38, %40, %cst_15 {dimension_numbers = #tpu.dot_dimension_numbers<[2], [2], [1], [1], [0, 0, 0, 1, 1, 1], [0], [0]>} : vector<8x16x8xbf16>, vector<8x16x8xbf16>, vector<8x16x16xf32> -> vector<8x16x16xf32>
    "tpu.trace_stop"() : () -> ()
    %c0_16 = arith.constant 0 : index
    %c0_17 = arith.constant 0 : index
    %c0_18 = arith.constant 0 : index
    %42 = vector.load %arg2[%c0_16, %c0_17, %c0_18] : memref<4x16x16xf32, #tpu.memory_space<vmem>>, vector<1x16x16xf32>
    %43 = vector.shape_cast %42 : vector<1x16x16xf32> to vector<16x16xf32>
    %44 = vector.shape_cast %43 : vector<16x16xf32> to vector<1x16x16xf32>
    %45 = vector.broadcast %44 : vector<1x16x16xf32> to vector<8x16x16xf32>
    %46 = arith.addf %41, %45 : vector<8x16x16xf32>
    %cst_19 = arith.constant dense<0xFF800000> : vector<8x16xf32>
    %47 = vector.multi_reduction <maximumf>, %46, %cst_19 [2] : vector<8x16x16xf32> to vector<8x16xf32>
    %48 = vector.shape_cast %47 : vector<8x16xf32> to vector<8x16x1xf32>
    %49 = vector.broadcast %48 : vector<8x16x1xf32> to vector<8x16x16xf32>
    %50 = arith.subf %46, %49 : vector<8x16x16xf32>
    %51 = math.exp %50 : vector<8x16x16xf32>
    %cst_20 = arith.constant dense<0.000000e+00> : vector<8x16xf32>
    %52 = vector.multi_reduction <add>, %51, %cst_20 [2] : vector<8x16x16xf32> to vector<8x16xf32>
    %53 = vector.shape_cast %52 : vector<8x16xf32> to vector<8x16x1xf32>
    %54 = tpu.reciprocal %53 {approx = true} : vector<8x16x1xf32> -> vector<8x16x1xf32>
    %55 = vector.broadcast %54 : vector<8x16x1xf32> to vector<8x16x16xf32>
    %56 = arith.mulf %51, %55 : vector<8x16x16xf32>
    %57 = arith.truncf %56 : vector<8x16x16xf32> to vector<8x16x16xbf16>
    %58 = vector.extract_strided_slice %36 {offsets = [0, 0, 0], sizes = [8, 16, 8], strides = [1, 1, 1]} : vector<8x16x32xf32> to vector<8x16x8xf32>
    %59 = arith.truncf %58 : vector<8x16x8xf32> to vector<8x16x8xbf16>
    "tpu.trace_start"() <{level = 10 : i32, message = "wnm,wmd->wnd"}> : () -> ()
    %cst_21 = arith.constant dense<0.000000e+00> : vector<8x16x8xf32>
    %60 = tpu.matmul %57, %59, %cst_21 {dimension_numbers = #tpu.dot_dimension_numbers<[2], [1], [1], [2], [0, 0, 0, 1, 1, 2], [0], [0]>} : vector<8x16x16xbf16>, vector<8x16x8xbf16>, vector<8x16x8xf32> -> vector<8x16x8xf32>
    "tpu.trace_stop"() : () -> ()
    %61 = vector.shape_cast %60 : vector<8x16x8xf32> to vector<128x8xf32>
    %c0_22 = arith.constant 0 : index
    %c0_23 = arith.constant 0 : index
    %62 = vector.load %arg10[%c0_22, %c0_23] : memref<128x32xf32, #tpu.memory_space<vmem>>, vector<128x8xf32>
    tpu.vector_store %arg10[%c0_22, %c0_23], %61 {strides = array<i32>} : memref<128x32xf32, #tpu.memory_space<vmem>>, vector<128x8xf32>,
    %63 = vector.extract_strided_slice %34 {offsets = [0, 0, 8], sizes = [8, 16, 8], strides = [1, 1, 1]} : vector<8x16x32xf32> to vector<8x16x8xf32>
    %64 = arith.truncf %63 : vector<8x16x8xf32> to vector<8x16x8xbf16>
    %65 = vector.extract_strided_slice %35 {offsets = [0, 0, 8], sizes = [8, 16, 8], strides = [1, 1, 1]} : vector<8x16x32xf32> to vector<8x16x8xf32>
    %66 = arith.truncf %65 : vector<8x16x8xf32> to vector<8x16x8xbf16>
    "tpu.trace_start"() <{level = 10 : i32, message = "wnd,wmd->wnm"}> : () -> ()
    %cst_24 = arith.constant dense<0.000000e+00> : vector<8x16x16xf32>
    %67 = tpu.matmul %64, %66, %cst_24 {dimension_numbers = #tpu.dot_dimension_numbers<[2], [2], [1], [1], [0, 0, 0, 1, 1, 1], [0], [0]>} : vector<8x16x8xbf16>, vector<8x16x8xbf16>, vector<8x16x16xf32> -> vector<8x16x16xf32>
    "tpu.trace_stop"() : () -> ()
    %c1 = arith.constant 1 : index
    %c0_25 = arith.constant 0 : index
    %c0_26 = arith.constant 0 : index
    %68 = vector.load %arg2[%c1, %c0_25, %c0_26] : memref<4x16x16xf32, #tpu.memory_space<vmem>>, vector<1x16x16xf32>
    %69 = vector.shape_cast %68 : vector<1x16x16xf32> to vector<16x16xf32>
    %70 = vector.shape_cast %69 : vector<16x16xf32> to vector<1x16x16xf32>
    %71 = vector.broadcast %70 : vector<1x16x16xf32> to vector<8x16x16xf32>
    %72 = arith.addf %67, %71 : vector<8x16x16xf32>
    %cst_27 = arith.constant dense<0xFF800000> : vector<8x16xf32>
    %73 = vector.multi_reduction <maximumf>, %72, %cst_27 [2] : vector<8x16x16xf32> to vector<8x16xf32>
    %74 = vector.shape_cast %73 : vector<8x16xf32> to vector<8x16x1xf32>
    %75 = vector.broadcast %74 : vector<8x16x1xf32> to vector<8x16x16xf32>
    %76 = arith.subf %72, %75 : vector<8x16x16xf32>
    %77 = math.exp %76 : vector<8x16x16xf32>
    %cst_28 = arith.constant dense<0.000000e+00> : vector<8x16xf32>
    %78 = vector.multi_reduction <add>, %77, %cst_28 [2] : vector<8x16x16xf32> to vector<8x16xf32>
    %79 = vector.shape_cast %78 : vector<8x16xf32> to vector<8x16x1xf32>
    %80 = tpu.reciprocal %79 {approx = true} : vector<8x16x1xf32> -> vector<8x16x1xf32>
    %81 = vector.broadcast %80 : vector<8x16x1xf32> to vector<8x16x16xf32>
    %82 = arith.mulf %77, %81 : vector<8x16x16xf32>
    %83 = arith.truncf %82 : vector<8x16x16xf32> to vector<8x16x16xbf16>
    %84 = vector.extract_strided_slice %36 {offsets = [0, 0, 8], sizes = [8, 16, 8], strides = [1, 1, 1]} : vector<8x16x32xf32> to vector<8x16x8xf32>
    %85 = arith.truncf %84 : vector<8x16x8xf32> to vector<8x16x8xbf16>
    "tpu.trace_start"() <{level = 10 : i32, message = "wnm,wmd->wnd"}> : () -> ()
    %cst_29 = arith.constant dense<0.000000e+00> : vector<8x16x8xf32>
    %86 = tpu.matmul %83, %85, %cst_29 {dimension_numbers = #tpu.dot_dimension_numbers<[2], [1], [1], [2], [0, 0, 0, 1, 1, 2], [0], [0]>} : vector<8x16x16xbf16>, vector<8x16x8xbf16>, vector<8x16x8xf32> -> vector<8x16x8xf32>
    "tpu.trace_stop"() : () -> ()
    %87 = vector.shape_cast %86 : vector<8x16x8xf32> to vector<128x8xf32>
    %c0_30 = arith.constant 0 : index
    %c8 = arith.constant 8 : index
    %88 = vector.load %arg10[%c0_30, %c8] : memref<128x32xf32, #tpu.memory_space<vmem>>, vector<128x8xf32>
    tpu.vector_store %arg10[%c0_30, %c8], %87 {strides = array<i32>} : memref<128x32xf32, #tpu.memory_space<vmem>>, vector<128x8xf32>,
    %89 = vector.extract_strided_slice %34 {offsets = [0, 0, 16], sizes = [8, 16, 8], strides = [1, 1, 1]} : vector<8x16x32xf32> to vector<8x16x8xf32>
    %90 = arith.truncf %89 : vector<8x16x8xf32> to vector<8x16x8xbf16>
    %91 = vector.extract_strided_slice %35 {offsets = [0, 0, 16], sizes = [8, 16, 8], strides = [1, 1, 1]} : vector<8x16x32xf32> to vector<8x16x8xf32>
    %92 = arith.truncf %91 : vector<8x16x8xf32> to vector<8x16x8xbf16>
    "tpu.trace_start"() <{level = 10 : i32, message = "wnd,wmd->wnm"}> : () -> ()
    %cst_31 = arith.constant dense<0.000000e+00> : vector<8x16x16xf32>
    %93 = tpu.matmul %90, %92, %cst_31 {dimension_numbers = #tpu.dot_dimension_numbers<[2], [2], [1], [1], [0, 0, 0, 1, 1, 1], [0], [0]>} : vector<8x16x8xbf16>, vector<8x16x8xbf16>, vector<8x16x16xf32> -> vector<8x16x16xf32>
    "tpu.trace_stop"() : () -> ()
    %c2 = arith.constant 2 : index
    %c0_32 = arith.constant 0 : index
    %c0_33 = arith.constant 0 : index
    %94 = vector.load %arg2[%c2, %c0_32, %c0_33] : memref<4x16x16xf32, #tpu.memory_space<vmem>>, vector<1x16x16xf32>
    %95 = vector.shape_cast %94 : vector<1x16x16xf32> to vector<16x16xf32>
    %96 = vector.shape_cast %95 : vector<16x16xf32> to vector<1x16x16xf32>
    %97 = vector.broadcast %96 : vector<1x16x16xf32> to vector<8x16x16xf32>
    %98 = arith.addf %93, %97 : vector<8x16x16xf32>
    %cst_34 = arith.constant dense<0xFF800000> : vector<8x16xf32>
    %99 = vector.multi_reduction <maximumf>, %98, %cst_34 [2] : vector<8x16x16xf32> to vector<8x16xf32>
    %100 = vector.shape_cast %99 : vector<8x16xf32> to vector<8x16x1xf32>
    %101 = vector.broadcast %100 : vector<8x16x1xf32> to vector<8x16x16xf32>
    %102 = arith.subf %98, %101 : vector<8x16x16xf32>
    %103 = math.exp %102 : vector<8x16x16xf32>
    %cst_35 = arith.constant dense<0.000000e+00> : vector<8x16xf32>
    %104 = vector.multi_reduction <add>, %103, %cst_35 [2] : vector<8x16x16xf32> to vector<8x16xf32>
    %105 = vector.shape_cast %104 : vector<8x16xf32> to vector<8x16x1xf32>
    %106 = tpu.reciprocal %105 {approx = true} : vector<8x16x1xf32> -> vector<8x16x1xf32>
    %107 = vector.broadcast %106 : vector<8x16x1xf32> to vector<8x16x16xf32>
    %108 = arith.mulf %103, %107 : vector<8x16x16xf32>
    %109 = arith.truncf %108 : vector<8x16x16xf32> to vector<8x16x16xbf16>
    %110 = vector.extract_strided_slice %36 {offsets = [0, 0, 16], sizes = [8, 16, 8], strides = [1, 1, 1]} : vector<8x16x32xf32> to vector<8x16x8xf32>
    %111 = arith.truncf %110 : vector<8x16x8xf32> to vector<8x16x8xbf16>
    "tpu.trace_start"() <{level = 10 : i32, message = "wnm,wmd->wnd"}> : () -> ()
    %cst_36 = arith.constant dense<0.000000e+00> : vector<8x16x8xf32>
    %112 = tpu.matmul %109, %111, %cst_36 {dimension_numbers = #tpu.dot_dimension_numbers<[2], [1], [1], [2], [0, 0, 0, 1, 1, 2], [0], [0]>} : vector<8x16x16xbf16>, vector<8x16x8xbf16>, vector<8x16x8xf32> -> vector<8x16x8xf32>
    "tpu.trace_stop"() : () -> ()
    %113 = vector.shape_cast %112 : vector<8x16x8xf32> to vector<128x8xf32>
    %c0_37 = arith.constant 0 : index
    %c16 = arith.constant 16 : index
    %114 = vector.load %arg10[%c0_37, %c16] : memref<128x32xf32, #tpu.memory_space<vmem>>, vector<128x8xf32>
    tpu.vector_store %arg10[%c0_37, %c16], %113 {strides = array<i32>} : memref<128x32xf32, #tpu.memory_space<vmem>>, vector<128x8xf32>,
    %115 = vector.extract_strided_slice %34 {offsets = [0, 0, 24], sizes = [8, 16, 8], strides = [1, 1, 1]} : vector<8x16x32xf32> to vector<8x16x8xf32>
    %116 = arith.truncf %115 : vector<8x16x8xf32> to vector<8x16x8xbf16>
    %117 = vector.extract_strided_slice %35 {offsets = [0, 0, 24], sizes = [8, 16, 8], strides = [1, 1, 1]} : vector<8x16x32xf32> to vector<8x16x8xf32>
    %118 = arith.truncf %117 : vector<8x16x8xf32> to vector<8x16x8xbf16>
    "tpu.trace_start"() <{level = 10 : i32, message = "wnd,wmd->wnm"}> : () -> ()
    %cst_38 = arith.constant dense<0.000000e+00> : vector<8x16x16xf32>
    %119 = tpu.matmul %116, %118, %cst_38 {dimension_numbers = #tpu.dot_dimension_numbers<[2], [2], [1], [1], [0, 0, 0, 1, 1, 1], [0], [0]>} : vector<8x16x8xbf16>, vector<8x16x8xbf16>, vector<8x16x16xf32> -> vector<8x16x16xf32>
    "tpu.trace_stop"() : () -> ()
    %c3 = arith.constant 3 : index
    %c0_39 = arith.constant 0 : index
    %c0_40 = arith.constant 0 : index
    %120 = vector.load %arg2[%c3, %c0_39, %c0_40] : memref<4x16x16xf32, #tpu.memory_space<vmem>>, vector<1x16x16xf32>
    %121 = vector.shape_cast %120 : vector<1x16x16xf32> to vector<16x16xf32>
    %122 = vector.shape_cast %121 : vector<16x16xf32> to vector<1x16x16xf32>
    %123 = vector.broadcast %122 : vector<1x16x16xf32> to vector<8x16x16xf32>
    %124 = arith.addf %119, %123 : vector<8x16x16xf32>
    %cst_41 = arith.constant dense<0xFF800000> : vector<8x16xf32>
    %125 = vector.multi_reduction <maximumf>, %124, %cst_41 [2] : vector<8x16x16xf32> to vector<8x16xf32>
    %126 = vector.shape_cast %125 : vector<8x16xf32> to vector<8x16x1xf32>
    %127 = vector.broadcast %126 : vector<8x16x1xf32> to vector<8x16x16xf32>
    %128 = arith.subf %124, %127 : vector<8x16x16xf32>
    %129 = math.exp %128 : vector<8x16x16xf32>
    %cst_42 = arith.constant dense<0.000000e+00> : vector<8x16xf32>
    %130 = vector.multi_reduction <add>, %129, %cst_42 [2] : vector<8x16x16xf32> to vector<8x16xf32>
    %131 = vector.shape_cast %130 : vector<8x16xf32> to vector<8x16x1xf32>
    %132 = tpu.reciprocal %131 {approx = true} : vector<8x16x1xf32> -> vector<8x16x1xf32>
    %133 = vector.broadcast %132 : vector<8x16x1xf32> to vector<8x16x16xf32>
    %134 = arith.mulf %129, %133 : vector<8x16x16xf32>
    %135 = arith.truncf %134 : vector<8x16x16xf32> to vector<8x16x16xbf16>
    %136 = vector.extract_strided_slice %36 {offsets = [0, 0, 24], sizes = [8, 16, 8], strides = [1, 1, 1]} : vector<8x16x32xf32> to vector<8x16x8xf32>
    %137 = arith.truncf %136 : vector<8x16x8xf32> to vector<8x16x8xbf16>
    "tpu.trace_start"() <{level = 10 : i32, message = "wnm,wmd->wnd"}> : () -> ()
    %cst_43 = arith.constant dense<0.000000e+00> : vector<8x16x8xf32>
    %138 = tpu.matmul %135, %137, %cst_43 {dimension_numbers = #tpu.dot_dimension_numbers<[2], [1], [1], [2], [0, 0, 0, 1, 1, 2], [0], [0]>} : vector<8x16x16xbf16>, vector<8x16x8xbf16>, vector<8x16x8xf32> -> vector<8x16x8xf32>
    "tpu.trace_stop"() : () -> ()
    %139 = vector.shape_cast %138 : vector<8x16x8xf32> to vector<128x8xf32>
    %c0_44 = arith.constant 0 : index
    %c24 = arith.constant 24 : index
    %140 = vector.load %arg10[%c0_44, %c24] : memref<128x32xf32, #tpu.memory_space<vmem>>, vector<128x8xf32>
    tpu.vector_store %arg10[%c0_44, %c24], %139 {strides = array<i32>} : memref<128x32xf32, #tpu.memory_space<vmem>>, vector<128x8xf32>,
    %c0_45 = arith.constant 0 : index
    %c0_46 = arith.constant 0 : index
    %141 = vector.load %arg10[%c0_45, %c0_46] : memref<128x32xf32, #tpu.memory_space<vmem>>, vector<128x32xf32>
    %142 = arith.truncf %141 : vector<128x32xf32> to vector<128x32xbf16>
    %c0_47 = arith.constant 0 : index
    %c0_48 = arith.constant 0 : index
    %143 = vector.load %arg7[%c0_47, %c0_48] : memref<32x32xbf16, #tpu.memory_space<vmem>>, vector<32x32xbf16>
    %cst_49 = arith.constant dense<0.000000e+00> : vector<128x32xf32>
    %144 = tpu.matmul %142, %143, %cst_49 {dimension_numbers = #tpu.dot_dimension_numbers<[1], [0], [0], [1], [0, 0, 1, 1], [], []>} : vector<128x32xbf16>, vector<32x32xbf16>, vector<128x32xf32> -> vector<128x32xf32>
    %c0_50 = arith.constant 0 : index
    %c0_51 = arith.constant 0 : index
    %145 = vector.load %arg8[%c0_50, %c0_51] : memref<1x32xf32, #tpu.memory_space<vmem>>, vector<1x32xf32>
    %146 = vector.broadcast %145 : vector<1x32xf32> to vector<128x32xf32>
    %147 = arith.addf %144, %146 : vector<128x32xf32>
    %148 = arith.addf %0, %147 : vector<128x32xf32>
    %c0_52 = arith.constant 0 : index
    %c0_53 = arith.constant 0 : index
    %149 = vector.load %arg9[%c0_52, %c0_53] : memref<128x32xf32, #tpu.memory_space<vmem>>, vector<128x32xf32>
    tpu.vector_store %arg9[%c0_52, %c0_53], %148 {strides = array<i32>} : memref<128x32xf32, #tpu.memory_space<vmem>>, vector<128x32xf32>,
    return
  }
  func.func @transform_0(%arg0: i32) -> (i32, i32) {
    %c0_i32 = arith.constant 0 : i32
    %c0_i32_0 = arith.constant 0 : i32
    return %arg0, %c0_i32 : i32, i32
  }
  func.func @transform_1(%arg0: i32) -> (i32, i32, i32) {
    %c0_i32 = arith.constant 0 : i32
    %c0_i32_0 = arith.constant 0 : i32
    %c0_i32_1 = arith.constant 0 : i32
    %c0_i32_2 = arith.constant 0 : i32
    return %c0_i32, %c0_i32_0, %c0_i32_1 : i32, i32, i32
  }
  func.func @transform_2(%arg0: i32) -> (i32, i32) {
    %c0_i32 = arith.constant 0 : i32
    %c0_i32_0 = arith.constant 0 : i32
    %c0_i32_1 = arith.constant 0 : i32
    return %c0_i32, %c0_i32_0 : i32, i32
  }
  func.func @transform_3(%arg0: i32) -> (i32, i32) {
    %c0_i32 = arith.constant 0 : i32
    %c0_i32_0 = arith.constant 0 : i32
    %c0_i32_1 = arith.constant 0 : i32
    return %c0_i32, %c0_i32_0 : i32, i32
  }
  func.func @transform_4(%arg0: i32) -> (i32, i32) {
    %c0_i32 = arith.constant 0 : i32
    %c0_i32_0 = arith.constant 0 : i32
    %c0_i32_1 = arith.constant 0 : i32
    return %c0_i32, %c0_i32_0 : i32, i32
  }
  func.func @transform_5(%arg0: i32) -> (i32, i32) {
    %c0_i32 = arith.constant 0 : i32
    %c0_i32_0 = arith.constant 0 : i32
    %c0_i32_1 = arith.constant 0 : i32
    return %c0_i32, %c0_i32_0 : i32, i32
  }
  func.func @transform_6(%arg0: i32) -> (i32, i32) {
    %c0_i32 = arith.constant 0 : i32
    %c0_i32_0 = arith.constant 0 : i32
    %c0_i32_1 = arith.constant 0 : i32
    return %c0_i32, %c0_i32_0 : i32, i32
  }
  func.func @transform_7(%arg0: i32) -> (i32, i32) {
    %c0_i32 = arith.constant 0 : i32
    %c0_i32_0 = arith.constant 0 : i32
    %c0_i32_1 = arith.constant 0 : i32
    return %c0_i32, %c0_i32_0 : i32, i32
  }
  func.func @transform_8(%arg0: i32) -> (i32, i32) {
    %c0_i32 = arith.constant 0 : i32
    %c0_i32_0 = arith.constant 0 : i32
    return %arg0, %c0_i32 : i32, i32
  }
}

</mosaic_0001>

<llo_original>
// kernel: tpu_custom_call.1
$region0: #{tpu_custom_call.1}
  #allocation0 [shape = 'u32[]', space=smem, size = 0x4, offset = 0x4, fixed_abs, tag = 'smem constant byte address 0x4 - core index']
  #allocation1 [shape = 'u32[144,128]{1,0:T(1,128)}', space=vmem, size = 0x12000, scoped, tag = 'internal scratch']
  #allocation2 [shape = 'f32[128,32]{1,0:T(8,128)}', space=vmem, size = 0x10000, scoped, tag = 'scratch operand']
  %s0 = inlined_call_operand.vmem [shape: f32[128,32], index: 0, kind: input, shape index: {}]
  %s1 = inlined_call_operand.vmem [shape: f32[4,16,16], index: 1, kind: input, shape index: {}]
  %s2 = inlined_call_operand.vmem [shape: f32[1,32], index: 2, kind: input, shape index: {}]
  %s3 = inlined_call_operand.vmem [shape: f32[1,32], index: 3, kind: input, shape index: {}]
  %s4 = inlined_call_operand.vmem [shape: bf16[32,96], index: 4, kind: input, shape index: {}]
  %s5 = inlined_call_operand.vmem [shape: f32[1,96], index: 5, kind: input, shape index: {}]
  %s6 = inlined_call_operand.vmem [shape: bf16[32,32], index: 6, kind: input, shape index: {}]
  %s7 = inlined_call_operand.vmem [shape: f32[1,32], index: 7, kind: input, shape index: {}]
  %s8 = inlined_call_operand.vmem [shape: f32[128,32], index: 8, kind: output, shape index: {}]
  %s9 = sld [smem:[#allocation0]]
  $region42: #{tpu_custom_call.1} parent=0
    _
  %s11 = ssub.s32 1, %s9
  %s12 = scalar_select 0, %s11, %s9
  // Predicated region
  $region2: #{tpu_custom_call.1} parent=0 // pred_check
    _
  $region3: #{tpu_custom_call.1} parent=0 // pred_check_branch
    %14 = sbr.rel (0) target = $region5
  $region4: #{tpu_custom_call.1} parent=0 // pred_region
    _
  $region5: #{tpu_custom_call.1} parent=0 // pred_fallthru
    _
  // Predicated region
  $region6: #{tpu_custom_call.1} parent=0 // pred_check
    _
  $region7: #{tpu_custom_call.1} parent=0 // pred_check_branch
    %16 = sbr.rel (0) target = $region9
  $region8: #{tpu_custom_call.1} parent=0 // pred_region
    _
  $region9: #{tpu_custom_call.1} parent=0 // pred_fallthru
    _
  // Predicated region
  $region10: #{tpu_custom_call.1} parent=0 // pred_check
    _
  $region11: #{tpu_custom_call.1} parent=0 // pred_check_branch
    %18 = sbr.rel (0) target = $region13
  $region12: #{tpu_custom_call.1} parent=0 // pred_region
    _
  $region13: #{tpu_custom_call.1} parent=0 // pred_fallthru
    _
  // Predicated region
  $region14: #{tpu_custom_call.1} parent=0 // pred_check
    _
  $region15: #{tpu_custom_call.1} parent=0 // pred_check_branch
    %20 = sbr.rel (0) target = $region17
  $region16: #{tpu_custom_call.1} parent=0 // pred_region
    _
  $region17: #{tpu_custom_call.1} parent=0 // pred_fallthru
    _
  // Predicated region
  $region18: #{tpu_custom_call.1} parent=0 // pred_check
    _
  $region19: #{tpu_custom_call.1} parent=0 // pred_check_branch
    %22 = sbr.rel (0) target = $region21
  $region20: #{tpu_custom_call.1} parent=0 // pred_region
    _
  $region21: #{tpu_custom_call.1} parent=0 // pred_fallthru
    _
  // Predicated region
  $region22: #{tpu_custom_call.1} parent=0 // pred_check
    _
  $region23: #{tpu_custom_call.1} parent=0 // pred_check_branch
    %24 = sbr.rel (0) target = $region25
  $region24: #{tpu_custom_call.1} parent=0 // pred_region
    _
  $region25: #{tpu_custom_call.1} parent=0 // pred_fallthru
    _
  // Predicated region
  $region26: #{tpu_custom_call.1} parent=0 // pred_check
    _
  $region27: #{tpu_custom_call.1} parent=0 // pred_check_branch
    %26 = sbr.rel (0) target = $region29
  $region28: #{tpu_custom_call.1} parent=0 // pred_region
    _
  $region29: #{tpu_custom_call.1} parent=0 // pred_fallthru
    _
  // Predicated region
  $region30: #{tpu_custom_call.1} parent=0 // pred_check
    _
  $region31: #{tpu_custom_call.1} parent=0 // pred_check_branch
    %28 = sbr.rel (0) target = $region33
  $region32: #{tpu_custom_call.1} parent=0 // pred_region
    _
  $region33: #{tpu_custom_call.1} parent=0 // pred_fallthru
    _
  %v30 = vld [vmem:[%s0] sm:$0xff]
  %v31 = vld [vmem:[%s0 + $0x8] sm:$0xff]
  %v32 = vld [vmem:[%s0 + $0x10] sm:$0xff]
  %v33 = vld [vmem:[%s0 + $0x18] sm:$0xff]
  %v34 = vld [vmem:[%s0 + $0x20] sm:$0xff]
  %v35 = vld [vmem:[%s0 + $0x28] sm:$0xff]
  %v36 = vld [vmem:[%s0 + $0x30] sm:$0xff]
  %v37 = vld [vmem:[%s0 + $0x38] sm:$0xff]
  %v38 = vld [vmem:[%s0 + $0x40] sm:$0xff]
  %v39 = vld [vmem:[%s0 + $0x48] sm:$0xff]
  %v40 = vld [vmem:[%s0 + $0x50] sm:$0xff]
  %v41 = vld [vmem:[%s0 + $0x58] sm:$0xff]
  %v42 = vld [vmem:[%s0 + $0x60] sm:$0xff]
  %v43 = vld [vmem:[%s0 + $0x68] sm:$0xff]
  %v44 = vld [vmem:[%s0 + $0x70] sm:$0xff]
  %v45 = vld [vmem:[%s0 + $0x78] sm:$0xff]
  %vm46 = vcmask 261120
  %v47 = vsel %vm46, %v30, 0.0
  %48 = vadd.xlane.f32.xlu0 %v47
  %v49 = vpop.xlane.xlu0 %48
  %v50 = vsel %vm46, %v31, 0.0
  %51 = vadd.xlane.f32.xlu0 %v50
  %v52 = vpop.xlane.xlu0 %51
  %v53 = vsel %vm46, %v32, 0.0
  %54 = vadd.xlane.f32.xlu0 %v53
  %v55 = vpop.xlane.xlu0 %54
  %v56 = vsel %vm46, %v33, 0.0
  %57 = vadd.xlane.f32.xlu0 %v56
  %v58 = vpop.xlane.xlu0 %57
  %v59 = vsel %vm46, %v34, 0.0
  %60 = vadd.xlane.f32.xlu0 %v59
  %v61 = vpop.xlane.xlu0 %60
  %v62 = vsel %vm46, %v35, 0.0
  %63 = vadd.xlane.f32.xlu0 %v62
  %v64 = vpop.xlane.xlu0 %63
  %v65 = vsel %vm46, %v36, 0.0
  %66 = vadd.xlane.f32.xlu0 %v65
  %v67 = vpop.xlane.xlu0 %66
  %v68 = vsel %vm46, %v37, 0.0
  %69 = vadd.xlane.f32.xlu0 %v68
  %v70 = vpop.xlane.xlu0 %69
  %v71 = vsel %vm46, %v38, 0.0
  %72 = vadd.xlane.f32.xlu0 %v71
  %v73 = vpop.xlane.xlu0 %72
  %v74 = vsel %vm46, %v39, 0.0
  %75 = vadd.xlane.f32.xlu0 %v74
  %v76 = vpop.xlane.xlu0 %75
  %v77 = vsel %vm46, %v40, 0.0
  %78 = vadd.xlane.f32.xlu0 %v77
  %v79 = vpop.xlane.xlu0 %78
  %v80 = vsel %vm46, %v41, 0.0
  %81 = vadd.xlane.f32.xlu0 %v80
  %v82 = vpop.xlane.xlu0 %81
  %v83 = vsel %vm46, %v42, 0.0
  %84 = vadd.xlane.f32.xlu0 %v83
  %v85 = vpop.xlane.xlu0 %84
  %v86 = vsel %vm46, %v43, 0.0
  %87 = vadd.xlane.f32.xlu0 %v86
  %v88 = vpop.xlane.xlu0 %87
  %v89 = vsel %vm46, %v44, 0.0
  %90 = vadd.xlane.f32.xlu0 %v89
  %v91 = vpop.xlane.xlu0 %90
  %v92 = vsel %vm46, %v45, 0.0
  %93 = vadd.xlane.f32.xlu0 %v92
  %v94 = vpop.xlane.xlu0 %93
  %v95 = vrcp.pop 32.0
  %v96 = vmul.f32 %v49, %v95
  %v97 = vmul.f32 %v52, %v95
  %v98 = vmul.f32 %v55, %v95
  %v99 = vmul.f32 %v58, %v95
  %v100 = vmul.f32 %v61, %v95
  %v101 = vmul.f32 %v64, %v95
  %v102 = vmul.f32 %v67, %v95
  %v103 = vmul.f32 %v70, %v95
  %v104 = vmul.f32 %v73, %v95
  %v105 = vmul.f32 %v76, %v95
  %v106 = vmul.f32 %v79, %v95
  %v107 = vmul.f32 %v82, %v95
  %v108 = vmul.f32 %v85, %v95
  %v109 = vmul.f32 %v88, %v95
  %v110 = vmul.f32 %v91, %v95
  %v111 = vmul.f32 %v94, %v95
  %v112 = vsub.f32 %v30, %v96
  %v113 = vsub.f32 %v31, %v97
  %v114 = vsub.f32 %v32, %v98
  %v115 = vsub.f32 %v33, %v99
  %v116 = vsub.f32 %v34, %v100
  %v117 = vsub.f32 %v35, %v101
  %v118 = vsub.f32 %v36, %v102
  %v119 = vsub.f32 %v37, %v103
  %v120 = vsub.f32 %v38, %v104
  %v121 = vsub.f32 %v39, %v105
  %v122 = vsub.f32 %v40, %v106
  %v123 = vsub.f32 %v41, %v107
  %v124 = vsub.f32 %v42, %v108
  %v125 = vsub.f32 %v43, %v109
  %v126 = vsub.f32 %v44, %v110
  %v127 = vsub.f32 %v45, %v111
  %v128 = vmul.f32 %v112, %v112
  %v129 = vmul.f32 %v113, %v113
  %v130 = vmul.f32 %v114, %v114
  %v131 = vmul.f32 %v115, %v115
  %v132 = vmul.f32 %v116, %v116
  %v133 = vmul.f32 %v117, %v117
  %v134 = vmul.f32 %v118, %v118
  %v135 = vmul.f32 %v119, %v119
  %v136 = vmul.f32 %v120, %v120
  %v137 = vmul.f32 %v121, %v121
  %v138 = vmul.f32 %v122, %v122
  %v139 = vmul.f32 %v123, %v123
  %v140 = vmul.f32 %v124, %v124
  %v141 = vmul.f32 %v125, %v125
  %v142 = vmul.f32 %v126, %v126
  %v143 = vmul.f32 %v127, %v127
  %v144 = vsel %vm46, %v128, 0.0
  %145 = vadd.xlane.f32.xlu0 %v144
  %v146 = vpop.xlane.xlu0 %145
  %v147 = vsel %vm46, %v129, 0.0
  %148 = vadd.xlane.f32.xlu0 %v147
  %v149 = vpop.xlane.xlu0 %148
  %v150 = vsel %vm46, %v130, 0.0
  %151 = vadd.xlane.f32.xlu0 %v150
  %v152 = vpop.xlane.xlu0 %151
  %v153 = vsel %vm46, %v131, 0.0
  %154 = vadd.xlane.f32.xlu0 %v153
  %v155 = vpop.xlane.xlu0 %154
  %v156 = vsel %vm46, %v132, 0.0
  %157 = vadd.xlane.f32.xlu0 %v156
  %v158 = vpop.xlane.xlu0 %157
  %v159 = vsel %vm46, %v133, 0.0
  %160 = vadd.xlane.f32.xlu0 %v159
  %v161 = vpop.xlane.xlu0 %160
  %v162 = vsel %vm46, %v134, 0.0
  %163 = vadd.xlane.f32.xlu0 %v162
  %v164 = vpop.xlane.xlu0 %163
  %v165 = vsel %vm46, %v135, 0.0
  %166 = vadd.xlane.f32.xlu0 %v165
  %v167 = vpop.xlane.xlu0 %166
  %v168 = vsel %vm46, %v136, 0.0
  %169 = vadd.xlane.f32.xlu0 %v168
  %v170 = vpop.xlane.xlu0 %169
  %v171 = vsel %vm46, %v137, 0.0
  %172 = vadd.xlane.f32.xlu0 %v171
  %v173 = vpop.xlane.xlu0 %172
  %v174 = vsel %vm46, %v138, 0.0
  %175 = vadd.xlane.f32.xlu0 %v174
  %v176 = vpop.xlane.xlu0 %175
  %v177 = vsel %vm46, %v139, 0.0
  %178 = vadd.xlane.f32.xlu0 %v177
  %v179 = vpop.xlane.xlu0 %178
  %v180 = vsel %vm46, %v140, 0.0
  %181 = vadd.xlane.f32.xlu0 %v180
  %v182 = vpop.xlane.xlu0 %181
  %v183 = vsel %vm46, %v141, 0.0
  %184 = vadd.xlane.f32.xlu0 %v183
  %v185 = vpop.xlane.xlu0 %184
  %v186 = vsel %vm46, %v142, 0.0
  %187 = vadd.xlane.f32.xlu0 %v186
  %v188 = vpop.xlane.xlu0 %187
  %v189 = vsel %vm46, %v143, 0.0
  %190 = vadd.xlane.f32.xlu0 %v189
  %v191 = vpop.xlane.xlu0 %190
  %v192 = vmul.f32 %v146, %v95
  %v193 = vmul.f32 %v149, %v95
  %v194 = vmul.f32 %v152, %v95
  %v195 = vmul.f32 %v155, %v95
  %v196 = vmul.f32 %v158, %v95
  %v197 = vmul.f32 %v161, %v95
  %v198 = vmul.f32 %v164, %v95
  %v199 = vmul.f32 %v167, %v95
  %v200 = vmul.f32 %v170, %v95
  %v201 = vmul.f32 %v173, %v95
  %v202 = vmul.f32 %v176, %v95
  %v203 = vmul.f32 %v179, %v95
  %v204 = vmul.f32 %v182, %v95
  %v205 = vmul.f32 %v185, %v95
  %v206 = vmul.f32 %v188, %v95
  %v207 = vmul.f32 %v191, %v95
  %v208 = vadd.f32 %v192, 1e-05
  %v209 = vadd.f32 %v193, 1e-05
  %v210 = vadd.f32 %v194, 1e-05
  %v211 = vadd.f32 %v195, 1e-05
  %v212 = vadd.f32 %v196, 1e-05
  %v213 = vadd.f32 %v197, 1e-05
  %v214 = vadd.f32 %v198, 1e-05
  %v215 = vadd.f32 %v199, 1e-05
  %v216 = vadd.f32 %v200, 1e-05
  %v217 = vadd.f32 %v201, 1e-05
  %v218 = vadd.f32 %v202, 1e-05
  %v219 = vadd.f32 %v203, 1e-05
  %v220 = vadd.f32 %v204, 1e-05
  %v221 = vadd.f32 %v205, 1e-05
  %v222 = vadd.f32 %v206, 1e-05
  %v223 = vadd.f32 %v207, 1e-05
  %v224 = vrsqrt.pop %v208
  %v225 = vrsqrt.pop %v209
  %v226 = vrsqrt.pop %v210
  %v227 = vrsqrt.pop %v211
  %v228 = vrsqrt.pop %v212
  %v229 = vrsqrt.pop %v213
  %v230 = vrsqrt.pop %v214
  %v231 = vrsqrt.pop %v215
  %v232 = vrsqrt.pop %v216
  %v233 = vrsqrt.pop %v217
  %v234 = vrsqrt.pop %v218
  %v235 = vrsqrt.pop %v219
  %v236 = vrsqrt.pop %v220
  %v237 = vrsqrt.pop %v221
  %v238 = vrsqrt.pop %v222
  %v239 = vrsqrt.pop %v223
  %v240 = vmul.f32 %v112, %v224
  %v241 = vmul.f32 %v113, %v225
  %v242 = vmul.f32 %v114, %v226
  %v243 = vmul.f32 %v115, %v227
  %v244 = vmul.f32 %v116, %v228
  %v245 = vmul.f32 %v117, %v229
  %v246 = vmul.f32 %v118, %v230
  %v247 = vmul.f32 %v119, %v231
  %v248 = vmul.f32 %v120, %v232
  %v249 = vmul.f32 %v121, %v233
  %v250 = vmul.f32 %v122, %v234
  %v251 = vmul.f32 %v123, %v235
  %v252 = vmul.f32 %v124, %v236
  %v253 = vmul.f32 %v125, %v237
  %v254 = vmul.f32 %v126, %v238
  %v255 = vmul.f32 %v127, %v239
  %v256 = vld [vmem:[%s2] sm:$0x1]
  %v258 = vlaneseq
  %v259 = vshrl.u32 %v258, 7
  %v260 = vsub.s32 0, %v259
  %v261 = vrot.slane %v256, %v260
  %v263 = vmul.f32 %v240, %v261
  %v264 = vmul.f32 %v241, %v261
  %v265 = vmul.f32 %v242, %v261
  %v266 = vmul.f32 %v243, %v261
  %v267 = vmul.f32 %v244, %v261
  %v268 = vmul.f32 %v245, %v261
  %v269 = vmul.f32 %v246, %v261
  %v270 = vmul.f32 %v247, %v261
  %v271 = vmul.f32 %v248, %v261
  %v272 = vmul.f32 %v249, %v261
  %v273 = vmul.f32 %v250, %v261
  %v274 = vmul.f32 %v251, %v261
  %v275 = vmul.f32 %v252, %v261
  %v276 = vmul.f32 %v253, %v261
  %v277 = vmul.f32 %v254, %v261
  %v278 = vmul.f32 %v255, %v261
  %v279 = vld [vmem:[%s3] sm:$0x1]
  %v281 = vlaneseq
  %v282 = vshrl.u32 %v281, 7
  %v283 = vsub.s32 0, %v282
  %v284 = vrot.slane %v279, %v283
  %v286 = vadd.f32 %v263, %v284
  %v287 = vadd.f32 %v264, %v284
  %v288 = vadd.f32 %v265, %v284
  %v289 = vadd.f32 %v266, %v284
  %v290 = vadd.f32 %v267, %v284
  %v291 = vadd.f32 %v268, %v284
  %v292 = vadd.f32 %v269, %v284
  %v293 = vadd.f32 %v270, %v284
  %v294 = vadd.f32 %v271, %v284
  %v295 = vadd.f32 %v272, %v284
  %v296 = vadd.f32 %v273, %v284
  %v297 = vadd.f32 %v274, %v284
  %v298 = vadd.f32 %v275, %v284
  %v299 = vadd.f32 %v276, %v284
  %v300 = vadd.f32 %v277, %v284
  %v301 = vadd.f32 %v278, %v284
  %v302 = vpack.c.bf16 %v287, %v286
  %v303 = vpack.c.bf16 %v289, %v288
  %v304 = vpack.c.bf16 %v291, %v290
  %v305 = vpack.c.bf16 %v293, %v292
  %v306 = vpack.c.bf16 %v295, %v294
  %v307 = vpack.c.bf16 %v297, %v296
  %v308 = vpack.c.bf16 %v299, %v298
  %v309 = vpack.c.bf16 %v301, %v300
  %v310 = vld [vmem:[%s4] sm:$0xf]
  %v311 = vld [vmem:[%s4 + $0x4] sm:$0xf]
  %v312 = vld [vmem:[%s4 + $0x8] sm:$0xf]
  %v313 = vld [vmem:[%s4 + $0xc] sm:$0xf]
  %v314 = vld [vmem:[%s5] sm:$0x1]
  %v316 = vlaneseq
  %v317 = vshrl.u32 %v316, 7
  %v318 = vsub.s32 0, %v317
  %v319 = vrot.slane %v314, %v318
  %v325 = vunpack.c.l.b16 %v310
  %v326 = vunpack.c.l.b16 %v311
  %v327 = vunpack.c.l.b16 %v312
  %v328 = vunpack.c.l.b16 %v313
  %v329 = vpack.c.b16 %v326, %v325
  %v330 = vpack.c.b16 %v328, %v327
  %v334 = vsel %vm46, %v302, 0
  %v337 = vsel %vm46, %v303, 0
  %v340 = vsel %vm46, %v304, 0
  %v343 = vsel %vm46, %v305, 0
  %v346 = vsel %vm46, %v306, 0
  %v349 = vsel %vm46, %v307, 0
  %v352 = vsel %vm46, %v308, 0
  %v355 = vsel %vm46, %v309, 0
  %357 = vmatprep.subr.bf16.mxu0 0
  %358 = vmatpush1.bf16.msra.mxu0 %v329
  %359 = vmatprep.subr.bf16.mxu0 0
  %360 = vmatpush1.bf16.msra.mxu0 %v330
  %361 = vmatprep.subr.bf16.mxu0 0
  %362 = vmatpush1.bf16.msra.mxu0 0
  %363 = vmatprep.subr.bf16.mxu0 0
  %364 = vmatpush1.bf16.msra.mxu0 0
  %365 = vmatprep.subr.bf16.mxu0 0
  %366 = vmatpush1.bf16.msra.mxu0 0
  %367 = vmatprep.subr.bf16.mxu0 0
  %368 = vmatpush1.bf16.msra.mxu0 0
  %369 = vmatprep.subr.bf16.mxu0 0
  %370 = vmatpush1.bf16.msra.mxu0 0
  %371 = vmatprep.subr.bf16.mxu0 0
  %372 = vmatpush1.bf16.msra.mxu0 0
  %373 = vmatprep.subr.bf16.mxu0 0
  %374 = vmatpush1.bf16.msra.mxu0 0
  %375 = vmatprep.subr.bf16.mxu0 0
  %376 = vmatpush1.bf16.msra.mxu0 0
  %377 = vmatprep.subr.bf16.mxu0 0
  %378 = vmatpush1.bf16.msra.mxu0 0
  %379 = vmatprep.subr.bf16.mxu0 0
  %380 = vmatpush1.bf16.msra.mxu0 0
  %381 = vmatprep.subr.bf16.mxu0 0
  %382 = vmatpush1.bf16.msra.mxu0 0
  %383 = vmatprep.subr.bf16.mxu0 0
  %384 = vmatpush1.bf16.msra.mxu0 0
  %385 = vmatprep.subr.bf16.mxu0 0
  %386 = vmatpush1.bf16.msra.mxu0 0
  %387 = vmatprep.subr.bf16.mxu0 0
  %388 = vmatpush1.bf16.msra.mxu0 0
  %389 = vmatprep.mubr.bf16.mxu0 0
  %390 = vmatmul.mubr.bf16.gmra.mrb[0].mxu0 %v334
  %v391 = vpop.f32.mrb[0].mxu0
  %v392 = vadd.f32 %v319, %v391
  %v393 = vpop.f32.mrb[0].mxu0
  %v394 = vpop.f32.mrb[0].mxu0
  %v395 = vadd.f32 %v319, %v394
  %v396 = vpop.f32.mrb[0].mxu0
  %397 = vmatprep.mubr.bf16.mxu0 0
  %398 = vmatmul.mubr.bf16.gmra.mrb[0].mxu0 %v337
  %v399 = vpop.f32.mrb[0].mxu0
  %v400 = vadd.f32 %v319, %v399
  %v401 = vpop.f32.mrb[0].mxu0
  %v402 = vpop.f32.mrb[0].mxu0
  %v403 = vadd.f32 %v319, %v402
  %v404 = vpop.f32.mrb[0].mxu0
  %405 = vmatprep.mubr.bf16.mxu0 0
  %406 = vmatmul.mubr.bf16.gmra.mrb[0].mxu0 %v340
  %v407 = vpop.f32.mrb[0].mxu0
  %v408 = vadd.f32 %v319, %v407
  %v409 = vpop.f32.mrb[0].mxu0
  %v410 = vpop.f32.mrb[0].mxu0
  %v411 = vadd.f32 %v319, %v410
  %v412 = vpop.f32.mrb[0].mxu0
  %413 = vmatprep.mubr.bf16.mxu0 0
  %414 = vmatmul.mubr.bf16.gmra.mrb[0].mxu0 %v343
  %v415 = vpop.f32.mrb[0].mxu0
  %v416 = vadd.f32 %v319, %v415
  %v417 = vpop.f32.mrb[0].mxu0
  %v418 = vpop.f32.mrb[0].mxu0
  %v419 = vadd.f32 %v319, %v418
  %v420 = vpop.f32.mrb[0].mxu0
  %421 = vmatprep.mubr.bf16.mxu0 0
  %422 = vmatmul.mubr.bf16.gmra.mrb[0].mxu0 %v346
  %v423 = vpop.f32.mrb[0].mxu0
  %v424 = vadd.f32 %v319, %v423
  %v425 = vpop.f32.mrb[0].mxu0
  %v426 = vpop.f32.mrb[0].mxu0
  %v427 = vadd.f32 %v319, %v426
  %v428 = vpop.f32.mrb[0].mxu0
  %429 = vmatprep.mubr.bf16.mxu0 0
  %430 = vmatmul.mubr.bf16.gmra.mrb[0].mxu0 %v349
  %v431 = vpop.f32.mrb[0].mxu0
  %v432 = vadd.f32 %v319, %v431
  %v433 = vpop.f32.mrb[0].mxu0
  %v434 = vpop.f32.mrb[0].mxu0
  %v435 = vadd.f32 %v319, %v434
  %v436 = vpop.f32.mrb[0].mxu0
  %437 = vmatprep.mubr.bf16.mxu0 0
  %438 = vmatmul.mubr.bf16.gmra.mrb[0].mxu0 %v352
  %v439 = vpop.f32.mrb[0].mxu0
  %v440 = vadd.f32 %v319, %v439
  %v441 = vpop.f32.mrb[0].mxu0
  %v442 = vpop.f32.mrb[0].mxu0
  %v443 = vadd.f32 %v319, %v442
  %v444 = vpop.f32.mrb[0].mxu0
  %445 = vmatprep.mubr.bf16.mxu0 0
  %446 = vmatmul.mubr.bf16.gmra.mrb[0].mxu0 %v355
  %v447 = vpop.f32.mrb[0].mxu0
  %v448 = vadd.f32 %v319, %v447
  %v449 = vpop.f32.mrb[0].mxu0
  %v450 = vpop.f32.mrb[0].mxu0
  %v451 = vadd.f32 %v319, %v450
  %v452 = vpop.f32.mrb[0].mxu0
  %453 = vdwg.mxu0
  %v454 = vmul.f32 %v392, 0.35355338
  %v455 = vmul.f32 %v395, 0.35355338
  %v456 = vmul.f32 %v400, 0.35355338
  %v457 = vmul.f32 %v403, 0.35355338
  %v458 = vmul.f32 %v408, 0.35355338
  %v459 = vmul.f32 %v411, 0.35355338
  %v460 = vmul.f32 %v416, 0.35355338
  %v461 = vmul.f32 %v419, 0.35355338
  %v462 = vmul.f32 %v424, 0.35355338
  %v463 = vmul.f32 %v427, 0.35355338
  %v464 = vmul.f32 %v432, 0.35355338
  %v465 = vmul.f32 %v435, 0.35355338
  %v466 = vmul.f32 %v440, 0.35355338
  %v467 = vmul.f32 %v443, 0.35355338
  %v468 = vmul.f32 %v448, 0.35355338
  %v469 = vmul.f32 %v451, 0.35355338
  %v470 = vpack.c.bf16 %v455, %v454
  %v471 = vpack.c.bf16 %v457, %v456
  %v472 = vpack.c.bf16 %v459, %v458
  %v473 = vpack.c.bf16 %v461, %v460
  %v474 = vpack.c.bf16 %v463, %v462
  %v475 = vpack.c.bf16 %v465, %v464
  %v476 = vpack.c.bf16 %v467, %v466
  %v477 = vpack.c.bf16 %v469, %v468
  %v478 = vpack.c.bf16 %v395, %v392
  %v479 = vpack.c.bf16 %v403, %v400
  %v480 = vpack.c.bf16 %v411, %v408
  %v481 = vpack.c.bf16 %v419, %v416
  %v482 = vpack.c.bf16 %v427, %v424
  %v483 = vpack.c.bf16 %v435, %v432
  %v484 = vpack.c.bf16 %v443, %v440
  %v485 = vpack.c.bf16 %v451, %v448
  %v486 = vld [vmem:[%s1] sm:$0xff]
  %v487 = vld [vmem:[%s1 + $0x8] sm:$0xff]
  %489 = vrot.lane.b32.xlu0 %v478, 96
  %v490 = vpop.permute.xlu0 %489
  %vm491 = vcmask 64512
  %v493 = vsel %vm491, %v470, 0
  %v496 = vsel %vm491, %v490, 0
  %498 = vmatprep.subr.bf16.mxu0 0
  %499 = vmatpush1.bf16.xpose.msra.mxu0 %v496
  %500 = vmatprep.subr.bf16.mxu0 0
  %501 = vmatpush1.bf16.xpose.msra.mxu0 0
  %502 = vmatprep.subr.bf16.mxu0 0
  %503 = vmatpush1.bf16.xpose.msra.mxu0 0
  %504 = vmatprep.subr.bf16.mxu0 0
  %505 = vmatpush1.bf16.xpose.msra.mxu0 0
  %506 = vmatprep.subr.bf16.mxu0 0
  %507 = vmatpush1.bf16.xpose.msra.mxu0 0
  %508 = vmatprep.subr.bf16.mxu0 0
  %509 = vmatpush1.bf16.xpose.msra.mxu0 0
  %510 = vmatprep.subr.bf16.mxu0 0
  %511 = vmatpush1.bf16.xpose.msra.mxu0 0
  %512 = vmatprep.subr.bf16.mxu0 0
  %513 = vmatpush1.bf16.xpose.msra.mxu0 0
  %514 = vmatprep.subr.bf16.mxu0 0
  %515 = vmatpush1.bf16.xpose.msra.mxu0 0
  %516 = vmatprep.subr.bf16.mxu0 0
  %517 = vmatpush1.bf16.xpose.msra.mxu0 0
  %518 = vmatprep.subr.bf16.mxu0 0
  %519 = vmatpush1.bf16.xpose.msra.mxu0 0
  %520 = vmatprep.subr.bf16.mxu0 0
  %521 = vmatpush1.bf16.xpose.msra.mxu0 0
  %522 = vmatprep.subr.bf16.mxu0 0
  %523 = vmatpush1.bf16.xpose.msra.mxu0 0
  %524 = vmatprep.subr.bf16.mxu0 0
  %525 = vmatpush1.bf16.xpose.msra.mxu0 0
  %526 = vmatprep.subr.bf16.mxu0 0
  %527 = vmatpush1.bf16.xpose.msra.mxu0 0
  %528 = vmatprep.subr.bf16.mxu0 0
  %529 = vmatpush1.bf16.xpose.msra.mxu0 0
  %530 = vmatprep.mubr.bf16.mxu0 0
  %531 = vmatmul.mubr.bf16.gmra.mrb[0].mxu0 %v493
  %v532 = vpop.f32.mrb[0].mxu0
  %v533 = vadd.f32 %v486, %v532
  %v534 = vpop.f32.mrb[0].mxu0
  %v535 = vpop.f32.mrb[0].mxu0
  %v536 = vadd.f32 %v487, %v535
  %v537 = vpop.f32.mrb[0].mxu0
  %538 = vdwg.mxu0
  %540 = vrot.lane.b32.xlu0 %v479, 96
  %v541 = vpop.permute.xlu0 %540
  %v543 = vsel %vm491, %v471, 0
  %v546 = vsel %vm491, %v541, 0
  %548 = vmatprep.subr.bf16.mxu0 0
  %549 = vmatpush1.bf16.xpose.msra.mxu0 %v546
  %550 = vmatprep.subr.bf16.mxu0 0
  %551 = vmatpush1.bf16.xpose.msra.mxu0 0
  %552 = vmatprep.subr.bf16.mxu0 0
  %553 = vmatpush1.bf16.xpose.msra.mxu0 0
  %554 = vmatprep.subr.bf16.mxu0 0
  %555 = vmatpush1.bf16.xpose.msra.mxu0 0
  %556 = vmatprep.subr.bf16.mxu0 0
  %557 = vmatpush1.bf16.xpose.msra.mxu0 0
  %558 = vmatprep.subr.bf16.mxu0 0
  %559 = vmatpush1.bf16.xpose.msra.mxu0 0
  %560 = vmatprep.subr.bf16.mxu0 0
  %561 = vmatpush1.bf16.xpose.msra.mxu0 0
  %562 = vmatprep.subr.bf16.mxu0 0
  %563 = vmatpush1.bf16.xpose.msra.mxu0 0
  %564 = vmatprep.subr.bf16.mxu0 0
  %565 = vmatpush1.bf16.xpose.msra.mxu0 0
  %566 = vmatprep.subr.bf16.mxu0 0
  %567 = vmatpush1.bf16.xpose.msra.mxu0 0
  %568 = vmatprep.subr.bf16.mxu0 0
  %569 = vmatpush1.bf16.xpose.msra.mxu0 0
  %570 = vmatprep.subr.bf16.mxu0 0
  %571 = vmatpush1.bf16.xpose.msra.mxu0 0
  %572 = vmatprep.subr.bf16.mxu0 0
  %573 = vmatpush1.bf16.xpose.msra.mxu0 0
  %574 = vmatprep.subr.bf16.mxu0 0
  %575 = vmatpush1.bf16.xpose.msra.mxu0 0
  %576 = vmatprep.subr.bf16.mxu0 0
  %577 = vmatpush1.bf16.xpose.msra.mxu0 0
  %578 = vmatprep.subr.bf16.mxu0 0
  %579 = vmatpush1.bf16.xpose.msra.mxu0 0
  %580 = vmatprep.mubr.bf16.mxu0 0
  %581 = vmatmul.mubr.bf16.gmra.mrb[0].mxu0 %v543
  %v582 = vpop.f32.mrb[0].mxu0
  %v583 = vadd.f32 %v486, %v582
  %v584 = vpop.f32.mrb[0].mxu0
  %v585 = vpop.f32.mrb[0].mxu0
  %v586 = vadd.f32 %v487, %v585
  %v587 = vpop.f32.mrb[0].mxu0
  %588 = vdwg.mxu0
  %590 = vrot.lane.b32.xlu0 %v480, 96
  %v591 = vpop.permute.xlu0 %590
  %v593 = vsel %vm491, %v472, 0
  %v596 = vsel %vm491, %v591, 0
  %598 = vmatprep.subr.bf16.mxu0 0
  %599 = vmatpush1.bf16.xpose.msra.mxu0 %v596
  %600 = vmatprep.subr.bf16.mxu0 0
  %601 = vmatpush1.bf16.xpose.msra.mxu0 0
  %602 = vmatprep.subr.bf16.mxu0 0
  %603 = vmatpush1.bf16.xpose.msra.mxu0 0
  %604 = vmatprep.subr.bf16.mxu0 0
  %605 = vmatpush1.bf16.xpose.msra.mxu0 0
  %606 = vmatprep.subr.bf16.mxu0 0
  %607 = vmatpush1.bf16.xpose.msra.mxu0 0
  %608 = vmatprep.subr.bf16.mxu0 0
  %609 = vmatpush1.bf16.xpose.msra.mxu0 0
  %610 = vmatprep.subr.bf16.mxu0 0
  %611 = vmatpush1.bf16.xpose.msra.mxu0 0
  %612 = vmatprep.subr.bf16.mxu0 0
  %613 = vmatpush1.bf16.xpose.msra.mxu0 0
  %614 = vmatprep.subr.bf16.mxu0 0
  %615 = vmatpush1.bf16.xpose.msra.mxu0 0
  %616 = vmatprep.subr.bf16.mxu0 0
  %617 = vmatpush1.bf16.xpose.msra.mxu0 0
  %618 = vmatprep.subr.bf16.mxu0 0
  %619 = vmatpush1.bf16.xpose.msra.mxu0 0
  %620 = vmatprep.subr.bf16.mxu0 0
  %621 = vmatpush1.bf16.xpose.msra.mxu0 0
  %622 = vmatprep.subr.bf16.mxu0 0
  %623 = vmatpush1.bf16.xpose.msra.mxu0 0
  %624 = vmatprep.subr.bf16.mxu0 0
  %625 = vmatpush1.bf16.xpose.msra.mxu0 0
  %626 = vmatprep.subr.bf16.mxu0 0
  %627 = vmatpush1.bf16.xpose.msra.mxu0 0
  %628 = vmatprep.subr.bf16.mxu0 0
  %629 = vmatpush1.bf16.xpose.msra.mxu0 0
  %630 = vmatprep.mubr.bf16.mxu0 0
  %631 = vmatmul.mubr.bf16.gmra.mrb[0].mxu0 %v593
  %v632 = vpop.f32.mrb[0].mxu0
  %v633 = vadd.f32 %v486, %v632
  %v634 = vpop.f32.mrb[0].mxu0
  %v635 = vpop.f32.mrb[0].mxu0
  %v636 = vadd.f32 %v487, %v635
  %v637 = vpop.f32.mrb[0].mxu0
  %638 = vdwg.mxu0
  %640 = vrot.lane.b32.xlu0 %v481, 96
  %v641 = vpop.permute.xlu0 %640
  %v643 = vsel %vm491, %v473, 0
  %v646 = vsel %vm491, %v641, 0
  %648 = vmatprep.subr.bf16.mxu0 0
  %649 = vmatpush1.bf16.xpose.msra.mxu0 %v646
  %650 = vmatprep.subr.bf16.mxu0 0
  %651 = vmatpush1.bf16.xpose.msra.mxu0 0
  %652 = vmatprep.subr.bf16.mxu0 0
  %653 = vmatpush1.bf16.xpose.msra.mxu0 0
  %654 = vmatprep.subr.bf16.mxu0 0
  %655 = vmatpush1.bf16.xpose.msra.mxu0 0
  %656 = vmatprep.subr.bf16.mxu0 0
  %657 = vmatpush1.bf16.xpose.msra.mxu0 0
  %658 = vmatprep.subr.bf16.mxu0 0
  %659 = vmatpush1.bf16.xpose.msra.mxu0 0
  %660 = vmatprep.subr.bf16.mxu0 0
  %661 = vmatpush1.bf16.xpose.msra.mxu0 0
  %662 = vmatprep.subr.bf16.mxu0 0
  %663 = vmatpush1.bf16.xpose.msra.mxu0 0
  %664 = vmatprep.subr.bf16.mxu0 0
  %665 = vmatpush1.bf16.xpose.msra.mxu0 0
  %666 = vmatprep.subr.bf16.mxu0 0
  %667 = vmatpush1.bf16.xpose.msra.mxu0 0
  %668 = vmatprep.subr.bf16.mxu0 0
  %669 = vmatpush1.bf16.xpose.msra.mxu0 0
  %670 = vmatprep.subr.bf16.mxu0 0
  %671 = vmatpush1.bf16.xpose.msra.mxu0 0
  %672 = vmatprep.subr.bf16.mxu0 0
  %673 = vmatpush1.bf16.xpose.msra.mxu0 0
  %674 = vmatprep.subr.bf16.mxu0 0
  %675 = vmatpush1.bf16.xpose.msra.mxu0 0
  %676 = vmatprep.subr.bf16.mxu0 0
  %677 = vmatpush1.bf16.xpose.msra.mxu0 0
  %678 = vmatprep.subr.bf16.mxu0 0
  %679 = vmatpush1.bf16.xpose.msra.mxu0 0
  %680 = vmatprep.mubr.bf16.mxu0 0
  %681 = vmatmul.mubr.bf16.gmra.mrb[0].mxu0 %v643
  %v682 = vpop.f32.mrb[0].mxu0
  %v683 = vadd.f32 %v486, %v682
  %v684 = vpop.f32.mrb[0].mxu0
  %v685 = vpop.f32.mrb[0].mxu0
  %v686 = vadd.f32 %v487, %v685
  %v687 = vpop.f32.mrb[0].mxu0
  %688 = vdwg.mxu0
  %690 = vrot.lane.b32.xlu0 %v482, 96
  %v691 = vpop.permute.xlu0 %690
  %v693 = vsel %vm491, %v474, 0
  %v696 = vsel %vm491, %v691, 0
  %698 = vmatprep.subr.bf16.mxu0 0
  %699 = vmatpush1.bf16.xpose.msra.mxu0 %v696
  %700 = vmatprep.subr.bf16.mxu0 0
  %701 = vmatpush1.bf16.xpose.msra.mxu0 0
  %702 = vmatprep.subr.bf16.mxu0 0
  %703 = vmatpush1.bf16.xpose.msra.mxu0 0
  %704 = vmatprep.subr.bf16.mxu0 0
  %705 = vmatpush1.bf16.xpose.msra.mxu0 0
  %706 = vmatprep.subr.bf16.mxu0 0
  %707 = vmatpush1.bf16.xpose.msra.mxu0 0
  %708 = vmatprep.subr.bf16.mxu0 0
  %709 = vmatpush1.bf16.xpose.msra.mxu0 0
  %710 = vmatprep.subr.bf16.mxu0 0
  %711 = vmatpush1.bf16.xpose.msra.mxu0 0
  %712 = vmatprep.subr.bf16.mxu0 0
  %713 = vmatpush1.bf16.xpose.msra.mxu0 0
  %714 = vmatprep.subr.bf16.mxu0 0
  %715 = vmatpush1.bf16.xpose.msra.mxu0 0
  %716 = vmatprep.subr.bf16.mxu0 0
  %717 = vmatpush1.bf16.xpose.msra.mxu0 0
  %718 = vmatprep.subr.bf16.mxu0 0
  %719 = vmatpush1.bf16.xpose.msra.mxu0 0
  %720 = vmatprep.subr.bf16.mxu0 0
  %721 = vmatpush1.bf16.xpose.msra.mxu0 0
  %722 = vmatprep.subr.bf16.mxu0 0
  %723 = vmatpush1.bf16.xpose.msra.mxu0 0
  %724 = vmatprep.subr.bf16.mxu0 0
  %725 = vmatpush1.bf16.xpose.msra.mxu0 0
  %726 = vmatprep.subr.bf16.mxu0 0
  %727 = vmatpush1.bf16.xpose.msra.mxu0 0
  %728 = vmatprep.subr.bf16.mxu0 0
  %729 = vmatpush1.bf16.xpose.msra.mxu0 0
  %730 = vmatprep.mubr.bf16.mxu0 0
  %731 = vmatmul.mubr.bf16.gmra.mrb[0].mxu0 %v693
  %v732 = vpop.f32.mrb[0].mxu0
  %v733 = vadd.f32 %v486, %v732
  %v734 = vpop.f32.mrb[0].mxu0
  %v735 = vpop.f32.mrb[0].mxu0
  %v736 = vadd.f32 %v487, %v735
  %v737 = vpop.f32.mrb[0].mxu0
  %738 = vdwg.mxu0
  %740 = vrot.lane.b32.xlu0 %v483, 96
  %v741 = vpop.permute.xlu0 %740
  %v743 = vsel %vm491, %v475, 0
  %v746 = vsel %vm491, %v741, 0
  %748 = vmatprep.subr.bf16.mxu0 0
  %749 = vmatpush1.bf16.xpose.msra.mxu0 %v746
  %750 = vmatprep.subr.bf16.mxu0 0
  %751 = vmatpush1.bf16.xpose.msra.mxu0 0
  %752 = vmatprep.subr.bf16.mxu0 0
  %753 = vmatpush1.bf16.xpose.msra.mxu0 0
  %754 = vmatprep.subr.bf16.mxu0 0
  %755 = vmatpush1.bf16.xpose.msra.mxu0 0
  %756 = vmatprep.subr.bf16.mxu0 0
  %757 = vmatpush1.bf16.xpose.msra.mxu0 0
  %758 = vmatprep.subr.bf16.mxu0 0
  %759 = vmatpush1.bf16.xpose.msra.mxu0 0
  %760 = vmatprep.subr.bf16.mxu0 0
  %761 = vmatpush1.bf16.xpose.msra.mxu0 0
  %762 = vmatprep.subr.bf16.mxu0 0
  %763 = vmatpush1.bf16.xpose.msra.mxu0 0
  %764 = vmatprep.subr.bf16.mxu0 0
  %765 = vmatpush1.bf16.xpose.msra.mxu0 0
  %766 = vmatprep.subr.bf16.mxu0 0
  %767 = vmatpush1.bf16.xpose.msra.mxu0 0
  %768 = vmatprep.subr.bf16.mxu0 0
  %769 = vmatpush1.bf16.xpose.msra.mxu0 0
  %770 = vmatprep.subr.bf16.mxu0 0
  %771 = vmatpush1.bf16.xpose.msra.mxu0 0
  %772 = vmatprep.subr.bf16.mxu0 0
  %773 = vmatpush1.bf16.xpose.msra.mxu0 0
  %774 = vmatprep.subr.bf16.mxu0 0
  %775 = vmatpush1.bf16.xpose.msra.mxu0 0
  %776 = vmatprep.subr.bf16.mxu0 0
  %777 = vmatpush1.bf16.xpose.msra.mxu0 0
  %778 = vmatprep.subr.bf16.mxu0 0
  %779 = vmatpush1.bf16.xpose.msra.mxu0 0
  %780 = vmatprep.mubr.bf16.mxu0 0
  %781 = vmatmul.mubr.bf16.gmra.mrb[0].mxu0 %v743
  %v782 = vpop.f32.mrb[0].mxu0
  %v783 = vadd.f32 %v486, %v782
  %v784 = vpop.f32.mrb[0].mxu0
  %v785 = vpop.f32.mrb[0].mxu0
  %v786 = vadd.f32 %v487, %v785
  %v787 = vpop.f32.mrb[0].mxu0
  %788 = vdwg.mxu0
  %790 = vrot.lane.b32.xlu0 %v484, 96
  %v791 = vpop.permute.xlu0 %790
  %v793 = vsel %vm491, %v476, 0
  %v796 = vsel %vm491, %v791, 0
  %798 = vmatprep.subr.bf16.mxu0 0
  %799 = vmatpush1.bf16.xpose.msra.mxu0 %v796
  %800 = vmatprep.subr.bf16.mxu0 0
  %801 = vmatpush1.bf16.xpose.msra.mxu0 0
  %802 = vmatprep.subr.bf16.mxu0 0
  %803 = vmatpush1.bf16.xpose.msra.mxu0 0
  %804 = vmatprep.subr.bf16.mxu0 0
  %805 = vmatpush1.bf16.xpose.msra.mxu0 0
  %806 = vmatprep.subr.bf16.mxu0 0
  %807 = vmatpush1.bf16.xpose.msra.mxu0 0
  %808 = vmatprep.subr.bf16.mxu0 0
  %809 = vmatpush1.bf16.xpose.msra.mxu0 0
  %810 = vmatprep.subr.bf16.mxu0 0
  %811 = vmatpush1.bf16.xpose.msra.mxu0 0
  %812 = vmatprep.subr.bf16.mxu0 0
  %813 = vmatpush1.bf16.xpose.msra.mxu0 0
  %814 = vmatprep.subr.bf16.mxu0 0
  %815 = vmatpush1.bf16.xpose.msra.mxu0 0
  %816 = vmatprep.subr.bf16.mxu0 0
  %817 = vmatpush1.bf16.xpose.msra.mxu0 0
  %818 = vmatprep.subr.bf16.mxu0 0
  %819 = vmatpush1.bf16.xpose.msra.mxu0 0
  %820 = vmatprep.subr.bf16.mxu0 0
  %821 = vmatpush1.bf16.xpose.msra.mxu0 0
  %822 = vmatprep.subr.bf16.mxu0 0
  %823 = vmatpush1.bf16.xpose.msra.mxu0 0
  %824 = vmatprep.subr.bf16.mxu0 0
  %825 = vmatpush1.bf16.xpose.msra.mxu0 0
  %826 = vmatprep.subr.bf16.mxu0 0
  %827 = vmatpush1.bf16.xpose.msra.mxu0 0
  %828 = vmatprep.subr.bf16.mxu0 0
  %829 = vmatpush1.bf16.xpose.msra.mxu0 0
  %830 = vmatprep.mubr.bf16.mxu0 0
  %831 = vmatmul.mubr.bf16.gmra.mrb[0].mxu0 %v793
  %v832 = vpop.f32.mrb[0].mxu0
  %v833 = vadd.f32 %v486, %v832
  %v834 = vpop.f32.mrb[0].mxu0
  %v835 = vpop.f32.mrb[0].mxu0
  %v836 = vadd.f32 %v487, %v835
  %v837 = vpop.f32.mrb[0].mxu0
  %838 = vdwg.mxu0
  %840 = vrot.lane.b32.xlu0 %v485, 96
  %v841 = vpop.permute.xlu0 %840
  %v843 = vsel %vm491, %v477, 0
  %v846 = vsel %vm491, %v841, 0
  %848 = vmatprep.subr.bf16.mxu0 0
  %849 = vmatpush1.bf16.xpose.msra.mxu0 %v846
  %850 = vmatprep.subr.bf16.mxu0 0
  %851 = vmatpush1.bf16.xpose.msra.mxu0 0
  %852 = vmatprep.subr.bf16.mxu0 0
  %853 = vmatpush1.bf16.xpose.msra.mxu0 0
  %854 = vmatprep.subr.bf16.mxu0 0
  %855 = vmatpush1.bf16.xpose.msra.mxu0 0
  %856 = vmatprep.subr.bf16.mxu0 0
  %857 = vmatpush1.bf16.xpose.msra.mxu0 0
  %858 = vmatprep.subr.bf16.mxu0 0
  %859 = vmatpush1.bf16.xpose.msra.mxu0 0
  %860 = vmatprep.subr.bf16.mxu0 0
  %861 = vmatpush1.bf16.xpose.msra.mxu0 0
  %862 = vmatprep.subr.bf16.mxu0 0
  %863 = vmatpush1.bf16.xpose.msra.mxu0 0
  %864 = vmatprep.subr.bf16.mxu0 0
  %865 = vmatpush1.bf16.xpose.msra.mxu0 0
  %866 = vmatprep.subr.bf16.mxu0 0
  %867 = vmatpush1.bf16.xpose.msra.mxu0 0
  %868 = vmatprep.subr.bf16.mxu0 0
  %869 = vmatpush1.bf16.xpose.msra.mxu0 0
  %870 = vmatprep.subr.bf16.mxu0 0
  %871 = vmatpush1.bf16.xpose.msra.mxu0 0
  %872 = vmatprep.subr.bf16.mxu0 0
  %873 = vmatpush1.bf16.xpose.msra.mxu0 0
  %874 = vmatprep.subr.bf16.mxu0 0
  %875 = vmatpush1.bf16.xpose.msra.mxu0 0
  %876 = vmatprep.subr.bf16.mxu0 0
  %877 = vmatpush1.bf16.xpose.msra.mxu0 0
  %878 = vmatprep.subr.bf16.mxu0 0
  %879 = vmatpush1.bf16.xpose.msra.mxu0 0
  %880 = vmatprep.mubr.bf16.mxu0 0
  %881 = vmatmul.mubr.bf16.gmra.mrb[0].mxu0 %v843
  %v882 = vpop.f32.mrb[0].mxu0
  %v883 = vadd.f32 %v486, %v882
  %v884 = vpop.f32.mrb[0].mxu0
  %v885 = vpop.f32.mrb[0].mxu0
  %v886 = vadd.f32 %v487, %v885
  %v887 = vpop.f32.mrb[0].mxu0
  %888 = vdwg.mxu0
  %vm889 = vcmask 130048
  %v890 = vsel %vm889, %v533, -inf
  %891 = vmax.xlane.f32.xlu0 %v890
  %v892 = vpop.xlane.xlu0 %891
  %v893 = vsel %vm889, %v536, -inf
  %894 = vmax.xlane.f32.xlu0 %v893
  %v895 = vpop.xlane.xlu0 %894
  %v896 = vsel %vm889, %v583, -inf
  %897 = vmax.xlane.f32.xlu0 %v896
  %v898 = vpop.xlane.xlu0 %897
  %v899 = vsel %vm889, %v586, -inf
  %900 = vmax.xlane.f32.xlu0 %v899
  %v901 = vpop.xlane.xlu0 %900
  %v902 = vsel %vm889, %v633, -inf
  %903 = vmax.xlane.f32.xlu0 %v902
  %v904 = vpop.xlane.xlu0 %903
  %v905 = vsel %vm889, %v636, -inf
  %906 = vmax.xlane.f32.xlu0 %v905
  %v907 = vpop.xlane.xlu0 %906
  %v908 = vsel %vm889, %v683, -inf
  %909 = vmax.xlane.f32.xlu0 %v908
  %v910 = vpop.xlane.xlu0 %909
  %v911 = vsel %vm889, %v686, -inf
  %912 = vmax.xlane.f32.xlu0 %v911
  %v913 = vpop.xlane.xlu0 %912
  %v914 = vsel %vm889, %v733, -inf
  %915 = vmax.xlane.f32.xlu0 %v914
  %v916 = vpop.xlane.xlu0 %915
  %v917 = vsel %vm889, %v736, -inf
  %918 = vmax.xlane.f32.xlu0 %v917
  %v919 = vpop.xlane.xlu0 %918
  %v920 = vsel %vm889, %v783, -inf
  %921 = vmax.xlane.f32.xlu0 %v920
  %v922 = vpop.xlane.xlu0 %921
  %v923 = vsel %vm889, %v786, -inf
  %924 = vmax.xlane.f32.xlu0 %v923
  %v925 = vpop.xlane.xlu0 %924
  %v926 = vsel %vm889, %v833, -inf
  %927 = vmax.xlane.f32.xlu0 %v926
  %v928 = vpop.xlane.xlu0 %927
  %v929 = vsel %vm889, %v836, -inf
  %930 = vmax.xlane.f32.xlu0 %v929
  %v931 = vpop.xlane.xlu0 %930
  %v932 = vsel %vm889, %v883, -inf
  %933 = vmax.xlane.f32.xlu0 %v932
  %v934 = vpop.xlane.xlu0 %933
  %v935 = vsel %vm889, %v886, -inf
  %936 = vmax.xlane.f32.xlu0 %v935
  %v937 = vpop.xlane.xlu0 %936
  %v938 = vsub.f32 %v533, %v892
  %v939 = vsub.f32 %v536, %v895
  %v940 = vsub.f32 %v583, %v898
  %v941 = vsub.f32 %v586, %v901
  %v942 = vsub.f32 %v633, %v904
  %v943 = vsub.f32 %v636, %v907
  %v944 = vsub.f32 %v683, %v910
  %v945 = vsub.f32 %v686, %v913
  %v946 = vsub.f32 %v733, %v916
  %v947 = vsub.f32 %v736, %v919
  %v948 = vsub.f32 %v783, %v922
  %v949 = vsub.f32 %v786, %v925
  %v950 = vsub.f32 %v833, %v928
  %v951 = vsub.f32 %v836, %v931
  %v952 = vsub.f32 %v883, %v934
  %v953 = vsub.f32 %v886, %v937
  %v954 = vmul.f32 %v938, 1.442695
  %v955 = vpow.pop %v954
  %v956 = vmul.f32 %v939, 1.442695
  %v957 = vpow.pop %v956
  %v958 = vmul.f32 %v940, 1.442695
  %v959 = vpow.pop %v958
  %v960 = vmul.f32 %v941, 1.442695
  %v961 = vpow.pop %v960
  %v962 = vmul.f32 %v942, 1.442695
  %v963 = vpow.pop %v962
  %v964 = vmul.f32 %v943, 1.442695
  %v965 = vpow.pop %v964
  %v966 = vmul.f32 %v944, 1.442695
  %v967 = vpow.pop %v966
  %v968 = vmul.f32 %v945, 1.442695
  %v969 = vpow.pop %v968
  %v970 = vmul.f32 %v946, 1.442695
  %v971 = vpow.pop %v970
  %v972 = vmul.f32 %v947, 1.442695
  %v973 = vpow.pop %v972
  %v974 = vmul.f32 %v948, 1.442695
  %v975 = vpow.pop %v974
  %v976 = vmul.f32 %v949, 1.442695
  %v977 = vpow.pop %v976
  %v978 = vmul.f32 %v950, 1.442695
  %v979 = vpow.pop %v978
  %v980 = vmul.f32 %v951, 1.442695
  %v981 = vpow.pop %v980
  %v982 = vmul.f32 %v952, 1.442695
  %v983 = vpow.pop %v982
  %v984 = vmul.f32 %v953, 1.442695
  %v985 = vpow.pop %v984
  %v986 = vsel %vm889, %v955, 0.0
  %987 = vadd.xlane.f32.xlu0 %v986
  %v988 = vpop.xlane.xlu0 %987
  %v989 = vsel %vm889, %v957, 0.0
  %990 = vadd.xlane.f32.xlu0 %v989
  %v991 = vpop.xlane.xlu0 %990
  %v992 = vsel %vm889, %v959, 0.0
  %993 = vadd.xlane.f32.xlu0 %v992
  %v994 = vpop.xlane.xlu0 %993
  %v995 = vsel %vm889, %v961, 0.0
  %996 = vadd.xlane.f32.xlu0 %v995
  %v997 = vpop.xlane.xlu0 %996
  %v998 = vsel %vm889, %v963, 0.0
  %999 = vadd.xlane.f32.xlu0 %v998
  %v1000 = vpop.xlane.xlu0 %999
  %v1001 = vsel %vm889, %v965, 0.0
  %1002 = vadd.xlane.f32.xlu0 %v1001
  %v1003 = vpop.xlane.xlu0 %1002
  %v1004 = vsel %vm889, %v967, 0.0
  %1005 = vadd.xlane.f32.xlu0 %v1004
  %v1006 = vpop.xlane.xlu0 %1005
  %v1007 = vsel %vm889, %v969, 0.0
  %1008 = vadd.xlane.f32.xlu0 %v1007
  %v1009 = vpop.xlane.xlu0 %1008
  %v1010 = vsel %vm889, %v971, 0.0
  %1011 = vadd.xlane.f32.xlu0 %v1010
  %v1012 = vpop.xlane.xlu0 %1011
  %v1013 = vsel %vm889, %v973, 0.0
  %1014 = vadd.xlane.f32.xlu0 %v1013
  %v1015 = vpop.xlane.xlu0 %1014
  %v1016 = vsel %vm889, %v975, 0.0
  %1017 = vadd.xlane.f32.xlu0 %v1016
  %v1018 = vpop.xlane.xlu0 %1017
  %v1019 = vsel %vm889, %v977, 0.0
  %1020 = vadd.xlane.f32.xlu0 %v1019
  %v1021 = vpop.xlane.xlu0 %1020
  %v1022 = vsel %vm889, %v979, 0.0
  %1023 = vadd.xlane.f32.xlu0 %v1022
  %v1024 = vpop.xlane.xlu0 %1023
  %v1025 = vsel %vm889, %v981, 0.0
  %1026 = vadd.xlane.f32.xlu0 %v1025
  %v1027 = vpop.xlane.xlu0 %1026
  %v1028 = vsel %vm889, %v983, 0.0
  %1029 = vadd.xlane.f32.xlu0 %v1028
  %v1030 = vpop.xlane.xlu0 %1029
  %v1031 = vsel %vm889, %v985, 0.0
  %1032 = vadd.xlane.f32.xlu0 %v1031
  %v1033 = vpop.xlane.xlu0 %1032
  %v1034 = vrcp.pop %v988
  %v1035 = vrcp.pop %v991
  %v1036 = vrcp.pop %v994
  %v1037 = vrcp.pop %v997
  %v1038 = vrcp.pop %v1000
  %v1039 = vrcp.pop %v1003
  %v1040 = vrcp.pop %v1006
  %v1041 = vrcp.pop %v1009
  %v1042 = vrcp.pop %v1012
  %v1043 = vrcp.pop %v1015
  %v1044 = vrcp.pop %v1018
  %v1045 = vrcp.pop %v1021
  %v1046 = vrcp.pop %v1024
  %v1047 = vrcp.pop %v1027
  %v1048 = vrcp.pop %v1030
  %v1049 = vrcp.pop %v1033
  %v1050 = vmul.f32 %v955, %v1034
  %v1051 = vmul.f32 %v957, %v1035
  %v1052 = vmul.f32 %v959, %v1036
  %v1053 = vmul.f32 %v961, %v1037
  %v1054 = vmul.f32 %v963, %v1038
  %v1055 = vmul.f32 %v965, %v1039
  %v1056 = vmul.f32 %v967, %v1040
  %v1057 = vmul.f32 %v969, %v1041
  %v1058 = vmul.f32 %v971, %v1042
  %v1059 = vmul.f32 %v973, %v1043
  %v1060 = vmul.f32 %v975, %v1044
  %v1061 = vmul.f32 %v977, %v1045
  %v1062 = vmul.f32 %v979, %v1046
  %v1063 = vmul.f32 %v981, %v1047
  %v1064 = vmul.f32 %v983, %v1048
  %v1065 = vmul.f32 %v985, %v1049
  %v1066 = vpack.c.bf16 %v1051, %v1050
  %v1067 = vpack.c.bf16 %v1053, %v1052
  %v1068 = vpack.c.bf16 %v1055, %v1054
  %v1069 = vpack.c.bf16 %v1057, %v1056
  %v1070 = vpack.c.bf16 %v1059, %v1058
  %v1071 = vpack.c.bf16 %v1061, %v1060
  %v1072 = vpack.c.bf16 %v1063, %v1062
  %v1073 = vpack.c.bf16 %v1065, %v1064
  %1074 = vrot.lane.b32.xlu0 %v478, 64
  %v1075 = vpop.permute.xlu0 %1074
  %v1078 = vsel %vm889, %v1066, 0
  %1080 = vmatprep.subr.bf16.mxu0 0
  %1081 = vmatpush1.bf16.msra.mxu0 %v1075
  %1082 = vmatprep.subr.bf16.mxu0 0
  %1083 = vmatpush1.bf16.msra.mxu0 0
  %1084 = vmatprep.subr.bf16.mxu0 0
  %1085 = vmatpush1.bf16.msra.mxu0 0
  %1086 = vmatprep.subr.bf16.mxu0 0
  %1087 = vmatpush1.bf16.msra.mxu0 0
  %1088 = vmatprep.subr.bf16.mxu0 0
  %1089 = vmatpush1.bf16.msra.mxu0 0
  %1090 = vmatprep.subr.bf16.mxu0 0
  %1091 = vmatpush1.bf16.msra.mxu0 0
  %1092 = vmatprep.subr.bf16.mxu0 0
  %1093 = vmatpush1.bf16.msra.mxu0 0
  %1094 = vmatprep.subr.bf16.mxu0 0
  %1095 = vmatpush1.bf16.msra.mxu0 0
  %1096 = vmatprep.subr.bf16.mxu0 0
  %1097 = vmatpush1.bf16.msra.mxu0 0
  %1098 = vmatprep.subr.bf16.mxu0 0
  %1099 = vmatpush1.bf16.msra.mxu0 0
  %1100 = vmatprep.subr.bf16.mxu0 0
  %1101 = vmatpush1.bf16.msra.mxu0 0
  %1102 = vmatprep.subr.bf16.mxu0 0
  %1103 = vmatpush1.bf16.msra.mxu0 0
  %1104 = vmatprep.subr.bf16.mxu0 0
  %1105 = vmatpush1.bf16.msra.mxu0 0
  %1106 = vmatprep.subr.bf16.mxu0 0
  %1107 = vmatpush1.bf16.msra.mxu0 0
  %1108 = vmatprep.subr.bf16.mxu0 0
  %1109 = vmatpush1.bf16.msra.mxu0 0
  %1110 = vmatprep.subr.bf16.mxu0 0
  %1111 = vmatpush1.bf16.msra.mxu0 0
  %1112 = vmatprep.mubr.bf16.mxu0 0
  %1113 = vmatmul.mubr.bf16.gmra.mrb[0].mxu0 %v1078
  %v1114 = vpop.f32.mrb[0].mxu0
  %v1115 = vadd.f32 0.0, %v1114
  %v1116 = vpop.f32.mrb[0].mxu0
  %v1117 = vpop.f32.mrb[0].mxu0
  %v1118 = vadd.f32 0.0, %v1117
  %v1119 = vpop.f32.mrb[0].mxu0
  %1120 = vdwg.mxu0
  %1121 = vrot.lane.b32.xlu0 %v479, 64
  %v1122 = vpop.permute.xlu0 %1121
  %v1125 = vsel %vm889, %v1067, 0
  %1127 = vmatprep.subr.bf16.mxu0 0
  %1128 = vmatpush1.bf16.msra.mxu0 %v1122
  %1129 = vmatprep.subr.bf16.mxu0 0
  %1130 = vmatpush1.bf16.msra.mxu0 0
  %1131 = vmatprep.subr.bf16.mxu0 0
  %1132 = vmatpush1.bf16.msra.mxu0 0
  %1133 = vmatprep.subr.bf16.mxu0 0
  %1134 = vmatpush1.bf16.msra.mxu0 0
  %1135 = vmatprep.subr.bf16.mxu0 0
  %1136 = vmatpush1.bf16.msra.mxu0 0
  %1137 = vmatprep.subr.bf16.mxu0 0
  %1138 = vmatpush1.bf16.msra.mxu0 0
  %1139 = vmatprep.subr.bf16.mxu0 0
  %1140 = vmatpush1.bf16.msra.mxu0 0
  %1141 = vmatprep.subr.bf16.mxu0 0
  %1142 = vmatpush1.bf16.msra.mxu0 0
  %1143 = vmatprep.subr.bf16.mxu0 0
  %1144 = vmatpush1.bf16.msra.mxu0 0
  %1145 = vmatprep.subr.bf16.mxu0 0
  %1146 = vmatpush1.bf16.msra.mxu0 0
  %1147 = vmatprep.subr.bf16.mxu0 0
  %1148 = vmatpush1.bf16.msra.mxu0 0
  %1149 = vmatprep.subr.bf16.mxu0 0
  %1150 = vmatpush1.bf16.msra.mxu0 0
  %1151 = vmatprep.subr.bf16.mxu0 0
  %1152 = vmatpush1.bf16.msra.mxu0 0
  %1153 = vmatprep.subr.bf16.mxu0 0
  %1154 = vmatpush1.bf16.msra.mxu0 0
  %1155 = vmatprep.subr.bf16.mxu0 0
  %1156 = vmatpush1.bf16.msra.mxu0 0
  %1157 = vmatprep.subr.bf16.mxu0 0
  %1158 = vmatpush1.bf16.msra.mxu0 0
  %1159 = vmatprep.mubr.bf16.mxu0 0
  %1160 = vmatmul.mubr.bf16.gmra.mrb[0].mxu0 %v1125
  %v1161 = vpop.f32.mrb[0].mxu0
  %v1162 = vadd.f32 0.0, %v1161
  %v1163 = vpop.f32.mrb[0].mxu0
  %v1164 = vpop.f32.mrb[0].mxu0
  %v1165 = vadd.f32 0.0, %v1164
  %v1166 = vpop.f32.mrb[0].mxu0
  %1167 = vdwg.mxu0
  %1168 = vrot.lane.b32.xlu0 %v480, 64
  %v1169 = vpop.permute.xlu0 %1168
  %v1172 = vsel %vm889, %v1068, 0
  %1174 = vmatprep.subr.bf16.mxu0 0
  %1175 = vmatpush1.bf16.msra.mxu0 %v1169
  %1176 = vmatprep.subr.bf16.mxu0 0
  %1177 = vmatpush1.bf16.msra.mxu0 0
  %1178 = vmatprep.subr.bf16.mxu0 0
  %1179 = vmatpush1.bf16.msra.mxu0 0
  %1180 = vmatprep.subr.bf16.mxu0 0
  %1181 = vmatpush1.bf16.msra.mxu0 0
  %1182 = vmatprep.subr.bf16.mxu0 0
  %1183 = vmatpush1.bf16.msra.mxu0 0
  %1184 = vmatprep.subr.bf16.mxu0 0
  %1185 = vmatpush1.bf16.msra.mxu0 0
  %1186 = vmatprep.subr.bf16.mxu0 0
  %1187 = vmatpush1.bf16.msra.mxu0 0
  %1188 = vmatprep.subr.bf16.mxu0 0
  %1189 = vmatpush1.bf16.msra.mxu0 0
  %1190 = vmatprep.subr.bf16.mxu0 0
  %1191 = vmatpush1.bf16.msra.mxu0 0
  %1192 = vmatprep.subr.bf16.mxu0 0
  %1193 = vmatpush1.bf16.msra.mxu0 0
  %1194 = vmatprep.subr.bf16.mxu0 0
  %1195 = vmatpush1.bf16.msra.mxu0 0
  %1196 = vmatprep.subr.bf16.mxu0 0
  %1197 = vmatpush1.bf16.msra.mxu0 0
  %1198 = vmatprep.subr.bf16.mxu0 0
  %1199 = vmatpush1.bf16.msra.mxu0 0
  %1200 = vmatprep.subr.bf16.mxu0 0
  %1201 = vmatpush1.bf16.msra.mxu0 0
  %1202 = vmatprep.subr.bf16.mxu0 0
  %1203 = vmatpush1.bf16.msra.mxu0 0
  %1204 = vmatprep.subr.bf16.mxu0 0
  %1205 = vmatpush1.bf16.msra.mxu0 0
  %1206 = vmatprep.mubr.bf16.mxu0 0
  %1207 = vmatmul.mubr.bf16.gmra.mrb[0].mxu0 %v1172
  %v1208 = vpop.f32.mrb[0].mxu0
  %v1209 = vadd.f32 0.0, %v1208
  %v1210 = vpop.f32.mrb[0].mxu0
  %v1211 = vpop.f32.mrb[0].mxu0
  %v1212 = vadd.f32 0.0, %v1211
  %v1213 = vpop.f32.mrb[0].mxu0
  %1214 = vdwg.mxu0
  %1215 = vrot.lane.b32.xlu0 %v481, 64
  %v1216 = vpop.permute.xlu0 %1215
  %v1219 = vsel %vm889, %v1069, 0
  %1221 = vmatprep.subr.bf16.mxu0 0
  %1222 = vmatpush1.bf16.msra.mxu0 %v1216
  %1223 = vmatprep.subr.bf16.mxu0 0
  %1224 = vmatpush1.bf16.msra.mxu0 0
  %1225 = vmatprep.subr.bf16.mxu0 0
  %1226 = vmatpush1.bf16.msra.mxu0 0
  %1227 = vmatprep.subr.bf16.mxu0 0
  %1228 = vmatpush1.bf16.msra.mxu0 0
  %1229 = vmatprep.subr.bf16.mxu0 0
  %1230 = vmatpush1.bf16.msra.mxu0 0
  %1231 = vmatprep.subr.bf16.mxu0 0
  %1232 = vmatpush1.bf16.msra.mxu0 0
  %1233 = vmatprep.subr.bf16.mxu0 0
  %1234 = vmatpush1.bf16.msra.mxu0 0
  %1235 = vmatprep.subr.bf16.mxu0 0
  %1236 = vmatpush1.bf16.msra.mxu0 0
  %1237 = vmatprep.subr.bf16.mxu0 0
  %1238 = vmatpush1.bf16.msra.mxu0 0
  %1239 = vmatprep.subr.bf16.mxu0 0
  %1240 = vmatpush1.bf16.msra.mxu0 0
  %1241 = vmatprep.subr.bf16.mxu0 0
  %1242 = vmatpush1.bf16.msra.mxu0 0
  %1243 = vmatprep.subr.bf16.mxu0 0
  %1244 = vmatpush1.bf16.msra.mxu0 0
  %1245 = vmatprep.subr.bf16.mxu0 0
  %1246 = vmatpush1.bf16.msra.mxu0 0
  %1247 = vmatprep.subr.bf16.mxu0 0
  %1248 = vmatpush1.bf16.msra.mxu0 0
  %1249 = vmatprep.subr.bf16.mxu0 0
  %1250 = vmatpush1.bf16.msra.mxu0 0
  %1251 = vmatprep.subr.bf16.mxu0 0
  %1252 = vmatpush1.bf16.msra.mxu0 0
  %1253 = vmatprep.mubr.bf16.mxu0 0
  %1254 = vmatmul.mubr.bf16.gmra.mrb[0].mxu0 %v1219
  %v1255 = vpop.f32.mrb[0].mxu0
  %v1256 = vadd.f32 0.0, %v1255
  %v1257 = vpop.f32.mrb[0].mxu0
  %v1258 = vpop.f32.mrb[0].mxu0
  %v1259 = vadd.f32 0.0, %v1258
  %v1260 = vpop.f32.mrb[0].mxu0
  %1261 = vdwg.mxu0
  %1262 = vrot.lane.b32.xlu0 %v482, 64
  %v1263 = vpop.permute.xlu0 %1262
  %v1266 = vsel %vm889, %v1070, 0
  %1268 = vmatprep.subr.bf16.mxu0 0
  %1269 = vmatpush1.bf16.msra.mxu0 %v1263
  %1270 = vmatprep.subr.bf16.mxu0 0
  %1271 = vmatpush1.bf16.msra.mxu0 0
  %1272 = vmatprep.subr.bf16.mxu0 0
  %1273 = vmatpush1.bf16.msra.mxu0 0
  %1274 = vmatprep.subr.bf16.mxu0 0
  %1275 = vmatpush1.bf16.msra.mxu0 0
  %1276 = vmatprep.subr.bf16.mxu0 0
  %1277 = vmatpush1.bf16.msra.mxu0 0
  %1278 = vmatprep.subr.bf16.mxu0 0
  %1279 = vmatpush1.bf16.msra.mxu0 0
  %1280 = vmatprep.subr.bf16.mxu0 0
  %1281 = vmatpush1.bf16.msra.mxu0 0
  %1282 = vmatprep.subr.bf16.mxu0 0
  %1283 = vmatpush1.bf16.msra.mxu0 0
  %1284 = vmatprep.subr.bf16.mxu0 0
  %1285 = vmatpush1.bf16.msra.mxu0 0
  %1286 = vmatprep.subr.bf16.mxu0 0
  %1287 = vmatpush1.bf16.msra.mxu0 0
  %1288 = vmatprep.subr.bf16.mxu0 0
  %1289 = vmatpush1.bf16.msra.mxu0 0
  %1290 = vmatprep.subr.bf16.mxu0 0
  %1291 = vmatpush1.bf16.msra.mxu0 0
  %1292 = vmatprep.subr.bf16.mxu0 0
  %1293 = vmatpush1.bf16.msra.mxu0 0
  %1294 = vmatprep.subr.bf16.mxu0 0
  %1295 = vmatpush1.bf16.msra.mxu0 0
  %1296 = vmatprep.subr.bf16.mxu0 0
  %1297 = vmatpush1.bf16.msra.mxu0 0
  %1298 = vmatprep.subr.bf16.mxu0 0
  %1299 = vmatpush1.bf16.msra.mxu0 0
  %1300 = vmatprep.mubr.bf16.mxu0 0
  %1301 = vmatmul.mubr.bf16.gmra.mrb[0].mxu0 %v1266
  %v1302 = vpop.f32.mrb[0].mxu0
  %v1303 = vadd.f32 0.0, %v1302
  %v1304 = vpop.f32.mrb[0].mxu0
  %v1305 = vpop.f32.mrb[0].mxu0
  %v1306 = vadd.f32 0.0, %v1305
  %v1307 = vpop.f32.mrb[0].mxu0
  %1308 = vdwg.mxu0
  %1309 = vrot.lane.b32.xlu0 %v483, 64
  %v1310 = vpop.permute.xlu0 %1309
  %v1313 = vsel %vm889, %v1071, 0
  %1315 = vmatprep.subr.bf16.mxu0 0
  %1316 = vmatpush1.bf16.msra.mxu0 %v1310
  %1317 = vmatprep.subr.bf16.mxu0 0
  %1318 = vmatpush1.bf16.msra.mxu0 0
  %1319 = vmatprep.subr.bf16.mxu0 0
  %1320 = vmatpush1.bf16.msra.mxu0 0
  %1321 = vmatprep.subr.bf16.mxu0 0
  %1322 = vmatpush1.bf16.msra.mxu0 0
  %1323 = vmatprep.subr.bf16.mxu0 0
  %1324 = vmatpush1.bf16.msra.mxu0 0
  %1325 = vmatprep.subr.bf16.mxu0 0
  %1326 = vmatpush1.bf16.msra.mxu0 0
  %1327 = vmatprep.subr.bf16.mxu0 0
  %1328 = vmatpush1.bf16.msra.mxu0 0
  %1329 = vmatprep.subr.bf16.mxu0 0
  %1330 = vmatpush1.bf16.msra.mxu0 0
  %1331 = vmatprep.subr.bf16.mxu0 0
  %1332 = vmatpush1.bf16.msra.mxu0 0
  %1333 = vmatprep.subr.bf16.mxu0 0
  %1334 = vmatpush1.bf16.msra.mxu0 0
  %1335 = vmatprep.subr.bf16.mxu0 0
  %1336 = vmatpush1.bf16.msra.mxu0 0
  %1337 = vmatprep.subr.bf16.mxu0 0
  %1338 = vmatpush1.bf16.msra.mxu0 0
  %1339 = vmatprep.subr.bf16.mxu0 0
  %1340 = vmatpush1.bf16.msra.mxu0 0
  %1341 = vmatprep.subr.bf16.mxu0 0
  %1342 = vmatpush1.bf16.msra.mxu0 0
  %1343 = vmatprep.subr.bf16.mxu0 0
  %1344 = vmatpush1.bf16.msra.mxu0 0
  %1345 = vmatprep.subr.bf16.mxu0 0
  %1346 = vmatpush1.bf16.msra.mxu0 0
  %1347 = vmatprep.mubr.bf16.mxu0 0
  %1348 = vmatmul.mubr.bf16.gmra.mrb[0].mxu0 %v1313
  %v1349 = vpop.f32.mrb[0].mxu0
  %v1350 = vadd.f32 0.0, %v1349
  %v1351 = vpop.f32.mrb[0].mxu0
  %v1352 = vpop.f32.mrb[0].mxu0
  %v1353 = vadd.f32 0.0, %v1352
  %v1354 = vpop.f32.mrb[0].mxu0
  %1355 = vdwg.mxu0
  %1356 = vrot.lane.b32.xlu0 %v484, 64
  %v1357 = vpop.permute.xlu0 %1356
  %v1360 = vsel %vm889, %v1072, 0
  %1362 = vmatprep.subr.bf16.mxu0 0
  %1363 = vmatpush1.bf16.msra.mxu0 %v1357
  %1364 = vmatprep.subr.bf16.mxu0 0
  %1365 = vmatpush1.bf16.msra.mxu0 0
  %1366 = vmatprep.subr.bf16.mxu0 0
  %1367 = vmatpush1.bf16.msra.mxu0 0
  %1368 = vmatprep.subr.bf16.mxu0 0
  %1369 = vmatpush1.bf16.msra.mxu0 0
  %1370 = vmatprep.subr.bf16.mxu0 0
  %1371 = vmatpush1.bf16.msra.mxu0 0
  %1372 = vmatprep.subr.bf16.mxu0 0
  %1373 = vmatpush1.bf16.msra.mxu0 0
  %1374 = vmatprep.subr.bf16.mxu0 0
  %1375 = vmatpush1.bf16.msra.mxu0 0
  %1376 = vmatprep.subr.bf16.mxu0 0
  %1377 = vmatpush1.bf16.msra.mxu0 0
  %1378 = vmatprep.subr.bf16.mxu0 0
  %1379 = vmatpush1.bf16.msra.mxu0 0
  %1380 = vmatprep.subr.bf16.mxu0 0
  %1381 = vmatpush1.bf16.msra.mxu0 0
  %1382 = vmatprep.subr.bf16.mxu0 0
  %1383 = vmatpush1.bf16.msra.mxu0 0
  %1384 = vmatprep.subr.bf16.mxu0 0
  %1385 = vmatpush1.bf16.msra.mxu0 0
  %1386 = vmatprep.subr.bf16.mxu0 0
  %1387 = vmatpush1.bf16.msra.mxu0 0
  %1388 = vmatprep.subr.bf16.mxu0 0
  %1389 = vmatpush1.bf16.msra.mxu0 0
  %1390 = vmatprep.subr.bf16.mxu0 0
  %1391 = vmatpush1.bf16.msra.mxu0 0
  %1392 = vmatprep.subr.bf16.mxu0 0
  %1393 = vmatpush1.bf16.msra.mxu0 0
  %1394 = vmatprep.mubr.bf16.mxu0 0
  %1395 = vmatmul.mubr.bf16.gmra.mrb[0].mxu0 %v1360
  %v1396 = vpop.f32.mrb[0].mxu0
  %v1397 = vadd.f32 0.0, %v1396
  %v1398 = vpop.f32.mrb[0].mxu0
  %v1399 = vpop.f32.mrb[0].mxu0
  %v1400 = vadd.f32 0.0, %v1399
  %v1401 = vpop.f32.mrb[0].mxu0
  %1402 = vdwg.mxu0
  %1403 = vrot.lane.b32.xlu0 %v485, 64
  %v1404 = vpop.permute.xlu0 %1403
  %v1407 = vsel %vm889, %v1073, 0
  %1409 = vmatprep.subr.bf16.mxu0 0
  %1410 = vmatpush1.bf16.msra.mxu0 %v1404
  %1411 = vmatprep.subr.bf16.mxu0 0
  %1412 = vmatpush1.bf16.msra.mxu0 0
  %1413 = vmatprep.subr.bf16.mxu0 0
  %1414 = vmatpush1.bf16.msra.mxu0 0
  %1415 = vmatprep.subr.bf16.mxu0 0
  %1416 = vmatpush1.bf16.msra.mxu0 0
  %1417 = vmatprep.subr.bf16.mxu0 0
  %1418 = vmatpush1.bf16.msra.mxu0 0
  %1419 = vmatprep.subr.bf16.mxu0 0
  %1420 = vmatpush1.bf16.msra.mxu0 0
  %1421 = vmatprep.subr.bf16.mxu0 0
  %1422 = vmatpush1.bf16.msra.mxu0 0
  %1423 = vmatprep.subr.bf16.mxu0 0
  %1424 = vmatpush1.bf16.msra.mxu0 0
  %1425 = vmatprep.subr.bf16.mxu0 0
  %1426 = vmatpush1.bf16.msra.mxu0 0
  %1427 = vmatprep.subr.bf16.mxu0 0
  %1428 = vmatpush1.bf16.msra.mxu0 0
  %1429 = vmatprep.subr.bf16.mxu0 0
  %1430 = vmatpush1.bf16.msra.mxu0 0
  %1431 = vmatprep.subr.bf16.mxu0 0
  %1432 = vmatpush1.bf16.msra.mxu0 0
  %1433 = vmatprep.subr.bf16.mxu0 0
  %1434 = vmatpush1.bf16.msra.mxu0 0
  %1435 = vmatprep.subr.bf16.mxu0 0
  %1436 = vmatpush1.bf16.msra.mxu0 0
  %1437 = vmatprep.subr.bf16.mxu0 0
  %1438 = vmatpush1.bf16.msra.mxu0 0
  %1439 = vmatprep.subr.bf16.mxu0 0
  %1440 = vmatpush1.bf16.msra.mxu0 0
  %1441 = vmatprep.mubr.bf16.mxu0 0
  %1442 = vmatmul.mubr.bf16.gmra.mrb[0].mxu0 %v1407
  %v1443 = vpop.f32.mrb[0].mxu0
  %v1444 = vadd.f32 0.0, %v1443
  %v1445 = vpop.f32.mrb[0].mxu0
  %v1446 = vpop.f32.mrb[0].mxu0
  %v1447 = vadd.f32 0.0, %v1446
  %v1448 = vpop.f32.mrb[0].mxu0
  %1449 = vdwg.mxu0
  %1450 = vst.msk [vmem:[#allocation2] sm:$0xff] %vm491, %v1115
  %1451 = vst.msk [vmem:[#allocation2 + $0x8] sm:$0xff] %vm491, %v1118
  %1452 = vst.msk [vmem:[#allocation2 + $0x10] sm:$0xff] %vm491, %v1162
  %1453 = vst.msk [vmem:[#allocation2 + $0x18] sm:$0xff] %vm491, %v1165
  %1454 = vst.msk [vmem:[#allocation2 + $0x20] sm:$0xff] %vm491, %v1209
  %1455 = vst.msk [vmem:[#allocation2 + $0x28] sm:$0xff] %vm491, %v1212
  %1456 = vst.msk [vmem:[#allocation2 + $0x30] sm:$0xff] %vm491, %v1256
  %1457 = vst.msk [vmem:[#allocation2 + $0x38] sm:$0xff] %vm491, %v1259
  %1458 = vst.msk [vmem:[#allocation2 + $0x40] sm:$0xff] %vm491, %v1303
  %1459 = vst.msk [vmem:[#allocation2 + $0x48] sm:$0xff] %vm491, %v1306
  %1460 = vst.msk [vmem:[#allocation2 + $0x50] sm:$0xff] %vm491, %v1350
  %1461 = vst.msk [vmem:[#allocation2 + $0x58] sm:$0xff] %vm491, %v1353
  %1462 = vst.msk [vmem:[#allocation2 + $0x60] sm:$0xff] %vm491, %v1397
  %1463 = vst.msk [vmem:[#allocation2 + $0x68] sm:$0xff] %vm491, %v1400
  %1464 = vst.msk [vmem:[#allocation2 + $0x70] sm:$0xff] %vm491, %v1444
  %1465 = vst.msk [vmem:[#allocation2 + $0x78] sm:$0xff] %vm491, %v1447
  %s1466 = scalar_lea.vmem %s1, 16
  %v1467 = vld [vmem:[%s1466] sm:$0xff]
  %v1468 = vld [vmem:[%s1466 + $0x8] sm:$0xff]
  %1470 = vrot.lane.b32.xlu0 %v470, 120
  %v1471 = vpop.permute.xlu0 %1470
  %1472 = vrot.lane.b32.xlu0 %v478, 88
  %v1473 = vpop.permute.xlu0 %1472
  %v1475 = vsel %vm491, %v1471, 0
  %v1478 = vsel %vm491, %v1473, 0
  %1480 = vmatprep.subr.bf16.mxu0 0
  %1481 = vmatpush1.bf16.xpose.msra.mxu0 %v1478
  %1482 = vmatprep.subr.bf16.mxu0 0
  %1483 = vmatpush1.bf16.xpose.msra.mxu0 0
  %1484 = vmatprep.subr.bf16.mxu0 0
  %1485 = vmatpush1.bf16.xpose.msra.mxu0 0
  %1486 = vmatprep.subr.bf16.mxu0 0
  %1487 = vmatpush1.bf16.xpose.msra.mxu0 0
  %1488 = vmatprep.subr.bf16.mxu0 0
  %1489 = vmatpush1.bf16.xpose.msra.mxu0 0
  %1490 = vmatprep.subr.bf16.mxu0 0
  %1491 = vmatpush1.bf16.xpose.msra.mxu0 0
  %1492 = vmatprep.subr.bf16.mxu0 0
  %1493 = vmatpush1.bf16.xpose.msra.mxu0 0
  %1494 = vmatprep.subr.bf16.mxu0 0
  %1495 = vmatpush1.bf16.xpose.msra.mxu0 0
  %1496 = vmatprep.subr.bf16.mxu0 0
  %1497 = vmatpush1.bf16.xpose.msra.mxu0 0
  %1498 = vmatprep.subr.bf16.mxu0 0
  %1499 = vmatpush1.bf16.xpose.msra.mxu0 0
  %1500 = vmatprep.subr.bf16.mxu0 0
  %1501 = vmatpush1.bf16.xpose.msra.mxu0 0
  %1502 = vmatprep.subr.bf16.mxu0 0
  %1503 = vmatpush1.bf16.xpose.msra.mxu0 0
  %1504 = vmatprep.subr.bf16.mxu0 0
  %1505 = vmatpush1.bf16.xpose.msra.mxu0 0
  %1506 = vmatprep.subr.bf16.mxu0 0
  %1507 = vmatpush1.bf16.xpose.msra.mxu0 0
  %1508 = vmatprep.subr.bf16.mxu0 0
  %1509 = vmatpush1.bf16.xpose.msra.mxu0 0
  %1510 = vmatprep.subr.bf16.mxu0 0
  %1511 = vmatpush1.bf16.xpose.msra.mxu0 0
  %1512 = vmatprep.mubr.bf16.mxu0 0
  %1513 = vmatmul.mubr.bf16.gmra.mrb[0].mxu0 %v1475
  %v1514 = vpop.f32.mrb[0].mxu0
  %v1515 = vadd.f32 %v1467, %v1514
  %v1516 = vpop.f32.mrb[0].mxu0
  %v1517 = vpop.f32.mrb[0].mxu0
  %v1518 = vadd.f32 %v1468, %v1517
  %v1519 = vpop.f32.mrb[0].mxu0
  %1520 = vdwg.mxu0
  %1522 = vrot.lane.b32.xlu0 %v471, 120
  %v1523 = vpop.permute.xlu0 %1522
  %1524 = vrot.lane.b32.xlu0 %v479, 88
  %v1525 = vpop.permute.xlu0 %1524
  %v1527 = vsel %vm491, %v1523, 0
  %v1530 = vsel %vm491, %v1525, 0
  %1532 = vmatprep.subr.bf16.mxu0 0
  %1533 = vmatpush1.bf16.xpose.msra.mxu0 %v1530
  %1534 = vmatprep.subr.bf16.mxu0 0
  %1535 = vmatpush1.bf16.xpose.msra.mxu0 0
  %1536 = vmatprep.subr.bf16.mxu0 0
  %1537 = vmatpush1.bf16.xpose.msra.mxu0 0
  %1538 = vmatprep.subr.bf16.mxu0 0
  %1539 = vmatpush1.bf16.xpose.msra.mxu0 0
  %1540 = vmatprep.subr.bf16.mxu0 0
  %1541 = vmatpush1.bf16.xpose.msra.mxu0 0
  %1542 = vmatprep.subr.bf16.mxu0 0
  %1543 = vmatpush1.bf16.xpose.msra.mxu0 0
  %1544 = vmatprep.subr.bf16.mxu0 0
  %1545 = vmatpush1.bf16.xpose.msra.mxu0 0
  %1546 = vmatprep.subr.bf16.mxu0 0
  %1547 = vmatpush1.bf16.xpose.msra.mxu0 0
  %1548 = vmatprep.subr.bf16.mxu0 0
  %1549 = vmatpush1.bf16.xpose.msra.mxu0 0
  %1550 = vmatprep.subr.bf16.mxu0 0
  %1551 = vmatpush1.bf16.xpose.msra.mxu0 0
  %1552 = vmatprep.subr.bf16.mxu0 0
  %1553 = vmatpush1.bf16.xpose.msra.mxu0 0
  %1554 = vmatprep.subr.bf16.mxu0 0
  %1555 = vmatpush1.bf16.xpose.msra.mxu0 0
  %1556 = vmatprep.subr.bf16.mxu0 0
  %1557 = vmatpush1.bf16.xpose.msra.mxu0 0
  %1558 = vmatprep.subr.bf16.mxu0 0
  %1559 = vmatpush1.bf16.xpose.msra.mxu0 0
  %1560 = vmatprep.subr.bf16.mxu0 0
  %1561 = vmatpush1.bf16.xpose.msra.mxu0 0
  %1562 = vmatprep.subr.bf16.mxu0 0
  %1563 = vmatpush1.bf16.xpose.msra.mxu0 0
  %1564 = vmatprep.mubr.bf16.mxu0 0
  %1565 = vmatmul.mubr.bf16.gmra.mrb[0].mxu0 %v1527
  %v1566 = vpop.f32.mrb[0].mxu0
  %v1567 = vadd.f32 %v1467, %v1566
  %v1568 = vpop.f32.mrb[0].mxu0
  %v1569 = vpop.f32.mrb[0].mxu0
  %v1570 = vadd.f32 %v1468, %v1569
  %v1571 = vpop.f32.mrb[0].mxu0
  %1572 = vdwg.mxu0
  %1574 = vrot.lane.b32.xlu0 %v472, 120
  %v1575 = vpop.permute.xlu0 %1574
  %1576 = vrot.lane.b32.xlu0 %v480, 88
  %v1577 = vpop.permute.xlu0 %1576
  %v1579 = vsel %vm491, %v1575, 0
  %v1582 = vsel %vm491, %v1577, 0
  %1584 = vmatprep.subr.bf16.mxu0 0
  %1585 = vmatpush1.bf16.xpose.msra.mxu0 %v1582
  %1586 = vmatprep.subr.bf16.mxu0 0
  %1587 = vmatpush1.bf16.xpose.msra.mxu0 0
  %1588 = vmatprep.subr.bf16.mxu0 0
  %1589 = vmatpush1.bf16.xpose.msra.mxu0 0
  %1590 = vmatprep.subr.bf16.mxu0 0
  %1591 = vmatpush1.bf16.xpose.msra.mxu0 0
  %1592 = vmatprep.subr.bf16.mxu0 0
  %1593 = vmatpush1.bf16.xpose.msra.mxu0 0
  %1594 = vmatprep.subr.bf16.mxu0 0
  %1595 = vmatpush1.bf16.xpose.msra.mxu0 0
  %1596 = vmatprep.subr.bf16.mxu0 0
  %1597 = vmatpush1.bf16.xpose.msra.mxu0 0
  %1598 = vmatprep.subr.bf16.mxu0 0
  %1599 = vmatpush1.bf16.xpose.msra.mxu0 0
  %1600 = vmatprep.subr.bf16.mxu0 0
  %1601 = vmatpush1.bf16.xpose.msra.mxu0 0
  %1602 = vmatprep.subr.bf16.mxu0 0
  %1603 = vmatpush1.bf16.xpose.msra.mxu0 0
  %1604 = vmatprep.subr.bf16.mxu0 0
  %1605 = vmatpush1.bf16.xpose.msra.mxu0 0
  %1606 = vmatprep.subr.bf16.mxu0 0
  %1607 = vmatpush1.bf16.xpose.msra.mxu0 0
  %1608 = vmatprep.subr.bf16.mxu0 0
  %1609 = vmatpush1.bf16.xpose.msra.mxu0 0
  %1610 = vmatprep.subr.bf16.mxu0 0
  %1611 = vmatpush1.bf16.xpose.msra.mxu0 0
  %1612 = vmatprep.subr.bf16.mxu0 0
  %1613 = vmatpush1.bf16.xpose.msra.mxu0 0
  %1614 = vmatprep.subr.bf16.mxu0 0
  %1615 = vmatpush1.bf16.xpose.msra.mxu0 0
  %1616 = vmatprep.mubr.bf16.mxu0 0
  %1617 = vmatmul.mubr.bf16.gmra.mrb[0].mxu0 %v1579
  %v1618 = vpop.f32.mrb[0].mxu0
  %v1619 = vadd.f32 %v1467, %v1618
  %v1620 = vpop.f32.mrb[0].mxu0
  %v1621 = vpop.f32.mrb[0].mxu0
  %v1622 = vadd.f32 %v1468, %v1621
  %v1623 = vpop.f32.mrb[0].mxu0
  %1624 = vdwg.mxu0
  %1626 = vrot.lane.b32.xlu0 %v473, 120
  %v1627 = vpop.permute.xlu0 %1626
  %1628 = vrot.lane.b32.xlu0 %v481, 88
  %v1629 = vpop.permute.xlu0 %1628
  %v1631 = vsel %vm491, %v1627, 0
  %v1634 = vsel %vm491, %v1629, 0
  %1636 = vmatprep.subr.bf16.mxu0 0
  %1637 = vmatpush1.bf16.xpose.msra.mxu0 %v1634
  %1638 = vmatprep.subr.bf16.mxu0 0
  %1639 = vmatpush1.bf16.xpose.msra.mxu0 0
  %1640 = vmatprep.subr.bf16.mxu0 0
  %1641 = vmatpush1.bf16.xpose.msra.mxu0 0
  %1642 = vmatprep.subr.bf16.mxu0 0
  %1643 = vmatpush1.bf16.xpose.msra.mxu0 0
  %1644 = vmatprep.subr.bf16.mxu0 0
  %1645 = vmatpush1.bf16.xpose.msra.mxu0 0
  %1646 = vmatprep.subr.bf16.mxu0 0
  %1647 = vmatpush1.bf16.xpose.msra.mxu0 0
  %1648 = vmatprep.subr.bf16.mxu0 0
  %1649 = vmatpush1.bf16.xpose.msra.mxu0 0
  %1650 = vmatprep.subr.bf16.mxu0 0
  %1651 = vmatpush1.bf16.xpose.msra.mxu0 0
  %1652 = vmatprep.subr.bf16.mxu0 0
  %1653 = vmatpush1.bf16.xpose.msra.mxu0 0
  %1654 = vmatprep.subr.bf16.mxu0 0
  %1655 = vmatpush1.bf16.xpose.msra.mxu0 0
  %1656 = vmatprep.subr.bf16.mxu0 0
  %1657 = vmatpush1.bf16.xpose.msra.mxu0 0
  %1658 = vmatprep.subr.bf16.mxu0 0
  %1659 = vmatpush1.bf16.xpose.msra.mxu0 0
  %1660 = vmatprep.subr.bf16.mxu0 0
  %1661 = vmatpush1.bf16.xpose.msra.mxu0 0
  %1662 = vmatprep.subr.bf16.mxu0 0
  %1663 = vmatpush1.bf16.xpose.msra.mxu0 0
  %1664 = vmatprep.subr.bf16.mxu0 0
  %1665 = vmatpush1.bf16.xpose.msra.mxu0 0
  %1666 = vmatprep.subr.bf16.mxu0 0
  %1667 = vmatpush1.bf16.xpose.msra.mxu0 0
  %1668 = vmatprep.mubr.bf16.mxu0 0
  %1669 = vmatmul.mubr.bf16.gmra.mrb[0].mxu0 %v1631
  %v1670 = vpop.f32.mrb[0].mxu0
  %v1671 = vadd.f32 %v1467, %v1670
  %v1672 = vpop.f32.mrb[0].mxu0
  %v1673 = vpop.f32.mrb[0].mxu0
  %v1674 = vadd.f32 %v1468, %v1673
  %v1675 = vpop.f32.mrb[0].mxu0
  %1676 = vdwg.mxu0
  %1678 = vrot.lane.b32.xlu0 %v474, 120
  %v1679 = vpop.permute.xlu0 %1678
  %1680 = vrot.lane.b32.xlu0 %v482, 88
  %v1681 = vpop.permute.xlu0 %1680
  %v1683 = vsel %vm491, %v1679, 0
  %v1686 = vsel %vm491, %v1681, 0
  %1688 = vmatprep.subr.bf16.mxu0 0
  %1689 = vmatpush1.bf16.xpose.msra.mxu0 %v1686
  %1690 = vmatprep.subr.bf16.mxu0 0
  %1691 = vmatpush1.bf16.xpose.msra.mxu0 0
  %1692 = vmatprep.subr.bf16.mxu0 0
  %1693 = vmatpush1.bf16.xpose.msra.mxu0 0
  %1694 = vmatprep.subr.bf16.mxu0 0
  %1695 = vmatpush1.bf16.xpose.msra.mxu0 0
  %1696 = vmatprep.subr.bf16.mxu0 0
  %1697 = vmatpush1.bf16.xpose.msra.mxu0 0
  %1698 = vmatprep.subr.bf16.mxu0 0
  %1699 = vmatpush1.bf16.xpose.msra.mxu0 0
  %1700 = vmatprep.subr.bf16.mxu0 0
  %1701 = vmatpush1.bf16.xpose.msra.mxu0 0
  %1702 = vmatprep.subr.bf16.mxu0 0
  %1703 = vmatpush1.bf16.xpose.msra.mxu0 0
  %1704 = vmatprep.subr.bf16.mxu0 0
  %1705 = vmatpush1.bf16.xpose.msra.mxu0 0
  %1706 = vmatprep.subr.bf16.mxu0 0
  %1707 = vmatpush1.bf16.xpose.msra.mxu0 0
  %1708 = vmatprep.subr.bf16.mxu0 0
  %1709 = vmatpush1.bf16.xpose.msra.mxu0 0
  %1710 = vmatprep.subr.bf16.mxu0 0
  %1711 = vmatpush1.bf16.xpose.msra.mxu0 0
  %1712 = vmatprep.subr.bf16.mxu0 0
  %1713 = vmatpush1.bf16.xpose.msra.mxu0 0
  %1714 = vmatprep.subr.bf16.mxu0 0
  %1715 = vmatpush1.bf16.xpose.msra.mxu0 0
  %1716 = vmatprep.subr.bf16.mxu0 0
  %1717 = vmatpush1.bf16.xpose.msra.mxu0 0
  %1718 = vmatprep.subr.bf16.mxu0 0
  %1719 = vmatpush1.bf16.xpose.msra.mxu0 0
  %1720 = vmatprep.mubr.bf16.mxu0 0
  %1721 = vmatmul.mubr.bf16.gmra.mrb[0].mxu0 %v1683
  %v1722 = vpop.f32.mrb[0].mxu0
  %v1723 = vadd.f32 %v1467, %v1722
  %v1724 = vpop.f32.mrb[0].mxu0
  %v1725 = vpop.f32.mrb[0].mxu0
  %v1726 = vadd.f32 %v1468, %v1725
  %v1727 = vpop.f32.mrb[0].mxu0
  %1728 = vdwg.mxu0
  %1730 = vrot.lane.b32.xlu0 %v475, 120
  %v1731 = vpop.permute.xlu0 %1730
  %1732 = vrot.lane.b32.xlu0 %v483, 88
  %v1733 = vpop.permute.xlu0 %1732
  %v1735 = vsel %vm491, %v1731, 0
  %v1738 = vsel %vm491, %v1733, 0
  %1740 = vmatprep.subr.bf16.mxu0 0
  %1741 = vmatpush1.bf16.xpose.msra.mxu0 %v1738
  %1742 = vmatprep.subr.bf16.mxu0 0
  %1743 = vmatpush1.bf16.xpose.msra.mxu0 0
  %1744 = vmatprep.subr.bf16.mxu0 0
  %1745 = vmatpush1.bf16.xpose.msra.mxu0 0
  %1746 = vmatprep.subr.bf16.mxu0 0
  %1747 = vmatpush1.bf16.xpose.msra.mxu0 0
  %1748 = vmatprep.subr.bf16.mxu0 0
  %1749 = vmatpush1.bf16.xpose.msra.mxu0 0
  %1750 = vmatprep.subr.bf16.mxu0 0
  %1751 = vmatpush1.bf16.xpose.msra.mxu0 0
  %1752 = vmatprep.subr.bf16.mxu0 0
  %1753 = vmatpush1.bf16.xpose.msra.mxu0 0
  %1754 = vmatprep.subr.bf16.mxu0 0
  %1755 = vmatpush1.bf16.xpose.msra.mxu0 0
  %1756 = vmatprep.subr.bf16.mxu0 0
  %1757 = vmatpush1.bf16.xpose.msra.mxu0 0
  %1758 = vmatprep.subr.bf16.mxu0 0
  %1759 = vmatpush1.bf16.xpose.msra.mxu0 0
  %1760 = vmatprep.subr.bf16.mxu0 0
  %1761 = vmatpush1.bf16.xpose.msra.mxu0 0
  %1762 = vmatprep.subr.bf16.mxu0 0
  %1763 = vmatpush1.bf16.xpose.msra.mxu0 0
  %1764 = vmatprep.subr.bf16.mxu0 0
  %1765 = vmatpush1.bf16.xpose.msra.mxu0 0
  %1766 = vmatprep.subr.bf16.mxu0 0
  %1767 = vmatpush1.bf16.xpose.msra.mxu0 0
  %1768 = vmatprep.subr.bf16.mxu0 0
  %1769 = vmatpush1.bf16.xpose.msra.mxu0 0
  %1770 = vmatprep.subr.bf16.mxu0 0
  %1771 = vmatpush1.bf16.xpose.msra.mxu0 0
  %1772 = vmatprep.mubr.bf16.mxu0 0
  %1773 = vmatmul.mubr.bf16.gmra.mrb[0].mxu0 %v1735
  %v1774 = vpop.f32.mrb[0].mxu0
  %v1775 = vadd.f32 %v1467, %v1774
  %v1776 = vpop.f32.mrb[0].mxu0
  %v1777 = vpop.f32.mrb[0].mxu0
  %v1778 = vadd.f32 %v1468, %v1777
  %v1779 = vpop.f32.mrb[0].mxu0
  %1780 = vdwg.mxu0
  %1782 = vrot.lane.b32.xlu0 %v476, 120
  %v1783 = vpop.permute.xlu0 %1782
  %1784 = vrot.lane.b32.xlu0 %v484, 88
  %v1785 = vpop.permute.xlu0 %1784
  %v1787 = vsel %vm491, %v1783, 0
  %v1790 = vsel %vm491, %v1785, 0
  %1792 = vmatprep.subr.bf16.mxu0 0
  %1793 = vmatpush1.bf16.xpose.msra.mxu0 %v1790
  %1794 = vmatprep.subr.bf16.mxu0 0
  %1795 = vmatpush1.bf16.xpose.msra.mxu0 0
  %1796 = vmatprep.subr.bf16.mxu0 0
  %1797 = vmatpush1.bf16.xpose.msra.mxu0 0
  %1798 = vmatprep.subr.bf16.mxu0 0
  %1799 = vmatpush1.bf16.xpose.msra.mxu0 0
  %1800 = vmatprep.subr.bf16.mxu0 0
  %1801 = vmatpush1.bf16.xpose.msra.mxu0 0
  %1802 = vmatprep.subr.bf16.mxu0 0
  %1803 = vmatpush1.bf16.xpose.msra.mxu0 0
  %1804 = vmatprep.subr.bf16.mxu0 0
  %1805 = vmatpush1.bf16.xpose.msra.mxu0 0
  %1806 = vmatprep.subr.bf16.mxu0 0
  %1807 = vmatpush1.bf16.xpose.msra.mxu0 0
  %1808 = vmatprep.subr.bf16.mxu0 0
  %1809 = vmatpush1.bf16.xpose.msra.mxu0 0
  %1810 = vmatprep.subr.bf16.mxu0 0
  %1811 = vmatpush1.bf16.xpose.msra.mxu0 0
  %1812 = vmatprep.subr.bf16.mxu0 0
  %1813 = vmatpush1.bf16.xpose.msra.mxu0 0
  %1814 = vmatprep.subr.bf16.mxu0 0
  %1815 = vmatpush1.bf16.xpose.msra.mxu0 0
  %1816 = vmatprep.subr.bf16.mxu0 0
  %1817 = vmatpush1.bf16.xpose.msra.mxu0 0
  %1818 = vmatprep.subr.bf16.mxu0 0
  %1819 = vmatpush1.bf16.xpose.msra.mxu0 0
  %1820 = vmatprep.subr.bf16.mxu0 0
  %1821 = vmatpush1.bf16.xpose.msra.mxu0 0
  %1822 = vmatprep.subr.bf16.mxu0 0
  %1823 = vmatpush1.bf16.xpose.msra.mxu0 0
  %1824 = vmatprep.mubr.bf16.mxu0 0
  %1825 = vmatmul.mubr.bf16.gmra.mrb[0].mxu0 %v1787
  %v1826 = vpop.f32.mrb[0].mxu0
  %v1827 = vadd.f32 %v1467, %v1826
  %v1828 = vpop.f32.mrb[0].mxu0
  %v1829 = vpop.f32.mrb[0].mxu0
  %v1830 = vadd.f32 %v1468, %v1829
  %v1831 = vpop.f32.mrb[0].mxu0
  %1832 = vdwg.mxu0
  %1834 = vrot.lane.b32.xlu0 %v477, 120
  %v1835 = vpop.permute.xlu0 %1834
  %1836 = vrot.lane.b32.xlu0 %v485, 88
  %v1837 = vpop.permute.xlu0 %1836
  %v1839 = vsel %vm491, %v1835, 0
  %v1842 = vsel %vm491, %v1837, 0
  %1844 = vmatprep.subr.bf16.mxu0 0
  %1845 = vmatpush1.bf16.xpose.msra.mxu0 %v1842
  %1846 = vmatprep.subr.bf16.mxu0 0
  %1847 = vmatpush1.bf16.xpose.msra.mxu0 0
  %1848 = vmatprep.subr.bf16.mxu0 0
  %1849 = vmatpush1.bf16.xpose.msra.mxu0 0
  %1850 = vmatprep.subr.bf16.mxu0 0
  %1851 = vmatpush1.bf16.xpose.msra.mxu0 0
  %1852 = vmatprep.subr.bf16.mxu0 0
  %1853 = vmatpush1.bf16.xpose.msra.mxu0 0
  %1854 = vmatprep.subr.bf16.mxu0 0
  %1855 = vmatpush1.bf16.xpose.msra.mxu0 0
  %1856 = vmatprep.subr.bf16.mxu0 0
  %1857 = vmatpush1.bf16.xpose.msra.mxu0 0
  %1858 = vmatprep.subr.bf16.mxu0 0
  %1859 = vmatpush1.bf16.xpose.msra.mxu0 0
  %1860 = vmatprep.subr.bf16.mxu0 0
  %1861 = vmatpush1.bf16.xpose.msra.mxu0 0
  %1862 = vmatprep.subr.bf16.mxu0 0
  %1863 = vmatpush1.bf16.xpose.msra.mxu0 0
  %1864 = vmatprep.subr.bf16.mxu0 0
  %1865 = vmatpush1.bf16.xpose.msra.mxu0 0
  %1866 = vmatprep.subr.bf16.mxu0 0
  %1867 = vmatpush1.bf16.xpose.msra.mxu0 0
  %1868 = vmatprep.subr.bf16.mxu0 0
  %1869 = vmatpush1.bf16.xpose.msra.mxu0 0
  %1870 = vmatprep.subr.bf16.mxu0 0
  %1871 = vmatpush1.bf16.xpose.msra.mxu0 0
  %1872 = vmatprep.subr.bf16.mxu0 0
  %1873 = vmatpush1.bf16.xpose.msra.mxu0 0
  %1874 = vmatprep.subr.bf16.mxu0 0
  %1875 = vmatpush1.bf16.xpose.msra.mxu0 0
  %1876 = vmatprep.mubr.bf16.mxu0 0
  %1877 = vmatmul.mubr.bf16.gmra.mrb[0].mxu0 %v1839
  %v1878 = vpop.f32.mrb[0].mxu0
  %v1879 = vadd.f32 %v1467, %v1878
  %v1880 = vpop.f32.mrb[0].mxu0
  %v1881 = vpop.f32.mrb[0].mxu0
  %v1882 = vadd.f32 %v1468, %v1881
  %v1883 = vpop.f32.mrb[0].mxu0
  %1884 = vdwg.mxu0
  %v1885 = vsel %vm889, %v1515, -inf
  %1886 = vmax.xlane.f32.xlu0 %v1885
  %v1887 = vpop.xlane.xlu0 %1886
  %v1888 = vsel %vm889, %v1518, -inf
  %1889 = vmax.xlane.f32.xlu0 %v1888
  %v1890 = vpop.xlane.xlu0 %1889
  %v1891 = vsel %vm889, %v1567, -inf
  %1892 = vmax.xlane.f32.xlu0 %v1891
  %v1893 = vpop.xlane.xlu0 %1892
  %v1894 = vsel %vm889, %v1570, -inf
  %1895 = vmax.xlane.f32.xlu0 %v1894
  %v1896 = vpop.xlane.xlu0 %1895
  %v1897 = vsel %vm889, %v1619, -inf
  %1898 = vmax.xlane.f32.xlu0 %v1897
  %v1899 = vpop.xlane.xlu0 %1898
  %v1900 = vsel %vm889, %v1622, -inf
  %1901 = vmax.xlane.f32.xlu0 %v1900
  %v1902 = vpop.xlane.xlu0 %1901
  %v1903 = vsel %vm889, %v1671, -inf
  %1904 = vmax.xlane.f32.xlu0 %v1903
  %v1905 = vpop.xlane.xlu0 %1904
  %v1906 = vsel %vm889, %v1674, -inf
  %1907 = vmax.xlane.f32.xlu0 %v1906
  %v1908 = vpop.xlane.xlu0 %1907
  %v1909 = vsel %vm889, %v1723, -inf
  %1910 = vmax.xlane.f32.xlu0 %v1909
  %v1911 = vpop.xlane.xlu0 %1910
  %v1912 = vsel %vm889, %v1726, -inf
  %1913 = vmax.xlane.f32.xlu0 %v1912
  %v1914 = vpop.xlane.xlu0 %1913
  %v1915 = vsel %vm889, %v1775, -inf
  %1916 = vmax.xlane.f32.xlu0 %v1915
  %v1917 = vpop.xlane.xlu0 %1916
  %v1918 = vsel %vm889, %v1778, -inf
  %1919 = vmax.xlane.f32.xlu0 %v1918
  %v1920 = vpop.xlane.xlu0 %1919
  %v1921 = vsel %vm889, %v1827, -inf
  %1922 = vmax.xlane.f32.xlu0 %v1921
  %v1923 = vpop.xlane.xlu0 %1922
  %v1924 = vsel %vm889, %v1830, -inf
  %1925 = vmax.xlane.f32.xlu0 %v1924
  %v1926 = vpop.xlane.xlu0 %1925
  %v1927 = vsel %vm889, %v1879, -inf
  %1928 = vmax.xlane.f32.xlu0 %v1927
  %v1929 = vpop.xlane.xlu0 %1928
  %v1930 = vsel %vm889, %v1882, -inf
  %1931 = vmax.xlane.f32.xlu0 %v1930
  %v1932 = vpop.xlane.xlu0 %1931
  %v1933 = vsub.f32 %v1515, %v1887
  %v1934 = vsub.f32 %v1518, %v1890
  %v1935 = vsub.f32 %v1567, %v1893
  %v1936 = vsub.f32 %v1570, %v1896
  %v1937 = vsub.f32 %v1619, %v1899
  %v1938 = vsub.f32 %v1622, %v1902
  %v1939 = vsub.f32 %v1671, %v1905
  %v1940 = vsub.f32 %v1674, %v1908
  %v1941 = vsub.f32 %v1723, %v1911
  %v1942 = vsub.f32 %v1726, %v1914
  %v1943 = vsub.f32 %v1775, %v1917
  %v1944 = vsub.f32 %v1778, %v1920
  %v1945 = vsub.f32 %v1827, %v1923
  %v1946 = vsub.f32 %v1830, %v1926
  %v1947 = vsub.f32 %v1879, %v1929
  %v1948 = vsub.f32 %v1882, %v1932
  %v1949 = vmul.f32 %v1933, 1.442695
  %v1950 = vpow.pop %v1949
  %v1951 = vmul.f32 %v1934, 1.442695
  %v1952 = vpow.pop %v1951
  %v1953 = vmul.f32 %v1935, 1.442695
  %v1954 = vpow.pop %v1953
  %v1955 = vmul.f32 %v1936, 1.442695
  %v1956 = vpow.pop %v1955
  %v1957 = vmul.f32 %v1937, 1.442695
  %v1958 = vpow.pop %v1957
  %v1959 = vmul.f32 %v1938, 1.442695
  %v1960 = vpow.pop %v1959
  %v1961 = vmul.f32 %v1939, 1.442695
  %v1962 = vpow.pop %v1961
  %v1963 = vmul.f32 %v1940, 1.442695
  %v1964 = vpow.pop %v1963
  %v1965 = vmul.f32 %v1941, 1.442695
  %v1966 = vpow.pop %v1965
  %v1967 = vmul.f32 %v1942, 1.442695
  %v1968 = vpow.pop %v1967
  %v1969 = vmul.f32 %v1943, 1.442695
  %v1970 = vpow.pop %v1969
  %v1971 = vmul.f32 %v1944, 1.442695
  %v1972 = vpow.pop %v1971
  %v1973 = vmul.f32 %v1945, 1.442695
  %v1974 = vpow.pop %v1973
  %v1975 = vmul.f32 %v1946, 1.442695
  %v1976 = vpow.pop %v1975
  %v1977 = vmul.f32 %v1947, 1.442695
  %v1978 = vpow.pop %v1977
  %v1979 = vmul.f32 %v1948, 1.442695
  %v1980 = vpow.pop %v1979
  %v1981 = vsel %vm889, %v1950, 0.0
  %1982 = vadd.xlane.f32.xlu0 %v1981
  %v1983 = vpop.xlane.xlu0 %1982
  %v1984 = vsel %vm889, %v1952, 0.0
  %1985 = vadd.xlane.f32.xlu0 %v1984
  %v1986 = vpop.xlane.xlu0 %1985
  %v1987 = vsel %vm889, %v1954, 0.0
  %1988 = vadd.xlane.f32.xlu0 %v1987
  %v1989 = vpop.xlane.xlu0 %1988
  %v1990 = vsel %vm889, %v1956, 0.0
  %1991 = vadd.xlane.f32.xlu0 %v1990
  %v1992 = vpop.xlane.xlu0 %1991
  %v1993 = vsel %vm889, %v1958, 0.0
  %1994 = vadd.xlane.f32.xlu0 %v1993
  %v1995 = vpop.xlane.xlu0 %1994
  %v1996 = vsel %vm889, %v1960, 0.0
  %1997 = vadd.xlane.f32.xlu0 %v1996
  %v1998 = vpop.xlane.xlu0 %1997
  %v1999 = vsel %vm889, %v1962, 0.0
  %2000 = vadd.xlane.f32.xlu0 %v1999
  %v2001 = vpop.xlane.xlu0 %2000
  %v2002 = vsel %vm889, %v1964, 0.0
  %2003 = vadd.xlane.f32.xlu0 %v2002
  %v2004 = vpop.xlane.xlu0 %2003
  %v2005 = vsel %vm889, %v1966, 0.0
  %2006 = vadd.xlane.f32.xlu0 %v2005
  %v2007 = vpop.xlane.xlu0 %2006
  %v2008 = vsel %vm889, %v1968, 0.0
  %2009 = vadd.xlane.f32.xlu0 %v2008
  %v2010 = vpop.xlane.xlu0 %2009
  %v2011 = vsel %vm889, %v1970, 0.0
  %2012 = vadd.xlane.f32.xlu0 %v2011
  %v2013 = vpop.xlane.xlu0 %2012
  %v2014 = vsel %vm889, %v1972, 0.0
  %2015 = vadd.xlane.f32.xlu0 %v2014
  %v2016 = vpop.xlane.xlu0 %2015
  %v2017 = vsel %vm889, %v1974, 0.0
  %2018 = vadd.xlane.f32.xlu0 %v2017
  %v2019 = vpop.xlane.xlu0 %2018
  %v2020 = vsel %vm889, %v1976, 0.0
  %2021 = vadd.xlane.f32.xlu0 %v2020
  %v2022 = vpop.xlane.xlu0 %2021
  %v2023 = vsel %vm889, %v1978, 0.0
  %2024 = vadd.xlane.f32.xlu0 %v2023
  %v2025 = vpop.xlane.xlu0 %2024
  %v2026 = vsel %vm889, %v1980, 0.0
  %2027 = vadd.xlane.f32.xlu0 %v2026
  %v2028 = vpop.xlane.xlu0 %2027
  %v2029 = vrcp.pop %v1983
  %v2030 = vrcp.pop %v1986
  %v2031 = vrcp.pop %v1989
  %v2032 = vrcp.pop %v1992
  %v2033 = vrcp.pop %v1995
  %v2034 = vrcp.pop %v1998
  %v2035 = vrcp.pop %v2001
  %v2036 = vrcp.pop %v2004
  %v2037 = vrcp.pop %v2007
  %v2038 = vrcp.pop %v2010
  %v2039 = vrcp.pop %v2013
  %v2040 = vrcp.pop %v2016
  %v2041 = vrcp.pop %v2019
  %v2042 = vrcp.pop %v2022
  %v2043 = vrcp.pop %v2025
  %v2044 = vrcp.pop %v2028
  %v2045 = vmul.f32 %v1950, %v2029
  %v2046 = vmul.f32 %v1952, %v2030
  %v2047 = vmul.f32 %v1954, %v2031
  %v2048 = vmul.f32 %v1956, %v2032
  %v2049 = vmul.f32 %v1958, %v2033
  %v2050 = vmul.f32 %v1960, %v2034
  %v2051 = vmul.f32 %v1962, %v2035
  %v2052 = vmul.f32 %v1964, %v2036
  %v2053 = vmul.f32 %v1966, %v2037
  %v2054 = vmul.f32 %v1968, %v2038
  %v2055 = vmul.f32 %v1970, %v2039
  %v2056 = vmul.f32 %v1972, %v2040
  %v2057 = vmul.f32 %v1974, %v2041
  %v2058 = vmul.f32 %v1976, %v2042
  %v2059 = vmul.f32 %v1978, %v2043
  %v2060 = vmul.f32 %v1980, %v2044
  %v2061 = vpack.c.bf16 %v2046, %v2045
  %v2062 = vpack.c.bf16 %v2048, %v2047
  %v2063 = vpack.c.bf16 %v2050, %v2049
  %v2064 = vpack.c.bf16 %v2052, %v2051
  %v2065 = vpack.c.bf16 %v2054, %v2053
  %v2066 = vpack.c.bf16 %v2056, %v2055
  %v2067 = vpack.c.bf16 %v2058, %v2057
  %v2068 = vpack.c.bf16 %v2060, %v2059
  %2069 = vrot.lane.b32.xlu0 %v478, 56
  %v2070 = vpop.permute.xlu0 %2069
  %v2073 = vsel %vm889, %v2061, 0
  %2075 = vmatprep.subr.bf16.mxu0 0
  %2076 = vmatpush1.bf16.msra.mxu0 %v2070
  %2077 = vmatprep.subr.bf16.mxu0 0
  %2078 = vmatpush1.bf16.msra.mxu0 0
  %2079 = vmatprep.subr.bf16.mxu0 0
  %2080 = vmatpush1.bf16.msra.mxu0 0
  %2081 = vmatprep.subr.bf16.mxu0 0
  %2082 = vmatpush1.bf16.msra.mxu0 0
  %2083 = vmatprep.subr.bf16.mxu0 0
  %2084 = vmatpush1.bf16.msra.mxu0 0
  %2085 = vmatprep.subr.bf16.mxu0 0
  %2086 = vmatpush1.bf16.msra.mxu0 0
  %2087 = vmatprep.subr.bf16.mxu0 0
  %2088 = vmatpush1.bf16.msra.mxu0 0
  %2089 = vmatprep.subr.bf16.mxu0 0
  %2090 = vmatpush1.bf16.msra.mxu0 0
  %2091 = vmatprep.subr.bf16.mxu0 0
  %2092 = vmatpush1.bf16.msra.mxu0 0
  %2093 = vmatprep.subr.bf16.mxu0 0
  %2094 = vmatpush1.bf16.msra.mxu0 0
  %2095 = vmatprep.subr.bf16.mxu0 0
  %2096 = vmatpush1.bf16.msra.mxu0 0
  %2097 = vmatprep.subr.bf16.mxu0 0
  %2098 = vmatpush1.bf16.msra.mxu0 0
  %2099 = vmatprep.subr.bf16.mxu0 0
  %2100 = vmatpush1.bf16.msra.mxu0 0
  %2101 = vmatprep.subr.bf16.mxu0 0
  %2102 = vmatpush1.bf16.msra.mxu0 0
  %2103 = vmatprep.subr.bf16.mxu0 0
  %2104 = vmatpush1.bf16.msra.mxu0 0
  %2105 = vmatprep.subr.bf16.mxu0 0
  %2106 = vmatpush1.bf16.msra.mxu0 0
  %2107 = vmatprep.mubr.bf16.mxu0 0
  %2108 = vmatmul.mubr.bf16.gmra.mrb[0].mxu0 %v2073
  %v2109 = vpop.f32.mrb[0].mxu0
  %v2110 = vadd.f32 0.0, %v2109
  %v2111 = vpop.f32.mrb[0].mxu0
  %v2112 = vpop.f32.mrb[0].mxu0
  %v2113 = vadd.f32 0.0, %v2112
  %v2114 = vpop.f32.mrb[0].mxu0
  %2115 = vdwg.mxu0
  %2116 = vrot.lane.b32.xlu0 %v479, 56
  %v2117 = vpop.permute.xlu0 %2116
  %v2120 = vsel %vm889, %v2062, 0
  %2122 = vmatprep.subr.bf16.mxu0 0
  %2123 = vmatpush1.bf16.msra.mxu0 %v2117
  %2124 = vmatprep.subr.bf16.mxu0 0
  %2125 = vmatpush1.bf16.msra.mxu0 0
  %2126 = vmatprep.subr.bf16.mxu0 0
  %2127 = vmatpush1.bf16.msra.mxu0 0
  %2128 = vmatprep.subr.bf16.mxu0 0
  %2129 = vmatpush1.bf16.msra.mxu0 0
  %2130 = vmatprep.subr.bf16.mxu0 0
  %2131 = vmatpush1.bf16.msra.mxu0 0
  %2132 = vmatprep.subr.bf16.mxu0 0
  %2133 = vmatpush1.bf16.msra.mxu0 0
  %2134 = vmatprep.subr.bf16.mxu0 0
  %2135 = vmatpush1.bf16.msra.mxu0 0
  %2136 = vmatprep.subr.bf16.mxu0 0
  %2137 = vmatpush1.bf16.msra.mxu0 0
  %2138 = vmatprep.subr.bf16.mxu0 0
  %2139 = vmatpush1.bf16.msra.mxu0 0
  %2140 = vmatprep.subr.bf16.mxu0 0
  %2141 = vmatpush1.bf16.msra.mxu0 0
  %2142 = vmatprep.subr.bf16.mxu0 0
  %2143 = vmatpush1.bf16.msra.mxu0 0
  %2144 = vmatprep.subr.bf16.mxu0 0
  %2145 = vmatpush1.bf16.msra.mxu0 0
  %2146 = vmatprep.subr.bf16.mxu0 0
  %2147 = vmatpush1.bf16.msra.mxu0 0
  %2148 = vmatprep.subr.bf16.mxu0 0
  %2149 = vmatpush1.bf16.msra.mxu0 0
  %2150 = vmatprep.subr.bf16.mxu0 0
  %2151 = vmatpush1.bf16.msra.mxu0 0
  %2152 = vmatprep.subr.bf16.mxu0 0
  %2153 = vmatpush1.bf16.msra.mxu0 0
  %2154 = vmatprep.mubr.bf16.mxu0 0
  %2155 = vmatmul.mubr.bf16.gmra.mrb[0].mxu0 %v2120
  %v2156 = vpop.f32.mrb[0].mxu0
  %v2157 = vadd.f32 0.0, %v2156
  %v2158 = vpop.f32.mrb[0].mxu0
  %v2159 = vpop.f32.mrb[0].mxu0
  %v2160 = vadd.f32 0.0, %v2159
  %v2161 = vpop.f32.mrb[0].mxu0
  %2162 = vdwg.mxu0
  %2163 = vrot.lane.b32.xlu0 %v480, 56
  %v2164 = vpop.permute.xlu0 %2163
  %v2167 = vsel %vm889, %v2063, 0
  %2169 = vmatprep.subr.bf16.mxu0 0
  %2170 = vmatpush1.bf16.msra.mxu0 %v2164
  %2171 = vmatprep.subr.bf16.mxu0 0
  %2172 = vmatpush1.bf16.msra.mxu0 0
  %2173 = vmatprep.subr.bf16.mxu0 0
  %2174 = vmatpush1.bf16.msra.mxu0 0
  %2175 = vmatprep.subr.bf16.mxu0 0
  %2176 = vmatpush1.bf16.msra.mxu0 0
  %2177 = vmatprep.subr.bf16.mxu0 0
  %2178 = vmatpush1.bf16.msra.mxu0 0
  %2179 = vmatprep.subr.bf16.mxu0 0
  %2180 = vmatpush1.bf16.msra.mxu0 0
  %2181 = vmatprep.subr.bf16.mxu0 0
  %2182 = vmatpush1.bf16.msra.mxu0 0
  %2183 = vmatprep.subr.bf16.mxu0 0
  %2184 = vmatpush1.bf16.msra.mxu0 0
  %2185 = vmatprep.subr.bf16.mxu0 0
  %2186 = vmatpush1.bf16.msra.mxu0 0
  %2187 = vmatprep.subr.bf16.mxu0 0
  %2188 = vmatpush1.bf16.msra.mxu0 0
  %2189 = vmatprep.subr.bf16.mxu0 0
  %2190 = vmatpush1.bf16.msra.mxu0 0
  %2191 = vmatprep.subr.bf16.mxu0 0
  %2192 = vmatpush1.bf16.msra.mxu0 0
  %2193 = vmatprep.subr.bf16.mxu0 0
  %2194 = vmatpush1.bf16.msra.mxu0 0
  %2195 = vmatprep.subr.bf16.mxu0 0
  %2196 = vmatpush1.bf16.msra.mxu0 0
  %2197 = vmatprep.subr.bf16.mxu0 0
  %2198 = vmatpush1.bf16.msra.mxu0 0
  %2199 = vmatprep.subr.bf16.mxu0 0
  %2200 = vmatpush1.bf16.msra.mxu0 0
  %2201 = vmatprep.mubr.bf16.mxu0 0
  %2202 = vmatmul.mubr.bf16.gmra.mrb[0].mxu0 %v2167
  %v2203 = vpop.f32.mrb[0].mxu0
  %v2204 = vadd.f32 0.0, %v2203
  %v2205 = vpop.f32.mrb[0].mxu0
  %v2206 = vpop.f32.mrb[0].mxu0
  %v2207 = vadd.f32 0.0, %v2206
  %v2208 = vpop.f32.mrb[0].mxu0
  %2209 = vdwg.mxu0
  %2210 = vrot.lane.b32.xlu0 %v481, 56
  %v2211 = vpop.permute.xlu0 %2210
  %v2214 = vsel %vm889, %v2064, 0
  %2216 = vmatprep.subr.bf16.mxu0 0
  %2217 = vmatpush1.bf16.msra.mxu0 %v2211
  %2218 = vmatprep.subr.bf16.mxu0 0
  %2219 = vmatpush1.bf16.msra.mxu0 0
  %2220 = vmatprep.subr.bf16.mxu0 0
  %2221 = vmatpush1.bf16.msra.mxu0 0
  %2222 = vmatprep.subr.bf16.mxu0 0
  %2223 = vmatpush1.bf16.msra.mxu0 0
  %2224 = vmatprep.subr.bf16.mxu0 0
  %2225 = vmatpush1.bf16.msra.mxu0 0
  %2226 = vmatprep.subr.bf16.mxu0 0
  %2227 = vmatpush1.bf16.msra.mxu0 0
  %2228 = vmatprep.subr.bf16.mxu0 0
  %2229 = vmatpush1.bf16.msra.mxu0 0
  %2230 = vmatprep.subr.bf16.mxu0 0
  %2231 = vmatpush1.bf16.msra.mxu0 0
  %2232 = vmatprep.subr.bf16.mxu0 0
  %2233 = vmatpush1.bf16.msra.mxu0 0
  %2234 = vmatprep.subr.bf16.mxu0 0
  %2235 = vmatpush1.bf16.msra.mxu0 0
  %2236 = vmatprep.subr.bf16.mxu0 0
  %2237 = vmatpush1.bf16.msra.mxu0 0
  %2238 = vmatprep.subr.bf16.mxu0 0
  %2239 = vmatpush1.bf16.msra.mxu0 0
  %2240 = vmatprep.subr.bf16.mxu0 0
  %2241 = vmatpush1.bf16.msra.mxu0 0
  %2242 = vmatprep.subr.bf16.mxu0 0
  %2243 = vmatpush1.bf16.msra.mxu0 0
  %2244 = vmatprep.subr.bf16.mxu0 0
  %2245 = vmatpush1.bf16.msra.mxu0 0
  %2246 = vmatprep.subr.bf16.mxu0 0
  %2247 = vmatpush1.bf16.msra.mxu0 0
  %2248 = vmatprep.mubr.bf16.mxu0 0
  %2249 = vmatmul.mubr.bf16.gmra.mrb[0].mxu0 %v2214
  %v2250 = vpop.f32.mrb[0].mxu0
  %v2251 = vadd.f32 0.0, %v2250
  %v2252 = vpop.f32.mrb[0].mxu0
  %v2253 = vpop.f32.mrb[0].mxu0
  %v2254 = vadd.f32 0.0, %v2253
  %v2255 = vpop.f32.mrb[0].mxu0
  %2256 = vdwg.mxu0
  %2257 = vrot.lane.b32.xlu0 %v482, 56
  %v2258 = vpop.permute.xlu0 %2257
  %v2261 = vsel %vm889, %v2065, 0
  %2263 = vmatprep.subr.bf16.mxu0 0
  %2264 = vmatpush1.bf16.msra.mxu0 %v2258
  %2265 = vmatprep.subr.bf16.mxu0 0
  %2266 = vmatpush1.bf16.msra.mxu0 0
  %2267 = vmatprep.subr.bf16.mxu0 0
  %2268 = vmatpush1.bf16.msra.mxu0 0
  %2269 = vmatprep.subr.bf16.mxu0 0
  %2270 = vmatpush1.bf16.msra.mxu0 0
  %2271 = vmatprep.subr.bf16.mxu0 0
  %2272 = vmatpush1.bf16.msra.mxu0 0
  %2273 = vmatprep.subr.bf16.mxu0 0
  %2274 = vmatpush1.bf16.msra.mxu0 0
  %2275 = vmatprep.subr.bf16.mxu0 0
  %2276 = vmatpush1.bf16.msra.mxu0 0
  %2277 = vmatprep.subr.bf16.mxu0 0
  %2278 = vmatpush1.bf16.msra.mxu0 0
  %2279 = vmatprep.subr.bf16.mxu0 0
  %2280 = vmatpush1.bf16.msra.mxu0 0
  %2281 = vmatprep.subr.bf16.mxu0 0
  %2282 = vmatpush1.bf16.msra.mxu0 0
  %2283 = vmatprep.subr.bf16.mxu0 0
  %2284 = vmatpush1.bf16.msra.mxu0 0
  %2285 = vmatprep.subr.bf16.mxu0 0
  %2286 = vmatpush1.bf16.msra.mxu0 0
  %2287 = vmatprep.subr.bf16.mxu0 0
  %2288 = vmatpush1.bf16.msra.mxu0 0
  %2289 = vmatprep.subr.bf16.mxu0 0
  %2290 = vmatpush1.bf16.msra.mxu0 0
  %2291 = vmatprep.subr.bf16.mxu0 0
  %2292 = vmatpush1.bf16.msra.mxu0 0
  %2293 = vmatprep.subr.bf16.mxu0 0
  %2294 = vmatpush1.bf16.msra.mxu0 0
  %2295 = vmatprep.mubr.bf16.mxu0 0
  %2296 = vmatmul.mubr.bf16.gmra.mrb[0].mxu0 %v2261
  %v2297 = vpop.f32.mrb[0].mxu0
  %v2298 = vadd.f32 0.0, %v2297
  %v2299 = vpop.f32.mrb[0].mxu0
  %v2300 = vpop.f32.mrb[0].mxu0
  %v2301 = vadd.f32 0.0, %v2300
  %v2302 = vpop.f32.mrb[0].mxu0
  %2303 = vdwg.mxu0
  %2304 = vrot.lane.b32.xlu0 %v483, 56
  %v2305 = vpop.permute.xlu0 %2304
  %v2308 = vsel %vm889, %v2066, 0
  %2310 = vmatprep.subr.bf16.mxu0 0
  %2311 = vmatpush1.bf16.msra.mxu0 %v2305
  %2312 = vmatprep.subr.bf16.mxu0 0
  %2313 = vmatpush1.bf16.msra.mxu0 0
  %2314 = vmatprep.subr.bf16.mxu0 0
  %2315 = vmatpush1.bf16.msra.mxu0 0
  %2316 = vmatprep.subr.bf16.mxu0 0
  %2317 = vmatpush1.bf16.msra.mxu0 0
  %2318 = vmatprep.subr.bf16.mxu0 0
  %2319 = vmatpush1.bf16.msra.mxu0 0
  %2320 = vmatprep.subr.bf16.mxu0 0
  %2321 = vmatpush1.bf16.msra.mxu0 0
  %2322 = vmatprep.subr.bf16.mxu0 0
  %2323 = vmatpush1.bf16.msra.mxu0 0
  %2324 = vmatprep.subr.bf16.mxu0 0
  %2325 = vmatpush1.bf16.msra.mxu0 0
  %2326 = vmatprep.subr.bf16.mxu0 0
  %2327 = vmatpush1.bf16.msra.mxu0 0
  %2328 = vmatprep.subr.bf16.mxu0 0
  %2329 = vmatpush1.bf16.msra.mxu0 0
  %2330 = vmatprep.subr.bf16.mxu0 0
  %2331 = vmatpush1.bf16.msra.mxu0 0
  %2332 = vmatprep.subr.bf16.mxu0 0
  %2333 = vmatpush1.bf16.msra.mxu0 0
  %2334 = vmatprep.subr.bf16.mxu0 0
  %2335 = vmatpush1.bf16.msra.mxu0 0
  %2336 = vmatprep.subr.bf16.mxu0 0
  %2337 = vmatpush1.bf16.msra.mxu0 0
  %2338 = vmatprep.subr.bf16.mxu0 0
  %2339 = vmatpush1.bf16.msra.mxu0 0
  %2340 = vmatprep.subr.bf16.mxu0 0
  %2341 = vmatpush1.bf16.msra.mxu0 0
  %2342 = vmatprep.mubr.bf16.mxu0 0
  %2343 = vmatmul.mubr.bf16.gmra.mrb[0].mxu0 %v2308
  %v2344 = vpop.f32.mrb[0].mxu0
  %v2345 = vadd.f32 0.0, %v2344
  %v2346 = vpop.f32.mrb[0].mxu0
  %v2347 = vpop.f32.mrb[0].mxu0
  %v2348 = vadd.f32 0.0, %v2347
  %v2349 = vpop.f32.mrb[0].mxu0
  %2350 = vdwg.mxu0
  %2351 = vrot.lane.b32.xlu0 %v484, 56
  %v2352 = vpop.permute.xlu0 %2351
  %v2355 = vsel %vm889, %v2067, 0
  %2357 = vmatprep.subr.bf16.mxu0 0
  %2358 = vmatpush1.bf16.msra.mxu0 %v2352
  %2359 = vmatprep.subr.bf16.mxu0 0
  %2360 = vmatpush1.bf16.msra.mxu0 0
  %2361 = vmatprep.subr.bf16.mxu0 0
  %2362 = vmatpush1.bf16.msra.mxu0 0
  %2363 = vmatprep.subr.bf16.mxu0 0
  %2364 = vmatpush1.bf16.msra.mxu0 0
  %2365 = vmatprep.subr.bf16.mxu0 0
  %2366 = vmatpush1.bf16.msra.mxu0 0
  %2367 = vmatprep.subr.bf16.mxu0 0
  %2368 = vmatpush1.bf16.msra.mxu0 0
  %2369 = vmatprep.subr.bf16.mxu0 0
  %2370 = vmatpush1.bf16.msra.mxu0 0
  %2371 = vmatprep.subr.bf16.mxu0 0
  %2372 = vmatpush1.bf16.msra.mxu0 0
  %2373 = vmatprep.subr.bf16.mxu0 0
  %2374 = vmatpush1.bf16.msra.mxu0 0
  %2375 = vmatprep.subr.bf16.mxu0 0
  %2376 = vmatpush1.bf16.msra.mxu0 0
  %2377 = vmatprep.subr.bf16.mxu0 0
  %2378 = vmatpush1.bf16.msra.mxu0 0
  %2379 = vmatprep.subr.bf16.mxu0 0
  %2380 = vmatpush1.bf16.msra.mxu0 0
  %2381 = vmatprep.subr.bf16.mxu0 0
  %2382 = vmatpush1.bf16.msra.mxu0 0
  %2383 = vmatprep.subr.bf16.mxu0 0
  %2384 = vmatpush1.bf16.msra.mxu0 0
  %2385 = vmatprep.subr.bf16.mxu0 0
  %2386 = vmatpush1.bf16.msra.mxu0 0
  %2387 = vmatprep.subr.bf16.mxu0 0
  %2388 = vmatpush1.bf16.msra.mxu0 0
  %2389 = vmatprep.mubr.bf16.mxu0 0
  %2390 = vmatmul.mubr.bf16.gmra.mrb[0].mxu0 %v2355
  %v2391 = vpop.f32.mrb[0].mxu0
  %v2392 = vadd.f32 0.0, %v2391
  %v2393 = vpop.f32.mrb[0].mxu0
  %v2394 = vpop.f32.mrb[0].mxu0
  %v2395 = vadd.f32 0.0, %v2394
  %v2396 = vpop.f32.mrb[0].mxu0
  %2397 = vdwg.mxu0
  %2398 = vrot.lane.b32.xlu0 %v485, 56
  %v2399 = vpop.permute.xlu0 %2398
  %v2402 = vsel %vm889, %v2068, 0
  %2404 = vmatprep.subr.bf16.mxu0 0
  %2405 = vmatpush1.bf16.msra.mxu0 %v2399
  %2406 = vmatprep.subr.bf16.mxu0 0
  %2407 = vmatpush1.bf16.msra.mxu0 0
  %2408 = vmatprep.subr.bf16.mxu0 0
  %2409 = vmatpush1.bf16.msra.mxu0 0
  %2410 = vmatprep.subr.bf16.mxu0 0
  %2411 = vmatpush1.bf16.msra.mxu0 0
  %2412 = vmatprep.subr.bf16.mxu0 0
  %2413 = vmatpush1.bf16.msra.mxu0 0
  %2414 = vmatprep.subr.bf16.mxu0 0
  %2415 = vmatpush1.bf16.msra.mxu0 0
  %2416 = vmatprep.subr.bf16.mxu0 0
  %2417 = vmatpush1.bf16.msra.mxu0 0
  %2418 = vmatprep.subr.bf16.mxu0 0
  %2419 = vmatpush1.bf16.msra.mxu0 0
  %2420 = vmatprep.subr.bf16.mxu0 0
  %2421 = vmatpush1.bf16.msra.mxu0 0
  %2422 = vmatprep.subr.bf16.mxu0 0
  %2423 = vmatpush1.bf16.msra.mxu0 0
  %2424 = vmatprep.subr.bf16.mxu0 0
  %2425 = vmatpush1.bf16.msra.mxu0 0
  %2426 = vmatprep.subr.bf16.mxu0 0
  %2427 = vmatpush1.bf16.msra.mxu0 0
  %2428 = vmatprep.subr.bf16.mxu0 0
  %2429 = vmatpush1.bf16.msra.mxu0 0
  %2430 = vmatprep.subr.bf16.mxu0 0
  %2431 = vmatpush1.bf16.msra.mxu0 0
  %2432 = vmatprep.subr.bf16.mxu0 0
  %2433 = vmatpush1.bf16.msra.mxu0 0
  %2434 = vmatprep.subr.bf16.mxu0 0
  %2435 = vmatpush1.bf16.msra.mxu0 0
  %2436 = vmatprep.mubr.bf16.mxu0 0
  %2437 = vmatmul.mubr.bf16.gmra.mrb[0].mxu0 %v2402
  %v2438 = vpop.f32.mrb[0].mxu0
  %v2439 = vadd.f32 0.0, %v2438
  %v2440 = vpop.f32.mrb[0].mxu0
  %v2441 = vpop.f32.mrb[0].mxu0
  %v2442 = vadd.f32 0.0, %v2441
  %v2443 = vpop.f32.mrb[0].mxu0
  %2444 = vdwg.mxu0
  %2461 = vrot.lane.b32.xlu0 %v2110, 8
  %v2462 = vpop.permute.xlu0 %2461
  %2463 = vrot.lane.b32.xlu0 %v2113, 8
  %v2464 = vpop.permute.xlu0 %2463
  %2465 = vrot.lane.b32.xlu0 %v2157, 8
  %v2466 = vpop.permute.xlu0 %2465
  %2467 = vrot.lane.b32.xlu0 %v2160, 8
  %v2468 = vpop.permute.xlu0 %2467
  %2469 = vrot.lane.b32.xlu0 %v2204, 8
  %v2470 = vpop.permute.xlu0 %2469
  %2471 = vrot.lane.b32.xlu0 %v2207, 8
  %v2472 = vpop.permute.xlu0 %2471
  %2473 = vrot.lane.b32.xlu0 %v2251, 8
  %v2474 = vpop.permute.xlu0 %2473
  %2475 = vrot.lane.b32.xlu0 %v2254, 8
  %v2476 = vpop.permute.xlu0 %2475
  %2477 = vrot.lane.b32.xlu0 %v2298, 8
  %v2478 = vpop.permute.xlu0 %2477
  %2479 = vrot.lane.b32.xlu0 %v2301, 8
  %v2480 = vpop.permute.xlu0 %2479
  %2481 = vrot.lane.b32.xlu0 %v2345, 8
  %v2482 = vpop.permute.xlu0 %2481
  %2483 = vrot.lane.b32.xlu0 %v2348, 8
  %v2484 = vpop.permute.xlu0 %2483
  %2485 = vrot.lane.b32.xlu0 %v2392, 8
  %v2486 = vpop.permute.xlu0 %2485
  %2487 = vrot.lane.b32.xlu0 %v2395, 8
  %v2488 = vpop.permute.xlu0 %2487
  %2489 = vrot.lane.b32.xlu0 %v2439, 8
  %v2490 = vpop.permute.xlu0 %2489
  %2491 = vrot.lane.b32.xlu0 %v2442, 8
  %v2492 = vpop.permute.xlu0 %2491
  %vm2509 = vcmask 130112
  %2510 = vst.msk [vmem:[#allocation2] sm:$0xff] %vm2509, %v2462
  %2511 = vst.msk [vmem:[#allocation2 + $0x8] sm:$0xff] %vm2509, %v2464
  %2512 = vst.msk [vmem:[#allocation2 + $0x10] sm:$0xff] %vm2509, %v2466
  %2513 = vst.msk [vmem:[#allocation2 + $0x18] sm:$0xff] %vm2509, %v2468
  %2514 = vst.msk [vmem:[#allocation2 + $0x20] sm:$0xff] %vm2509, %v2470
  %2515 = vst.msk [vmem:[#allocation2 + $0x28] sm:$0xff] %vm2509, %v2472
  %2516 = vst.msk [vmem:[#allocation2 + $0x30] sm:$0xff] %vm2509, %v2474
  %2517 = vst.msk [vmem:[#allocation2 + $0x38] sm:$0xff] %vm2509, %v2476
  %2518 = vst.msk [vmem:[#allocation2 + $0x40] sm:$0xff] %vm2509, %v2478
  %2519 = vst.msk [vmem:[#allocation2 + $0x48] sm:$0xff] %vm2509, %v2480
  %2520 = vst.msk [vmem:[#allocation2 + $0x50] sm:$0xff] %vm2509, %v2482
  %2521 = vst.msk [vmem:[#allocation2 + $0x58] sm:$0xff] %vm2509, %v2484
  %2522 = vst.msk [vmem:[#allocation2 + $0x60] sm:$0xff] %vm2509, %v2486
  %2523 = vst.msk [vmem:[#allocation2 + $0x68] sm:$0xff] %vm2509, %v2488
  %2524 = vst.msk [vmem:[#allocation2 + $0x70] sm:$0xff] %vm2509, %v2490
  %2525 = vst.msk [vmem:[#allocation2 + $0x78] sm:$0xff] %vm2509, %v2492
  %s2526 = scalar_lea.vmem %s1, 32
  %v2527 = vld [vmem:[%s2526] sm:$0xff]
  %v2528 = vld [vmem:[%s2526 + $0x8] sm:$0xff]
  %2529 = vrot.lane.b32.xlu0 %v470, 112
  %v2530 = vpop.permute.xlu0 %2529
  %2531 = vrot.lane.b32.xlu0 %v478, 80
  %v2532 = vpop.permute.xlu0 %2531
  %v2534 = vsel %vm491, %v2530, 0
  %v2537 = vsel %vm491, %v2532, 0
  %2539 = vmatprep.subr.bf16.mxu0 0
  %2540 = vmatpush1.bf16.xpose.msra.mxu0 %v2537
  %2541 = vmatprep.subr.bf16.mxu0 0
  %2542 = vmatpush1.bf16.xpose.msra.mxu0 0
  %2543 = vmatprep.subr.bf16.mxu0 0
  %2544 = vmatpush1.bf16.xpose.msra.mxu0 0
  %2545 = vmatprep.subr.bf16.mxu0 0
  %2546 = vmatpush1.bf16.xpose.msra.mxu0 0
  %2547 = vmatprep.subr.bf16.mxu0 0
  %2548 = vmatpush1.bf16.xpose.msra.mxu0 0
  %2549 = vmatprep.subr.bf16.mxu0 0
  %2550 = vmatpush1.bf16.xpose.msra.mxu0 0
  %2551 = vmatprep.subr.bf16.mxu0 0
  %2552 = vmatpush1.bf16.xpose.msra.mxu0 0
  %2553 = vmatprep.subr.bf16.mxu0 0
  %2554 = vmatpush1.bf16.xpose.msra.mxu0 0
  %2555 = vmatprep.subr.bf16.mxu0 0
  %2556 = vmatpush1.bf16.xpose.msra.mxu0 0
  %2557 = vmatprep.subr.bf16.mxu0 0
  %2558 = vmatpush1.bf16.xpose.msra.mxu0 0
  %2559 = vmatprep.subr.bf16.mxu0 0
  %2560 = vmatpush1.bf16.xpose.msra.mxu0 0
  %2561 = vmatprep.subr.bf16.mxu0 0
  %2562 = vmatpush1.bf16.xpose.msra.mxu0 0
  %2563 = vmatprep.subr.bf16.mxu0 0
  %2564 = vmatpush1.bf16.xpose.msra.mxu0 0
  %2565 = vmatprep.subr.bf16.mxu0 0
  %2566 = vmatpush1.bf16.xpose.msra.mxu0 0
  %2567 = vmatprep.subr.bf16.mxu0 0
  %2568 = vmatpush1.bf16.xpose.msra.mxu0 0
  %2569 = vmatprep.subr.bf16.mxu0 0
  %2570 = vmatpush1.bf16.xpose.msra.mxu0 0
  %2571 = vmatprep.mubr.bf16.mxu0 0
  %2572 = vmatmul.mubr.bf16.gmra.mrb[0].mxu0 %v2534
  %v2573 = vpop.f32.mrb[0].mxu0
  %v2574 = vadd.f32 %v2527, %v2573
  %v2575 = vpop.f32.mrb[0].mxu0
  %v2576 = vpop.f32.mrb[0].mxu0
  %v2577 = vadd.f32 %v2528, %v2576
  %v2578 = vpop.f32.mrb[0].mxu0
  %2579 = vdwg.mxu0
  %2580 = vrot.lane.b32.xlu0 %v471, 112
  %v2581 = vpop.permute.xlu0 %2580
  %2582 = vrot.lane.b32.xlu0 %v479, 80
  %v2583 = vpop.permute.xlu0 %2582
  %v2585 = vsel %vm491, %v2581, 0
  %v2588 = vsel %vm491, %v2583, 0
  %2590 = vmatprep.subr.bf16.mxu0 0
  %2591 = vmatpush1.bf16.xpose.msra.mxu0 %v2588
  %2592 = vmatprep.subr.bf16.mxu0 0
  %2593 = vmatpush1.bf16.xpose.msra.mxu0 0
  %2594 = vmatprep.subr.bf16.mxu0 0
  %2595 = vmatpush1.bf16.xpose.msra.mxu0 0
  %2596 = vmatprep.subr.bf16.mxu0 0
  %2597 = vmatpush1.bf16.xpose.msra.mxu0 0
  %2598 = vmatprep.subr.bf16.mxu0 0
  %2599 = vmatpush1.bf16.xpose.msra.mxu0 0
  %2600 = vmatprep.subr.bf16.mxu0 0
  %2601 = vmatpush1.bf16.xpose.msra.mxu0 0
  %2602 = vmatprep.subr.bf16.mxu0 0
  %2603 = vmatpush1.bf16.xpose.msra.mxu0 0
  %2604 = vmatprep.subr.bf16.mxu0 0
  %2605 = vmatpush1.bf16.xpose.msra.mxu0 0
  %2606 = vmatprep.subr.bf16.mxu0 0
  %2607 = vmatpush1.bf16.xpose.msra.mxu0 0
  %2608 = vmatprep.subr.bf16.mxu0 0
  %2609 = vmatpush1.bf16.xpose.msra.mxu0 0
  %2610 = vmatprep.subr.bf16.mxu0 0
  %2611 = vmatpush1.bf16.xpose.msra.mxu0 0
  %2612 = vmatprep.subr.bf16.mxu0 0
  %2613 = vmatpush1.bf16.xpose.msra.mxu0 0
  %2614 = vmatprep.subr.bf16.mxu0 0
  %2615 = vmatpush1.bf16.xpose.msra.mxu0 0
  %2616 = vmatprep.subr.bf16.mxu0 0
  %2617 = vmatpush1.bf16.xpose.msra.mxu0 0
  %2618 = vmatprep.subr.bf16.mxu0 0
  %2619 = vmatpush1.bf16.xpose.msra.mxu0 0
  %2620 = vmatprep.subr.bf16.mxu0 0
  %2621 = vmatpush1.bf16.xpose.msra.mxu0 0
  %2622 = vmatprep.mubr.bf16.mxu0 0
  %2623 = vmatmul.mubr.bf16.gmra.mrb[0].mxu0 %v2585
  %v2624 = vpop.f32.mrb[0].mxu0
  %v2625 = vadd.f32 %v2527, %v2624
  %v2626 = vpop.f32.mrb[0].mxu0
  %v2627 = vpop.f32.mrb[0].mxu0
  %v2628 = vadd.f32 %v2528, %v2627
  %v2629 = vpop.f32.mrb[0].mxu0
  %2630 = vdwg.mxu0
  %2631 = vrot.lane.b32.xlu0 %v472, 112
  %v2632 = vpop.permute.xlu0 %2631
  %2633 = vrot.lane.b32.xlu0 %v480, 80
  %v2634 = vpop.permute.xlu0 %2633
  %v2636 = vsel %vm491, %v2632, 0
  %v2639 = vsel %vm491, %v2634, 0
  %2641 = vmatprep.subr.bf16.mxu0 0
  %2642 = vmatpush1.bf16.xpose.msra.mxu0 %v2639
  %2643 = vmatprep.subr.bf16.mxu0 0
  %2644 = vmatpush1.bf16.xpose.msra.mxu0 0
  %2645 = vmatprep.subr.bf16.mxu0 0
  %2646 = vmatpush1.bf16.xpose.msra.mxu0 0
  %2647 = vmatprep.subr.bf16.mxu0 0
  %2648 = vmatpush1.bf16.xpose.msra.mxu0 0
  %2649 = vmatprep.subr.bf16.mxu0 0
  %2650 = vmatpush1.bf16.xpose.msra.mxu0 0
  %2651 = vmatprep.subr.bf16.mxu0 0
  %2652 = vmatpush1.bf16.xpose.msra.mxu0 0
  %2653 = vmatprep.subr.bf16.mxu0 0
  %2654 = vmatpush1.bf16.xpose.msra.mxu0 0
  %2655 = vmatprep.subr.bf16.mxu0 0
  %2656 = vmatpush1.bf16.xpose.msra.mxu0 0
  %2657 = vmatprep.subr.bf16.mxu0 0
  %2658 = vmatpush1.bf16.xpose.msra.mxu0 0
  %2659 = vmatprep.subr.bf16.mxu0 0
  %2660 = vmatpush1.bf16.xpose.msra.mxu0 0
  %2661 = vmatprep.subr.bf16.mxu0 0
  %2662 = vmatpush1.bf16.xpose.msra.mxu0 0
  %2663 = vmatprep.subr.bf16.mxu0 0
  %2664 = vmatpush1.bf16.xpose.msra.mxu0 0
  %2665 = vmatprep.subr.bf16.mxu0 0
  %2666 = vmatpush1.bf16.xpose.msra.mxu0 0
  %2667 = vmatprep.subr.bf16.mxu0 0
  %2668 = vmatpush1.bf16.xpose.msra.mxu0 0
  %2669 = vmatprep.subr.bf16.mxu0 0
  %2670 = vmatpush1.bf16.xpose.msra.mxu0 0
  %2671 = vmatprep.subr.bf16.mxu0 0
  %2672 = vmatpush1.bf16.xpose.msra.mxu0 0
  %2673 = vmatprep.mubr.bf16.mxu0 0
  %2674 = vmatmul.mubr.bf16.gmra.mrb[0].mxu0 %v2636
  %v2675 = vpop.f32.mrb[0].mxu0
  %v2676 = vadd.f32 %v2527, %v2675
  %v2677 = vpop.f32.mrb[0].mxu0
  %v2678 = vpop.f32.mrb[0].mxu0
  %v2679 = vadd.f32 %v2528, %v2678
  %v2680 = vpop.f32.mrb[0].mxu0
  %2681 = vdwg.mxu0
  %2682 = vrot.lane.b32.xlu0 %v473, 112
  %v2683 = vpop.permute.xlu0 %2682
  %2684 = vrot.lane.b32.xlu0 %v481, 80
  %v2685 = vpop.permute.xlu0 %2684
  %v2687 = vsel %vm491, %v2683, 0
  %v2690 = vsel %vm491, %v2685, 0
  %2692 = vmatprep.subr.bf16.mxu0 0
  %2693 = vmatpush1.bf16.xpose.msra.mxu0 %v2690
  %2694 = vmatprep.subr.bf16.mxu0 0
  %2695 = vmatpush1.bf16.xpose.msra.mxu0 0
  %2696 = vmatprep.subr.bf16.mxu0 0
  %2697 = vmatpush1.bf16.xpose.msra.mxu0 0
  %2698 = vmatprep.subr.bf16.mxu0 0
  %2699 = vmatpush1.bf16.xpose.msra.mxu0 0
  %2700 = vmatprep.subr.bf16.mxu0 0
  %2701 = vmatpush1.bf16.xpose.msra.mxu0 0
  %2702 = vmatprep.subr.bf16.mxu0 0
  %2703 = vmatpush1.bf16.xpose.msra.mxu0 0
  %2704 = vmatprep.subr.bf16.mxu0 0
  %2705 = vmatpush1.bf16.xpose.msra.mxu0 0
  %2706 = vmatprep.subr.bf16.mxu0 0
  %2707 = vmatpush1.bf16.xpose.msra.mxu0 0
  %2708 = vmatprep.subr.bf16.mxu0 0
  %2709 = vmatpush1.bf16.xpose.msra.mxu0 0
  %2710 = vmatprep.subr.bf16.mxu0 0
  %2711 = vmatpush1.bf16.xpose.msra.mxu0 0
  %2712 = vmatprep.subr.bf16.mxu0 0
  %2713 = vmatpush1.bf16.xpose.msra.mxu0 0
  %2714 = vmatprep.subr.bf16.mxu0 0
  %2715 = vmatpush1.bf16.xpose.msra.mxu0 0
  %2716 = vmatprep.subr.bf16.mxu0 0
  %2717 = vmatpush1.bf16.xpose.msra.mxu0 0
  %2718 = vmatprep.subr.bf16.mxu0 0
  %2719 = vmatpush1.bf16.xpose.msra.mxu0 0
  %2720 = vmatprep.subr.bf16.mxu0 0
  %2721 = vmatpush1.bf16.xpose.msra.mxu0 0
  %2722 = vmatprep.subr.bf16.mxu0 0
  %2723 = vmatpush1.bf16.xpose.msra.mxu0 0
  %2724 = vmatprep.mubr.bf16.mxu0 0
  %2725 = vmatmul.mubr.bf16.gmra.mrb[0].mxu0 %v2687
  %v2726 = vpop.f32.mrb[0].mxu0
  %v2727 = vadd.f32 %v2527, %v2726
  %v2728 = vpop.f32.mrb[0].mxu0
  %v2729 = vpop.f32.mrb[0].mxu0
  %v2730 = vadd.f32 %v2528, %v2729
  %v2731 = vpop.f32.mrb[0].mxu0
  %2732 = vdwg.mxu0
  %2733 = vrot.lane.b32.xlu0 %v474, 112
  %v2734 = vpop.permute.xlu0 %2733
  %2735 = vrot.lane.b32.xlu0 %v482, 80
  %v2736 = vpop.permute.xlu0 %2735
  %v2738 = vsel %vm491, %v2734, 0
  %v2741 = vsel %vm491, %v2736, 0
  %2743 = vmatprep.subr.bf16.mxu0 0
  %2744 = vmatpush1.bf16.xpose.msra.mxu0 %v2741
  %2745 = vmatprep.subr.bf16.mxu0 0
  %2746 = vmatpush1.bf16.xpose.msra.mxu0 0
  %2747 = vmatprep.subr.bf16.mxu0 0
  %2748 = vmatpush1.bf16.xpose.msra.mxu0 0
  %2749 = vmatprep.subr.bf16.mxu0 0
  %2750 = vmatpush1.bf16.xpose.msra.mxu0 0
  %2751 = vmatprep.subr.bf16.mxu0 0
  %2752 = vmatpush1.bf16.xpose.msra.mxu0 0
  %2753 = vmatprep.subr.bf16.mxu0 0
  %2754 = vmatpush1.bf16.xpose.msra.mxu0 0
  %2755 = vmatprep.subr.bf16.mxu0 0
  %2756 = vmatpush1.bf16.xpose.msra.mxu0 0
  %2757 = vmatprep.subr.bf16.mxu0 0
  %2758 = vmatpush1.bf16.xpose.msra.mxu0 0
  %2759 = vmatprep.subr.bf16.mxu0 0
  %2760 = vmatpush1.bf16.xpose.msra.mxu0 0
  %2761 = vmatprep.subr.bf16.mxu0 0
  %2762 = vmatpush1.bf16.xpose.msra.mxu0 0
  %2763 = vmatprep.subr.bf16.mxu0 0
  %2764 = vmatpush1.bf16.xpose.msra.mxu0 0
  %2765 = vmatprep.subr.bf16.mxu0 0
  %2766 = vmatpush1.bf16.xpose.msra.mxu0 0
  %2767 = vmatprep.subr.bf16.mxu0 0
  %2768 = vmatpush1.bf16.xpose.msra.mxu0 0
  %2769 = vmatprep.subr.bf16.mxu0 0
  %2770 = vmatpush1.bf16.xpose.msra.mxu0 0
  %2771 = vmatprep.subr.bf16.mxu0 0
  %2772 = vmatpush1.bf16.xpose.msra.mxu0 0
  %2773 = vmatprep.subr.bf16.mxu0 0
  %2774 = vmatpush1.bf16.xpose.msra.mxu0 0
  %2775 = vmatprep.mubr.bf16.mxu0 0
  %2776 = vmatmul.mubr.bf16.gmra.mrb[0].mxu0 %v2738
  %v2777 = vpop.f32.mrb[0].mxu0
  %v2778 = vadd.f32 %v2527, %v2777
  %v2779 = vpop.f32.mrb[0].mxu0
  %v2780 = vpop.f32.mrb[0].mxu0
  %v2781 = vadd.f32 %v2528, %v2780
  %v2782 = vpop.f32.mrb[0].mxu0
  %2783 = vdwg.mxu0
  %2784 = vrot.lane.b32.xlu0 %v475, 112
  %v2785 = vpop.permute.xlu0 %2784
  %2786 = vrot.lane.b32.xlu0 %v483, 80
  %v2787 = vpop.permute.xlu0 %2786
  %v2789 = vsel %vm491, %v2785, 0
  %v2792 = vsel %vm491, %v2787, 0
  %2794 = vmatprep.subr.bf16.mxu0 0
  %2795 = vmatpush1.bf16.xpose.msra.mxu0 %v2792
  %2796 = vmatprep.subr.bf16.mxu0 0
  %2797 = vmatpush1.bf16.xpose.msra.mxu0 0
  %2798 = vmatprep.subr.bf16.mxu0 0
  %2799 = vmatpush1.bf16.xpose.msra.mxu0 0
  %2800 = vmatprep.subr.bf16.mxu0 0
  %2801 = vmatpush1.bf16.xpose.msra.mxu0 0
  %2802 = vmatprep.subr.bf16.mxu0 0
  %2803 = vmatpush1.bf16.xpose.msra.mxu0 0
  %2804 = vmatprep.subr.bf16.mxu0 0
  %2805 = vmatpush1.bf16.xpose.msra.mxu0 0
  %2806 = vmatprep.subr.bf16.mxu0 0
  %2807 = vmatpush1.bf16.xpose.msra.mxu0 0
  %2808 = vmatprep.subr.bf16.mxu0 0
  %2809 = vmatpush1.bf16.xpose.msra.mxu0 0
  %2810 = vmatprep.subr.bf16.mxu0 0
  %2811 = vmatpush1.bf16.xpose.msra.mxu0 0
  %2812 = vmatprep.subr.bf16.mxu0 0
  %2813 = vmatpush1.bf16.xpose.msra.mxu0 0
  %2814 = vmatprep.subr.bf16.mxu0 0
  %2815 = vmatpush1.bf16.xpose.msra.mxu0 0
  %2816 = vmatprep.subr.bf16.mxu0 0
  %2817 = vmatpush1.bf16.xpose.msra.mxu0 0
  %2818 = vmatprep.subr.bf16.mxu0 0
  %2819 = vmatpush1.bf16.xpose.msra.mxu0 0
  %2820 = vmatprep.subr.bf16.mxu0 0
  %2821 = vmatpush1.bf16.xpose.msra.mxu0 0
  %2822 = vmatprep.subr.bf16.mxu0 0
  %2823 = vmatpush1.bf16.xpose.msra.mxu0 0
  %2824 = vmatprep.subr.bf16.mxu0 0
  %2825 = vmatpush1.bf16.xpose.msra.mxu0 0
  %2826 = vmatprep.mubr.bf16.mxu0 0
  %2827 = vmatmul.mubr.bf16.gmra.mrb[0].mxu0 %v2789
  %v2828 = vpop.f32.mrb[0].mxu0
  %v2829 = vadd.f32 %v2527, %v2828
  %v2830 = vpop.f32.mrb[0].mxu0
  %v2831 = vpop.f32.mrb[0].mxu0
  %v2832 = vadd.f32 %v2528, %v2831
  %v2833 = vpop.f32.mrb[0].mxu0
  %2834 = vdwg.mxu0
  %2835 = vrot.lane.b32.xlu0 %v476, 112
  %v2836 = vpop.permute.xlu0 %2835
  %2837 = vrot.lane.b32.xlu0 %v484, 80
  %v2838 = vpop.permute.xlu0 %2837
  %v2840 = vsel %vm491, %v2836, 0
  %v2843 = vsel %vm491, %v2838, 0
  %2845 = vmatprep.subr.bf16.mxu0 0
  %2846 = vmatpush1.bf16.xpose.msra.mxu0 %v2843
  %2847 = vmatprep.subr.bf16.mxu0 0
  %2848 = vmatpush1.bf16.xpose.msra.mxu0 0
  %2849 = vmatprep.subr.bf16.mxu0 0
  %2850 = vmatpush1.bf16.xpose.msra.mxu0 0
  %2851 = vmatprep.subr.bf16.mxu0 0
  %2852 = vmatpush1.bf16.xpose.msra.mxu0 0
  %2853 = vmatprep.subr.bf16.mxu0 0
  %2854 = vmatpush1.bf16.xpose.msra.mxu0 0
  %2855 = vmatprep.subr.bf16.mxu0 0
  %2856 = vmatpush1.bf16.xpose.msra.mxu0 0
  %2857 = vmatprep.subr.bf16.mxu0 0
  %2858 = vmatpush1.bf16.xpose.msra.mxu0 0
  %2859 = vmatprep.subr.bf16.mxu0 0
  %2860 = vmatpush1.bf16.xpose.msra.mxu0 0
  %2861 = vmatprep.subr.bf16.mxu0 0
  %2862 = vmatpush1.bf16.xpose.msra.mxu0 0
  %2863 = vmatprep.subr.bf16.mxu0 0
  %2864 = vmatpush1.bf16.xpose.msra.mxu0 0
  %2865 = vmatprep.subr.bf16.mxu0 0
  %2866 = vmatpush1.bf16.xpose.msra.mxu0 0
  %2867 = vmatprep.subr.bf16.mxu0 0
  %2868 = vmatpush1.bf16.xpose.msra.mxu0 0
  %2869 = vmatprep.subr.bf16.mxu0 0
  %2870 = vmatpush1.bf16.xpose.msra.mxu0 0
  %2871 = vmatprep.subr.bf16.mxu0 0
  %2872 = vmatpush1.bf16.xpose.msra.mxu0 0
  %2873 = vmatprep.subr.bf16.mxu0 0
  %2874 = vmatpush1.bf16.xpose.msra.mxu0 0
  %2875 = vmatprep.subr.bf16.mxu0 0
  %2876 = vmatpush1.bf16.xpose.msra.mxu0 0
  %2877 = vmatprep.mubr.bf16.mxu0 0
  %2878 = vmatmul.mubr.bf16.gmra.mrb[0].mxu0 %v2840
  %v2879 = vpop.f32.mrb[0].mxu0
  %v2880 = vadd.f32 %v2527, %v2879
  %v2881 = vpop.f32.mrb[0].mxu0
  %v2882 = vpop.f32.mrb[0].mxu0
  %v2883 = vadd.f32 %v2528, %v2882
  %v2884 = vpop.f32.mrb[0].mxu0
  %2885 = vdwg.mxu0
  %2886 = vrot.lane.b32.xlu0 %v477, 112
  %v2887 = vpop.permute.xlu0 %2886
  %2888 = vrot.lane.b32.xlu0 %v485, 80
  %v2889 = vpop.permute.xlu0 %2888
  %v2891 = vsel %vm491, %v2887, 0
  %v2894 = vsel %vm491, %v2889, 0
  %2896 = vmatprep.subr.bf16.mxu0 0
  %2897 = vmatpush1.bf16.xpose.msra.mxu0 %v2894
  %2898 = vmatprep.subr.bf16.mxu0 0
  %2899 = vmatpush1.bf16.xpose.msra.mxu0 0
  %2900 = vmatprep.subr.bf16.mxu0 0
  %2901 = vmatpush1.bf16.xpose.msra.mxu0 0
  %2902 = vmatprep.subr.bf16.mxu0 0
  %2903 = vmatpush1.bf16.xpose.msra.mxu0 0
  %2904 = vmatprep.subr.bf16.mxu0 0
  %2905 = vmatpush1.bf16.xpose.msra.mxu0 0
  %2906 = vmatprep.subr.bf16.mxu0 0
  %2907 = vmatpush1.bf16.xpose.msra.mxu0 0
  %2908 = vmatprep.subr.bf16.mxu0 0
  %2909 = vmatpush1.bf16.xpose.msra.mxu0 0
  %2910 = vmatprep.subr.bf16.mxu0 0
  %2911 = vmatpush1.bf16.xpose.msra.mxu0 0
  %2912 = vmatprep.subr.bf16.mxu0 0
  %2913 = vmatpush1.bf16.xpose.msra.mxu0 0
  %2914 = vmatprep.subr.bf16.mxu0 0
  %2915 = vmatpush1.bf16.xpose.msra.mxu0 0
  %2916 = vmatprep.subr.bf16.mxu0 0
  %2917 = vmatpush1.bf16.xpose.msra.mxu0 0
  %2918 = vmatprep.subr.bf16.mxu0 0
  %2919 = vmatpush1.bf16.xpose.msra.mxu0 0
  %2920 = vmatprep.subr.bf16.mxu0 0
  %2921 = vmatpush1.bf16.xpose.msra.mxu0 0
  %2922 = vmatprep.subr.bf16.mxu0 0
  %2923 = vmatpush1.bf16.xpose.msra.mxu0 0
  %2924 = vmatprep.subr.bf16.mxu0 0
  %2925 = vmatpush1.bf16.xpose.msra.mxu0 0
  %2926 = vmatprep.subr.bf16.mxu0 0
  %2927 = vmatpush1.bf16.xpose.msra.mxu0 0
  %2928 = vmatprep.mubr.bf16.mxu0 0
  %2929 = vmatmul.mubr.bf16.gmra.mrb[0].mxu0 %v2891
  %v2930 = vpop.f32.mrb[0].mxu0
  %v2931 = vadd.f32 %v2527, %v2930
  %v2932 = vpop.f32.mrb[0].mxu0
  %v2933 = vpop.f32.mrb[0].mxu0
  %v2934 = vadd.f32 %v2528, %v2933
  %v2935 = vpop.f32.mrb[0].mxu0
  %2936 = vdwg.mxu0
  %v2937 = vsel %vm889, %v2574, -inf
  %2938 = vmax.xlane.f32.xlu0 %v2937
  %v2939 = vpop.xlane.xlu0 %2938
  %v2940 = vsel %vm889, %v2577, -inf
  %2941 = vmax.xlane.f32.xlu0 %v2940
  %v2942 = vpop.xlane.xlu0 %2941
  %v2943 = vsel %vm889, %v2625, -inf
  %2944 = vmax.xlane.f32.xlu0 %v2943
  %v2945 = vpop.xlane.xlu0 %2944
  %v2946 = vsel %vm889, %v2628, -inf
  %2947 = vmax.xlane.f32.xlu0 %v2946
  %v2948 = vpop.xlane.xlu0 %2947
  %v2949 = vsel %vm889, %v2676, -inf
  %2950 = vmax.xlane.f32.xlu0 %v2949
  %v2951 = vpop.xlane.xlu0 %2950
  %v2952 = vsel %vm889, %v2679, -inf
  %2953 = vmax.xlane.f32.xlu0 %v2952
  %v2954 = vpop.xlane.xlu0 %2953
  %v2955 = vsel %vm889, %v2727, -inf
  %2956 = vmax.xlane.f32.xlu0 %v2955
  %v2957 = vpop.xlane.xlu0 %2956
  %v2958 = vsel %vm889, %v2730, -inf
  %2959 = vmax.xlane.f32.xlu0 %v2958
  %v2960 = vpop.xlane.xlu0 %2959
  %v2961 = vsel %vm889, %v2778, -inf
  %2962 = vmax.xlane.f32.xlu0 %v2961
  %v2963 = vpop.xlane.xlu0 %2962
  %v2964 = vsel %vm889, %v2781, -inf
  %2965 = vmax.xlane.f32.xlu0 %v2964
  %v2966 = vpop.xlane.xlu0 %2965
  %v2967 = vsel %vm889, %v2829, -inf
  %2968 = vmax.xlane.f32.xlu0 %v2967
  %v2969 = vpop.xlane.xlu0 %2968
  %v2970 = vsel %vm889, %v2832, -inf
  %2971 = vmax.xlane.f32.xlu0 %v2970
  %v2972 = vpop.xlane.xlu0 %2971
  %v2973 = vsel %vm889, %v2880, -inf
  %2974 = vmax.xlane.f32.xlu0 %v2973
  %v2975 = vpop.xlane.xlu0 %2974
  %v2976 = vsel %vm889, %v2883, -inf
  %2977 = vmax.xlane.f32.xlu0 %v2976
  %v2978 = vpop.xlane.xlu0 %2977
  %v2979 = vsel %vm889, %v2931, -inf
  %2980 = vmax.xlane.f32.xlu0 %v2979
  %v2981 = vpop.xlane.xlu0 %2980
  %v2982 = vsel %vm889, %v2934, -inf
  %2983 = vmax.xlane.f32.xlu0 %v2982
  %v2984 = vpop.xlane.xlu0 %2983
  %v2985 = vsub.f32 %v2574, %v2939
  %v2986 = vsub.f32 %v2577, %v2942
  %v2987 = vsub.f32 %v2625, %v2945
  %v2988 = vsub.f32 %v2628, %v2948
  %v2989 = vsub.f32 %v2676, %v2951
  %v2990 = vsub.f32 %v2679, %v2954
  %v2991 = vsub.f32 %v2727, %v2957
  %v2992 = vsub.f32 %v2730, %v2960
  %v2993 = vsub.f32 %v2778, %v2963
  %v2994 = vsub.f32 %v2781, %v2966
  %v2995 = vsub.f32 %v2829, %v2969
  %v2996 = vsub.f32 %v2832, %v2972
  %v2997 = vsub.f32 %v2880, %v2975
  %v2998 = vsub.f32 %v2883, %v2978
  %v2999 = vsub.f32 %v2931, %v2981
  %v3000 = vsub.f32 %v2934, %v2984
  %v3001 = vmul.f32 %v2985, 1.442695
  %v3002 = vpow.pop %v3001
  %v3003 = vmul.f32 %v2986, 1.442695
  %v3004 = vpow.pop %v3003
  %v3005 = vmul.f32 %v2987, 1.442695
  %v3006 = vpow.pop %v3005
  %v3007 = vmul.f32 %v2988, 1.442695
  %v3008 = vpow.pop %v3007
  %v3009 = vmul.f32 %v2989, 1.442695
  %v3010 = vpow.pop %v3009
  %v3011 = vmul.f32 %v2990, 1.442695
  %v3012 = vpow.pop %v3011
  %v3013 = vmul.f32 %v2991, 1.442695
  %v3014 = vpow.pop %v3013
  %v3015 = vmul.f32 %v2992, 1.442695
  %v3016 = vpow.pop %v3015
  %v3017 = vmul.f32 %v2993, 1.442695
  %v3018 = vpow.pop %v3017
  %v3019 = vmul.f32 %v2994, 1.442695
  %v3020 = vpow.pop %v3019
  %v3021 = vmul.f32 %v2995, 1.442695
  %v3022 = vpow.pop %v3021
  %v3023 = vmul.f32 %v2996, 1.442695
  %v3024 = vpow.pop %v3023
  %v3025 = vmul.f32 %v2997, 1.442695
  %v3026 = vpow.pop %v3025
  %v3027 = vmul.f32 %v2998, 1.442695
  %v3028 = vpow.pop %v3027
  %v3029 = vmul.f32 %v2999, 1.442695
  %v3030 = vpow.pop %v3029
  %v3031 = vmul.f32 %v3000, 1.442695
  %v3032 = vpow.pop %v3031
  %v3033 = vsel %vm889, %v3002, 0.0
  %3034 = vadd.xlane.f32.xlu0 %v3033
  %v3035 = vpop.xlane.xlu0 %3034
  %v3036 = vsel %vm889, %v3004, 0.0
  %3037 = vadd.xlane.f32.xlu0 %v3036
  %v3038 = vpop.xlane.xlu0 %3037
  %v3039 = vsel %vm889, %v3006, 0.0
  %3040 = vadd.xlane.f32.xlu0 %v3039
  %v3041 = vpop.xlane.xlu0 %3040
  %v3042 = vsel %vm889, %v3008, 0.0
  %3043 = vadd.xlane.f32.xlu0 %v3042
  %v3044 = vpop.xlane.xlu0 %3043
  %v3045 = vsel %vm889, %v3010, 0.0
  %3046 = vadd.xlane.f32.xlu0 %v3045
  %v3047 = vpop.xlane.xlu0 %3046
  %v3048 = vsel %vm889, %v3012, 0.0
  %3049 = vadd.xlane.f32.xlu0 %v3048
  %v3050 = vpop.xlane.xlu0 %3049
  %v3051 = vsel %vm889, %v3014, 0.0
  %3052 = vadd.xlane.f32.xlu0 %v3051
  %v3053 = vpop.xlane.xlu0 %3052
  %v3054 = vsel %vm889, %v3016, 0.0
  %3055 = vadd.xlane.f32.xlu0 %v3054
  %v3056 = vpop.xlane.xlu0 %3055
  %v3057 = vsel %vm889, %v3018, 0.0
  %3058 = vadd.xlane.f32.xlu0 %v3057
  %v3059 = vpop.xlane.xlu0 %3058
  %v3060 = vsel %vm889, %v3020, 0.0
  %3061 = vadd.xlane.f32.xlu0 %v3060
  %v3062 = vpop.xlane.xlu0 %3061
  %v3063 = vsel %vm889, %v3022, 0.0
  %3064 = vadd.xlane.f32.xlu0 %v3063
  %v3065 = vpop.xlane.xlu0 %3064
  %v3066 = vsel %vm889, %v3024, 0.0
  %3067 = vadd.xlane.f32.xlu0 %v3066
  %v3068 = vpop.xlane.xlu0 %3067
  %v3069 = vsel %vm889, %v3026, 0.0
  %3070 = vadd.xlane.f32.xlu0 %v3069
  %v3071 = vpop.xlane.xlu0 %3070
  %v3072 = vsel %vm889, %v3028, 0.0
  %3073 = vadd.xlane.f32.xlu0 %v3072
  %v3074 = vpop.xlane.xlu0 %3073
  %v3075 = vsel %vm889, %v3030, 0.0
  %3076 = vadd.xlane.f32.xlu0 %v3075
  %v3077 = vpop.xlane.xlu0 %3076
  %v3078 = vsel %vm889, %v3032, 0.0
  %3079 = vadd.xlane.f32.xlu0 %v3078
  %v3080 = vpop.xlane.xlu0 %3079
  %v3081 = vrcp.pop %v3035
  %v3082 = vrcp.pop %v3038
  %v3083 = vrcp.pop %v3041
  %v3084 = vrcp.pop %v3044
  %v3085 = vrcp.pop %v3047
  %v3086 = vrcp.pop %v3050
  %v3087 = vrcp.pop %v3053
  %v3088 = vrcp.pop %v3056
  %v3089 = vrcp.pop %v3059
  %v3090 = vrcp.pop %v3062
  %v3091 = vrcp.pop %v3065
  %v3092 = vrcp.pop %v3068
  %v3093 = vrcp.pop %v3071
  %v3094 = vrcp.pop %v3074
  %v3095 = vrcp.pop %v3077
  %v3096 = vrcp.pop %v3080
  %v3097 = vmul.f32 %v3002, %v3081
  %v3098 = vmul.f32 %v3004, %v3082
  %v3099 = vmul.f32 %v3006, %v3083
  %v3100 = vmul.f32 %v3008, %v3084
  %v3101 = vmul.f32 %v3010, %v3085
  %v3102 = vmul.f32 %v3012, %v3086
  %v3103 = vmul.f32 %v3014, %v3087
  %v3104 = vmul.f32 %v3016, %v3088
  %v3105 = vmul.f32 %v3018, %v3089
  %v3106 = vmul.f32 %v3020, %v3090
  %v3107 = vmul.f32 %v3022, %v3091
  %v3108 = vmul.f32 %v3024, %v3092
  %v3109 = vmul.f32 %v3026, %v3093
  %v3110 = vmul.f32 %v3028, %v3094
  %v3111 = vmul.f32 %v3030, %v3095
  %v3112 = vmul.f32 %v3032, %v3096
  %v3113 = vpack.c.bf16 %v3098, %v3097
  %v3114 = vpack.c.bf16 %v3100, %v3099
  %v3115 = vpack.c.bf16 %v3102, %v3101
  %v3116 = vpack.c.bf16 %v3104, %v3103
  %v3117 = vpack.c.bf16 %v3106, %v3105
  %v3118 = vpack.c.bf16 %v3108, %v3107
  %v3119 = vpack.c.bf16 %v3110, %v3109
  %v3120 = vpack.c.bf16 %v3112, %v3111
  %3121 = vrot.lane.b32.xlu0 %v478, 48
  %v3122 = vpop.permute.xlu0 %3121
  %v3125 = vsel %vm889, %v3113, 0
  %3127 = vmatprep.subr.bf16.mxu0 0
  %3128 = vmatpush1.bf16.msra.mxu0 %v3122
  %3129 = vmatprep.subr.bf16.mxu0 0
  %3130 = vmatpush1.bf16.msra.mxu0 0
  %3131 = vmatprep.subr.bf16.mxu0 0
  %3132 = vmatpush1.bf16.msra.mxu0 0
  %3133 = vmatprep.subr.bf16.mxu0 0
  %3134 = vmatpush1.bf16.msra.mxu0 0
  %3135 = vmatprep.subr.bf16.mxu0 0
  %3136 = vmatpush1.bf16.msra.mxu0 0
  %3137 = vmatprep.subr.bf16.mxu0 0
  %3138 = vmatpush1.bf16.msra.mxu0 0
  %3139 = vmatprep.subr.bf16.mxu0 0
  %3140 = vmatpush1.bf16.msra.mxu0 0
  %3141 = vmatprep.subr.bf16.mxu0 0
  %3142 = vmatpush1.bf16.msra.mxu0 0
  %3143 = vmatprep.subr.bf16.mxu0 0
  %3144 = vmatpush1.bf16.msra.mxu0 0
  %3145 = vmatprep.subr.bf16.mxu0 0
  %3146 = vmatpush1.bf16.msra.mxu0 0
  %3147 = vmatprep.subr.bf16.mxu0 0
  %3148 = vmatpush1.bf16.msra.mxu0 0
  %3149 = vmatprep.subr.bf16.mxu0 0
  %3150 = vmatpush1.bf16.msra.mxu0 0
  %3151 = vmatprep.subr.bf16.mxu0 0
  %3152 = vmatpush1.bf16.msra.mxu0 0
  %3153 = vmatprep.subr.bf16.mxu0 0
  %3154 = vmatpush1.bf16.msra.mxu0 0
  %3155 = vmatprep.subr.bf16.mxu0 0
  %3156 = vmatpush1.bf16.msra.mxu0 0
  %3157 = vmatprep.subr.bf16.mxu0 0
  %3158 = vmatpush1.bf16.msra.mxu0 0
  %3159 = vmatprep.mubr.bf16.mxu0 0
  %3160 = vmatmul.mubr.bf16.gmra.mrb[0].mxu0 %v3125
  %v3161 = vpop.f32.mrb[0].mxu0
  %v3162 = vadd.f32 0.0, %v3161
  %v3163 = vpop.f32.mrb[0].mxu0
  %v3164 = vpop.f32.mrb[0].mxu0
  %v3165 = vadd.f32 0.0, %v3164
  %v3166 = vpop.f32.mrb[0].mxu0
  %3167 = vdwg.mxu0
  %3168 = vrot.lane.b32.xlu0 %v479, 48
  %v3169 = vpop.permute.xlu0 %3168
  %v3172 = vsel %vm889, %v3114, 0
  %3174 = vmatprep.subr.bf16.mxu0 0
  %3175 = vmatpush1.bf16.msra.mxu0 %v3169
  %3176 = vmatprep.subr.bf16.mxu0 0
  %3177 = vmatpush1.bf16.msra.mxu0 0
  %3178 = vmatprep.subr.bf16.mxu0 0
  %3179 = vmatpush1.bf16.msra.mxu0 0
  %3180 = vmatprep.subr.bf16.mxu0 0
  %3181 = vmatpush1.bf16.msra.mxu0 0
  %3182 = vmatprep.subr.bf16.mxu0 0
  %3183 = vmatpush1.bf16.msra.mxu0 0
  %3184 = vmatprep.subr.bf16.mxu0 0
  %3185 = vmatpush1.bf16.msra.mxu0 0
  %3186 = vmatprep.subr.bf16.mxu0 0
  %3187 = vmatpush1.bf16.msra.mxu0 0
  %3188 = vmatprep.subr.bf16.mxu0 0
  %3189 = vmatpush1.bf16.msra.mxu0 0
  %3190 = vmatprep.subr.bf16.mxu0 0
  %3191 = vmatpush1.bf16.msra.mxu0 0
  %3192 = vmatprep.subr.bf16.mxu0 0
  %3193 = vmatpush1.bf16.msra.mxu0 0
  %3194 = vmatprep.subr.bf16.mxu0 0
  %3195 = vmatpush1.bf16.msra.mxu0 0
  %3196 = vmatprep.subr.bf16.mxu0 0
  %3197 = vmatpush1.bf16.msra.mxu0 0
  %3198 = vmatprep.subr.bf16.mxu0 0
  %3199 = vmatpush1.bf16.msra.mxu0 0
  %3200 = vmatprep.subr.bf16.mxu0 0
  %3201 = vmatpush1.bf16.msra.mxu0 0
  %3202 = vmatprep.subr.bf16.mxu0 0
  %3203 = vmatpush1.bf16.msra.mxu0 0
  %3204 = vmatprep.subr.bf16.mxu0 0
  %3205 = vmatpush1.bf16.msra.mxu0 0
  %3206 = vmatprep.mubr.bf16.mxu0 0
  %3207 = vmatmul.mubr.bf16.gmra.mrb[0].mxu0 %v3172
  %v3208 = vpop.f32.mrb[0].mxu0
  %v3209 = vadd.f32 0.0, %v3208
  %v3210 = vpop.f32.mrb[0].mxu0
  %v3211 = vpop.f32.mrb[0].mxu0
  %v3212 = vadd.f32 0.0, %v3211
  %v3213 = vpop.f32.mrb[0].mxu0
  %3214 = vdwg.mxu0
  %3215 = vrot.lane.b32.xlu0 %v480, 48
  %v3216 = vpop.permute.xlu0 %3215
  %v3219 = vsel %vm889, %v3115, 0
  %3221 = vmatprep.subr.bf16.mxu0 0
  %3222 = vmatpush1.bf16.msra.mxu0 %v3216
  %3223 = vmatprep.subr.bf16.mxu0 0
  %3224 = vmatpush1.bf16.msra.mxu0 0
  %3225 = vmatprep.subr.bf16.mxu0 0
  %3226 = vmatpush1.bf16.msra.mxu0 0
  %3227 = vmatprep.subr.bf16.mxu0 0
  %3228 = vmatpush1.bf16.msra.mxu0 0
  %3229 = vmatprep.subr.bf16.mxu0 0
  %3230 = vmatpush1.bf16.msra.mxu0 0
  %3231 = vmatprep.subr.bf16.mxu0 0
  %3232 = vmatpush1.bf16.msra.mxu0 0
  %3233 = vmatprep.subr.bf16.mxu0 0
  %3234 = vmatpush1.bf16.msra.mxu0 0
  %3235 = vmatprep.subr.bf16.mxu0 0
  %3236 = vmatpush1.bf16.msra.mxu0 0
  %3237 = vmatprep.subr.bf16.mxu0 0
  %3238 = vmatpush1.bf16.msra.mxu0 0
  %3239 = vmatprep.subr.bf16.mxu0 0
  %3240 = vmatpush1.bf16.msra.mxu0 0
  %3241 = vmatprep.subr.bf16.mxu0 0
  %3242 = vmatpush1.bf16.msra.mxu0 0
  %3243 = vmatprep.subr.bf16.mxu0 0
  %3244 = vmatpush1.bf16.msra.mxu0 0
  %3245 = vmatprep.subr.bf16.mxu0 0
  %3246 = vmatpush1.bf16.msra.mxu0 0
  %3247 = vmatprep.subr.bf16.mxu0 0
  %3248 = vmatpush1.bf16.msra.mxu0 0
  %3249 = vmatprep.subr.bf16.mxu0 0
  %3250 = vmatpush1.bf16.msra.mxu0 0
  %3251 = vmatprep.subr.bf16.mxu0 0
  %3252 = vmatpush1.bf16.msra.mxu0 0
  %3253 = vmatprep.mubr.bf16.mxu0 0
  %3254 = vmatmul.mubr.bf16.gmra.mrb[0].mxu0 %v3219
  %v3255 = vpop.f32.mrb[0].mxu0
  %v3256 = vadd.f32 0.0, %v3255
  %v3257 = vpop.f32.mrb[0].mxu0
  %v3258 = vpop.f32.mrb[0].mxu0
  %v3259 = vadd.f32 0.0, %v3258
  %v3260 = vpop.f32.mrb[0].mxu0
  %3261 = vdwg.mxu0
  %3262 = vrot.lane.b32.xlu0 %v481, 48
  %v3263 = vpop.permute.xlu0 %3262
  %v3266 = vsel %vm889, %v3116, 0
  %3268 = vmatprep.subr.bf16.mxu0 0
  %3269 = vmatpush1.bf16.msra.mxu0 %v3263
  %3270 = vmatprep.subr.bf16.mxu0 0
  %3271 = vmatpush1.bf16.msra.mxu0 0
  %3272 = vmatprep.subr.bf16.mxu0 0
  %3273 = vmatpush1.bf16.msra.mxu0 0
  %3274 = vmatprep.subr.bf16.mxu0 0
  %3275 = vmatpush1.bf16.msra.mxu0 0
  %3276 = vmatprep.subr.bf16.mxu0 0
  %3277 = vmatpush1.bf16.msra.mxu0 0
  %3278 = vmatprep.subr.bf16.mxu0 0
  %3279 = vmatpush1.bf16.msra.mxu0 0
  %3280 = vmatprep.subr.bf16.mxu0 0
  %3281 = vmatpush1.bf16.msra.mxu0 0
  %3282 = vmatprep.subr.bf16.mxu0 0
  %3283 = vmatpush1.bf16.msra.mxu0 0
  %3284 = vmatprep.subr.bf16.mxu0 0
  %3285 = vmatpush1.bf16.msra.mxu0 0
  %3286 = vmatprep.subr.bf16.mxu0 0
  %3287 = vmatpush1.bf16.msra.mxu0 0
  %3288 = vmatprep.subr.bf16.mxu0 0
  %3289 = vmatpush1.bf16.msra.mxu0 0
  %3290 = vmatprep.subr.bf16.mxu0 0
  %3291 = vmatpush1.bf16.msra.mxu0 0
  %3292 = vmatprep.subr.bf16.mxu0 0
  %3293 = vmatpush1.bf16.msra.mxu0 0
  %3294 = vmatprep.subr.bf16.mxu0 0
  %3295 = vmatpush1.bf16.msra.mxu0 0
  %3296 = vmatprep.subr.bf16.mxu0 0
  %3297 = vmatpush1.bf16.msra.mxu0 0
  %3298 = vmatprep.subr.bf16.mxu0 0
  %3299 = vmatpush1.bf16.msra.mxu0 0
  %3300 = vmatprep.mubr.bf16.mxu0 0
  %3301 = vmatmul.mubr.bf16.gmra.mrb[0].mxu0 %v3266
  %v3302 = vpop.f32.mrb[0].mxu0
  %v3303 = vadd.f32 0.0, %v3302
  %v3304 = vpop.f32.mrb[0].mxu0
  %v3305 = vpop.f32.mrb[0].mxu0
  %v3306 = vadd.f32 0.0, %v3305
  %v3307 = vpop.f32.mrb[0].mxu0
  %3308 = vdwg.mxu0
  %3309 = vrot.lane.b32.xlu0 %v482, 48
  %v3310 = vpop.permute.xlu0 %3309
  %v3313 = vsel %vm889, %v3117, 0
  %3315 = vmatprep.subr.bf16.mxu0 0
  %3316 = vmatpush1.bf16.msra.mxu0 %v3310
  %3317 = vmatprep.subr.bf16.mxu0 0
  %3318 = vmatpush1.bf16.msra.mxu0 0
  %3319 = vmatprep.subr.bf16.mxu0 0
  %3320 = vmatpush1.bf16.msra.mxu0 0
  %3321 = vmatprep.subr.bf16.mxu0 0
  %3322 = vmatpush1.bf16.msra.mxu0 0
  %3323 = vmatprep.subr.bf16.mxu0 0
  %3324 = vmatpush1.bf16.msra.mxu0 0
  %3325 = vmatprep.subr.bf16.mxu0 0
  %3326 = vmatpush1.bf16.msra.mxu0 0
  %3327 = vmatprep.subr.bf16.mxu0 0
  %3328 = vmatpush1.bf16.msra.mxu0 0
  %3329 = vmatprep.subr.bf16.mxu0 0
  %3330 = vmatpush1.bf16.msra.mxu0 0
  %3331 = vmatprep.subr.bf16.mxu0 0
  %3332 = vmatpush1.bf16.msra.mxu0 0
  %3333 = vmatprep.subr.bf16.mxu0 0
  %3334 = vmatpush1.bf16.msra.mxu0 0
  %3335 = vmatprep.subr.bf16.mxu0 0
  %3336 = vmatpush1.bf16.msra.mxu0 0
  %3337 = vmatprep.subr.bf16.mxu0 0
  %3338 = vmatpush1.bf16.msra.mxu0 0
  %3339 = vmatprep.subr.bf16.mxu0 0
  %3340 = vmatpush1.bf16.msra.mxu0 0
  %3341 = vmatprep.subr.bf16.mxu0 0
  %3342 = vmatpush1.bf16.msra.mxu0 0
  %3343 = vmatprep.subr.bf16.mxu0 0
  %3344 = vmatpush1.bf16.msra.mxu0 0
  %3345 = vmatprep.subr.bf16.mxu0 0
  %3346 = vmatpush1.bf16.msra.mxu0 0
  %3347 = vmatprep.mubr.bf16.mxu0 0
  %3348 = vmatmul.mubr.bf16.gmra.mrb[0].mxu0 %v3313
  %v3349 = vpop.f32.mrb[0].mxu0
  %v3350 = vadd.f32 0.0, %v3349
  %v3351 = vpop.f32.mrb[0].mxu0
  %v3352 = vpop.f32.mrb[0].mxu0
  %v3353 = vadd.f32 0.0, %v3352
  %v3354 = vpop.f32.mrb[0].mxu0
  %3355 = vdwg.mxu0
  %3356 = vrot.lane.b32.xlu0 %v483, 48
  %v3357 = vpop.permute.xlu0 %3356
  %v3360 = vsel %vm889, %v3118, 0
  %3362 = vmatprep.subr.bf16.mxu0 0
  %3363 = vmatpush1.bf16.msra.mxu0 %v3357
  %3364 = vmatprep.subr.bf16.mxu0 0
  %3365 = vmatpush1.bf16.msra.mxu0 0
  %3366 = vmatprep.subr.bf16.mxu0 0
  %3367 = vmatpush1.bf16.msra.mxu0 0
  %3368 = vmatprep.subr.bf16.mxu0 0
  %3369 = vmatpush1.bf16.msra.mxu0 0
  %3370 = vmatprep.subr.bf16.mxu0 0
  %3371 = vmatpush1.bf16.msra.mxu0 0
  %3372 = vmatprep.subr.bf16.mxu0 0
  %3373 = vmatpush1.bf16.msra.mxu0 0
  %3374 = vmatprep.subr.bf16.mxu0 0
  %3375 = vmatpush1.bf16.msra.mxu0 0
  %3376 = vmatprep.subr.bf16.mxu0 0
  %3377 = vmatpush1.bf16.msra.mxu0 0
  %3378 = vmatprep.subr.bf16.mxu0 0
  %3379 = vmatpush1.bf16.msra.mxu0 0
  %3380 = vmatprep.subr.bf16.mxu0 0
  %3381 = vmatpush1.bf16.msra.mxu0 0
  %3382 = vmatprep.subr.bf16.mxu0 0
  %3383 = vmatpush1.bf16.msra.mxu0 0
  %3384 = vmatprep.subr.bf16.mxu0 0
  %3385 = vmatpush1.bf16.msra.mxu0 0
  %3386 = vmatprep.subr.bf16.mxu0 0
  %3387 = vmatpush1.bf16.msra.mxu0 0
  %3388 = vmatprep.subr.bf16.mxu0 0
  %3389 = vmatpush1.bf16.msra.mxu0 0
  %3390 = vmatprep.subr.bf16.mxu0 0
  %3391 = vmatpush1.bf16.msra.mxu0 0
  %3392 = vmatprep.subr.bf16.mxu0 0
  %3393 = vmatpush1.bf16.msra.mxu0 0
  %3394 = vmatprep.mubr.bf16.mxu0 0
  %3395 = vmatmul.mubr.bf16.gmra.mrb[0].mxu0 %v3360
  %v3396 = vpop.f32.mrb[0].mxu0
  %v3397 = vadd.f32 0.0, %v3396
  %v3398 = vpop.f32.mrb[0].mxu0
  %v3399 = vpop.f32.mrb[0].mxu0
  %v3400 = vadd.f32 0.0, %v3399
  %v3401 = vpop.f32.mrb[0].mxu0
  %3402 = vdwg.mxu0
  %3403 = vrot.lane.b32.xlu0 %v484, 48
  %v3404 = vpop.permute.xlu0 %3403
  %v3407 = vsel %vm889, %v3119, 0
  %3409 = vmatprep.subr.bf16.mxu0 0
  %3410 = vmatpush1.bf16.msra.mxu0 %v3404
  %3411 = vmatprep.subr.bf16.mxu0 0
  %3412 = vmatpush1.bf16.msra.mxu0 0
  %3413 = vmatprep.subr.bf16.mxu0 0
  %3414 = vmatpush1.bf16.msra.mxu0 0
  %3415 = vmatprep.subr.bf16.mxu0 0
  %3416 = vmatpush1.bf16.msra.mxu0 0
  %3417 = vmatprep.subr.bf16.mxu0 0
  %3418 = vmatpush1.bf16.msra.mxu0 0
  %3419 = vmatprep.subr.bf16.mxu0 0
  %3420 = vmatpush1.bf16.msra.mxu0 0
  %3421 = vmatprep.subr.bf16.mxu0 0
  %3422 = vmatpush1.bf16.msra.mxu0 0
  %3423 = vmatprep.subr.bf16.mxu0 0
  %3424 = vmatpush1.bf16.msra.mxu0 0
  %3425 = vmatprep.subr.bf16.mxu0 0
  %3426 = vmatpush1.bf16.msra.mxu0 0
  %3427 = vmatprep.subr.bf16.mxu0 0
  %3428 = vmatpush1.bf16.msra.mxu0 0
  %3429 = vmatprep.subr.bf16.mxu0 0
  %3430 = vmatpush1.bf16.msra.mxu0 0
  %3431 = vmatprep.subr.bf16.mxu0 0
  %3432 = vmatpush1.bf16.msra.mxu0 0
  %3433 = vmatprep.subr.bf16.mxu0 0
  %3434 = vmatpush1.bf16.msra.mxu0 0
  %3435 = vmatprep.subr.bf16.mxu0 0
  %3436 = vmatpush1.bf16.msra.mxu0 0
  %3437 = vmatprep.subr.bf16.mxu0 0
  %3438 = vmatpush1.bf16.msra.mxu0 0
  %3439 = vmatprep.subr.bf16.mxu0 0
  %3440 = vmatpush1.bf16.msra.mxu0 0
  %3441 = vmatprep.mubr.bf16.mxu0 0
  %3442 = vmatmul.mubr.bf16.gmra.mrb[0].mxu0 %v3407
  %v3443 = vpop.f32.mrb[0].mxu0
  %v3444 = vadd.f32 0.0, %v3443
  %v3445 = vpop.f32.mrb[0].mxu0
  %v3446 = vpop.f32.mrb[0].mxu0
  %v3447 = vadd.f32 0.0, %v3446
  %v3448 = vpop.f32.mrb[0].mxu0
  %3449 = vdwg.mxu0
  %3450 = vrot.lane.b32.xlu0 %v485, 48
  %v3451 = vpop.permute.xlu0 %3450
  %v3454 = vsel %vm889, %v3120, 0
  %3456 = vmatprep.subr.bf16.mxu0 0
  %3457 = vmatpush1.bf16.msra.mxu0 %v3451
  %3458 = vmatprep.subr.bf16.mxu0 0
  %3459 = vmatpush1.bf16.msra.mxu0 0
  %3460 = vmatprep.subr.bf16.mxu0 0
  %3461 = vmatpush1.bf16.msra.mxu0 0
  %3462 = vmatprep.subr.bf16.mxu0 0
  %3463 = vmatpush1.bf16.msra.mxu0 0
  %3464 = vmatprep.subr.bf16.mxu0 0
  %3465 = vmatpush1.bf16.msra.mxu0 0
  %3466 = vmatprep.subr.bf16.mxu0 0
  %3467 = vmatpush1.bf16.msra.mxu0 0
  %3468 = vmatprep.subr.bf16.mxu0 0
  %3469 = vmatpush1.bf16.msra.mxu0 0
  %3470 = vmatprep.subr.bf16.mxu0 0
  %3471 = vmatpush1.bf16.msra.mxu0 0
  %3472 = vmatprep.subr.bf16.mxu0 0
  %3473 = vmatpush1.bf16.msra.mxu0 0
  %3474 = vmatprep.subr.bf16.mxu0 0
  %3475 = vmatpush1.bf16.msra.mxu0 0
  %3476 = vmatprep.subr.bf16.mxu0 0
  %3477 = vmatpush1.bf16.msra.mxu0 0
  %3478 = vmatprep.subr.bf16.mxu0 0
  %3479 = vmatpush1.bf16.msra.mxu0 0
  %3480 = vmatprep.subr.bf16.mxu0 0
  %3481 = vmatpush1.bf16.msra.mxu0 0
  %3482 = vmatprep.subr.bf16.mxu0 0
  %3483 = vmatpush1.bf16.msra.mxu0 0
  %3484 = vmatprep.subr.bf16.mxu0 0
  %3485 = vmatpush1.bf16.msra.mxu0 0
  %3486 = vmatprep.subr.bf16.mxu0 0
  %3487 = vmatpush1.bf16.msra.mxu0 0
  %3488 = vmatprep.mubr.bf16.mxu0 0
  %3489 = vmatmul.mubr.bf16.gmra.mrb[0].mxu0 %v3454
  %v3490 = vpop.f32.mrb[0].mxu0
  %v3491 = vadd.f32 0.0, %v3490
  %v3492 = vpop.f32.mrb[0].mxu0
  %v3493 = vpop.f32.mrb[0].mxu0
  %v3494 = vadd.f32 0.0, %v3493
  %v3495 = vpop.f32.mrb[0].mxu0
  %3496 = vdwg.mxu0
  %3513 = vrot.lane.b32.xlu0 %v3162, 16
  %v3514 = vpop.permute.xlu0 %3513
  %3515 = vrot.lane.b32.xlu0 %v3165, 16
  %v3516 = vpop.permute.xlu0 %3515
  %3517 = vrot.lane.b32.xlu0 %v3209, 16
  %v3518 = vpop.permute.xlu0 %3517
  %3519 = vrot.lane.b32.xlu0 %v3212, 16
  %v3520 = vpop.permute.xlu0 %3519
  %3521 = vrot.lane.b32.xlu0 %v3256, 16
  %v3522 = vpop.permute.xlu0 %3521
  %3523 = vrot.lane.b32.xlu0 %v3259, 16
  %v3524 = vpop.permute.xlu0 %3523
  %3525 = vrot.lane.b32.xlu0 %v3303, 16
  %v3526 = vpop.permute.xlu0 %3525
  %3527 = vrot.lane.b32.xlu0 %v3306, 16
  %v3528 = vpop.permute.xlu0 %3527
  %3529 = vrot.lane.b32.xlu0 %v3350, 16
  %v3530 = vpop.permute.xlu0 %3529
  %3531 = vrot.lane.b32.xlu0 %v3353, 16
  %v3532 = vpop.permute.xlu0 %3531
  %3533 = vrot.lane.b32.xlu0 %v3397, 16
  %v3534 = vpop.permute.xlu0 %3533
  %3535 = vrot.lane.b32.xlu0 %v3400, 16
  %v3536 = vpop.permute.xlu0 %3535
  %3537 = vrot.lane.b32.xlu0 %v3444, 16
  %v3538 = vpop.permute.xlu0 %3537
  %3539 = vrot.lane.b32.xlu0 %v3447, 16
  %v3540 = vpop.permute.xlu0 %3539
  %3541 = vrot.lane.b32.xlu0 %v3491, 16
  %v3542 = vpop.permute.xlu0 %3541
  %3543 = vrot.lane.b32.xlu0 %v3494, 16
  %v3544 = vpop.permute.xlu0 %3543
  %vm3561 = vcmask 195712
  %3562 = vst.msk [vmem:[#allocation2] sm:$0xff] %vm3561, %v3514
  %3563 = vst.msk [vmem:[#allocation2 + $0x8] sm:$0xff] %vm3561, %v3516
  %3564 = vst.msk [vmem:[#allocation2 + $0x10] sm:$0xff] %vm3561, %v3518
  %3565 = vst.msk [vmem:[#allocation2 + $0x18] sm:$0xff] %vm3561, %v3520
  %3566 = vst.msk [vmem:[#allocation2 + $0x20] sm:$0xff] %vm3561, %v3522
  %3567 = vst.msk [vmem:[#allocation2 + $0x28] sm:$0xff] %vm3561, %v3524
  %3568 = vst.msk [vmem:[#allocation2 + $0x30] sm:$0xff] %vm3561, %v3526
  %3569 = vst.msk [vmem:[#allocation2 + $0x38] sm:$0xff] %vm3561, %v3528
  %3570 = vst.msk [vmem:[#allocation2 + $0x40] sm:$0xff] %vm3561, %v3530
  %3571 = vst.msk [vmem:[#allocation2 + $0x48] sm:$0xff] %vm3561, %v3532
  %3572 = vst.msk [vmem:[#allocation2 + $0x50] sm:$0xff] %vm3561, %v3534
  %3573 = vst.msk [vmem:[#allocation2 + $0x58] sm:$0xff] %vm3561, %v3536
  %3574 = vst.msk [vmem:[#allocation2 + $0x60] sm:$0xff] %vm3561, %v3538
  %3575 = vst.msk [vmem:[#allocation2 + $0x68] sm:$0xff] %vm3561, %v3540
  %3576 = vst.msk [vmem:[#allocation2 + $0x70] sm:$0xff] %vm3561, %v3542
  %3577 = vst.msk [vmem:[#allocation2 + $0x78] sm:$0xff] %vm3561, %v3544
  %s3578 = scalar_lea.vmem %s1, 48
  %v3579 = vld [vmem:[%s3578] sm:$0xff]
  %v3580 = vld [vmem:[%s3578 + $0x8] sm:$0xff]
  %3581 = vrot.lane.b32.xlu0 %v470, 104
  %v3582 = vpop.permute.xlu0 %3581
  %3583 = vrot.lane.b32.xlu0 %v478, 72
  %v3584 = vpop.permute.xlu0 %3583
  %v3586 = vsel %vm491, %v3582, 0
  %v3589 = vsel %vm491, %v3584, 0
  %3591 = vmatprep.subr.bf16.mxu0 0
  %3592 = vmatpush1.bf16.xpose.msra.mxu0 %v3589
  %3593 = vmatprep.subr.bf16.mxu0 0
  %3594 = vmatpush1.bf16.xpose.msra.mxu0 0
  %3595 = vmatprep.subr.bf16.mxu0 0
  %3596 = vmatpush1.bf16.xpose.msra.mxu0 0
  %3597 = vmatprep.subr.bf16.mxu0 0
  %3598 = vmatpush1.bf16.xpose.msra.mxu0 0
  %3599 = vmatprep.subr.bf16.mxu0 0
  %3600 = vmatpush1.bf16.xpose.msra.mxu0 0
  %3601 = vmatprep.subr.bf16.mxu0 0
  %3602 = vmatpush1.bf16.xpose.msra.mxu0 0
  %3603 = vmatprep.subr.bf16.mxu0 0
  %3604 = vmatpush1.bf16.xpose.msra.mxu0 0
  %3605 = vmatprep.subr.bf16.mxu0 0
  %3606 = vmatpush1.bf16.xpose.msra.mxu0 0
  %3607 = vmatprep.subr.bf16.mxu0 0
  %3608 = vmatpush1.bf16.xpose.msra.mxu0 0
  %3609 = vmatprep.subr.bf16.mxu0 0
  %3610 = vmatpush1.bf16.xpose.msra.mxu0 0
  %3611 = vmatprep.subr.bf16.mxu0 0
  %3612 = vmatpush1.bf16.xpose.msra.mxu0 0
  %3613 = vmatprep.subr.bf16.mxu0 0
  %3614 = vmatpush1.bf16.xpose.msra.mxu0 0
  %3615 = vmatprep.subr.bf16.mxu0 0
  %3616 = vmatpush1.bf16.xpose.msra.mxu0 0
  %3617 = vmatprep.subr.bf16.mxu0 0
  %3618 = vmatpush1.bf16.xpose.msra.mxu0 0
  %3619 = vmatprep.subr.bf16.mxu0 0
  %3620 = vmatpush1.bf16.xpose.msra.mxu0 0
  %3621 = vmatprep.subr.bf16.mxu0 0
  %3622 = vmatpush1.bf16.xpose.msra.mxu0 0
  %3623 = vmatprep.mubr.bf16.mxu0 0
  %3624 = vmatmul.mubr.bf16.gmra.mrb[0].mxu0 %v3586
  %v3625 = vpop.f32.mrb[0].mxu0
  %v3626 = vadd.f32 %v3579, %v3625
  %v3627 = vpop.f32.mrb[0].mxu0
  %v3628 = vpop.f32.mrb[0].mxu0
  %v3629 = vadd.f32 %v3580, %v3628
  %v3630 = vpop.f32.mrb[0].mxu0
  %3631 = vdwg.mxu0
  %3632 = vrot.lane.b32.xlu0 %v471, 104
  %v3633 = vpop.permute.xlu0 %3632
  %3634 = vrot.lane.b32.xlu0 %v479, 72
  %v3635 = vpop.permute.xlu0 %3634
  %v3637 = vsel %vm491, %v3633, 0
  %v3640 = vsel %vm491, %v3635, 0
  %3642 = vmatprep.subr.bf16.mxu0 0
  %3643 = vmatpush1.bf16.xpose.msra.mxu0 %v3640
  %3644 = vmatprep.subr.bf16.mxu0 0
  %3645 = vmatpush1.bf16.xpose.msra.mxu0 0
  %3646 = vmatprep.subr.bf16.mxu0 0
  %3647 = vmatpush1.bf16.xpose.msra.mxu0 0
  %3648 = vmatprep.subr.bf16.mxu0 0
  %3649 = vmatpush1.bf16.xpose.msra.mxu0 0
  %3650 = vmatprep.subr.bf16.mxu0 0
  %3651 = vmatpush1.bf16.xpose.msra.mxu0 0
  %3652 = vmatprep.subr.bf16.mxu0 0
  %3653 = vmatpush1.bf16.xpose.msra.mxu0 0
  %3654 = vmatprep.subr.bf16.mxu0 0
  %3655 = vmatpush1.bf16.xpose.msra.mxu0 0
  %3656 = vmatprep.subr.bf16.mxu0 0
  %3657 = vmatpush1.bf16.xpose.msra.mxu0 0
  %3658 = vmatprep.subr.bf16.mxu0 0
  %3659 = vmatpush1.bf16.xpose.msra.mxu0 0
  %3660 = vmatprep.subr.bf16.mxu0 0
  %3661 = vmatpush1.bf16.xpose.msra.mxu0 0
  %3662 = vmatprep.subr.bf16.mxu0 0
  %3663 = vmatpush1.bf16.xpose.msra.mxu0 0
  %3664 = vmatprep.subr.bf16.mxu0 0
  %3665 = vmatpush1.bf16.xpose.msra.mxu0 0
  %3666 = vmatprep.subr.bf16.mxu0 0
  %3667 = vmatpush1.bf16.xpose.msra.mxu0 0
  %3668 = vmatprep.subr.bf16.mxu0 0
  %3669 = vmatpush1.bf16.xpose.msra.mxu0 0
  %3670 = vmatprep.subr.bf16.mxu0 0
  %3671 = vmatpush1.bf16.xpose.msra.mxu0 0
  %3672 = vmatprep.subr.bf16.mxu0 0
  %3673 = vmatpush1.bf16.xpose.msra.mxu0 0
  %3674 = vmatprep.mubr.bf16.mxu0 0
  %3675 = vmatmul.mubr.bf16.gmra.mrb[0].mxu0 %v3637
  %v3676 = vpop.f32.mrb[0].mxu0
  %v3677 = vadd.f32 %v3579, %v3676
  %v3678 = vpop.f32.mrb[0].mxu0
  %v3679 = vpop.f32.mrb[0].mxu0
  %v3680 = vadd.f32 %v3580, %v3679
  %v3681 = vpop.f32.mrb[0].mxu0
  %3682 = vdwg.mxu0
  %3683 = vrot.lane.b32.xlu0 %v472, 104
  %v3684 = vpop.permute.xlu0 %3683
  %3685 = vrot.lane.b32.xlu0 %v480, 72
  %v3686 = vpop.permute.xlu0 %3685
  %v3688 = vsel %vm491, %v3684, 0
  %v3691 = vsel %vm491, %v3686, 0
  %3693 = vmatprep.subr.bf16.mxu0 0
  %3694 = vmatpush1.bf16.xpose.msra.mxu0 %v3691
  %3695 = vmatprep.subr.bf16.mxu0 0
  %3696 = vmatpush1.bf16.xpose.msra.mxu0 0
  %3697 = vmatprep.subr.bf16.mxu0 0
  %3698 = vmatpush1.bf16.xpose.msra.mxu0 0
  %3699 = vmatprep.subr.bf16.mxu0 0
  %3700 = vmatpush1.bf16.xpose.msra.mxu0 0
  %3701 = vmatprep.subr.bf16.mxu0 0
  %3702 = vmatpush1.bf16.xpose.msra.mxu0 0
  %3703 = vmatprep.subr.bf16.mxu0 0
  %3704 = vmatpush1.bf16.xpose.msra.mxu0 0
  %3705 = vmatprep.subr.bf16.mxu0 0
  %3706 = vmatpush1.bf16.xpose.msra.mxu0 0
  %3707 = vmatprep.subr.bf16.mxu0 0
  %3708 = vmatpush1.bf16.xpose.msra.mxu0 0
  %3709 = vmatprep.subr.bf16.mxu0 0
  %3710 = vmatpush1.bf16.xpose.msra.mxu0 0
  %3711 = vmatprep.subr.bf16.mxu0 0
  %3712 = vmatpush1.bf16.xpose.msra.mxu0 0
  %3713 = vmatprep.subr.bf16.mxu0 0
  %3714 = vmatpush1.bf16.xpose.msra.mxu0 0
  %3715 = vmatprep.subr.bf16.mxu0 0
  %3716 = vmatpush1.bf16.xpose.msra.mxu0 0
  %3717 = vmatprep.subr.bf16.mxu0 0
  %3718 = vmatpush1.bf16.xpose.msra.mxu0 0
  %3719 = vmatprep.subr.bf16.mxu0 0
  %3720 = vmatpush1.bf16.xpose.msra.mxu0 0
  %3721 = vmatprep.subr.bf16.mxu0 0
  %3722 = vmatpush1.bf16.xpose.msra.mxu0 0
  %3723 = vmatprep.subr.bf16.mxu0 0
  %3724 = vmatpush1.bf16.xpose.msra.mxu0 0
  %3725 = vmatprep.mubr.bf16.mxu0 0
  %3726 = vmatmul.mubr.bf16.gmra.mrb[0].mxu0 %v3688
  %v3727 = vpop.f32.mrb[0].mxu0
  %v3728 = vadd.f32 %v3579, %v3727
  %v3729 = vpop.f32.mrb[0].mxu0
  %v3730 = vpop.f32.mrb[0].mxu0
  %v3731 = vadd.f32 %v3580, %v3730
  %v3732 = vpop.f32.mrb[0].mxu0
  %3733 = vdwg.mxu0
  %3734 = vrot.lane.b32.xlu0 %v473, 104
  %v3735 = vpop.permute.xlu0 %3734
  %3736 = vrot.lane.b32.xlu0 %v481, 72
  %v3737 = vpop.permute.xlu0 %3736
  %v3739 = vsel %vm491, %v3735, 0
  %v3742 = vsel %vm491, %v3737, 0
  %3744 = vmatprep.subr.bf16.mxu0 0
  %3745 = vmatpush1.bf16.xpose.msra.mxu0 %v3742
  %3746 = vmatprep.subr.bf16.mxu0 0
  %3747 = vmatpush1.bf16.xpose.msra.mxu0 0
  %3748 = vmatprep.subr.bf16.mxu0 0
  %3749 = vmatpush1.bf16.xpose.msra.mxu0 0
  %3750 = vmatprep.subr.bf16.mxu0 0
  %3751 = vmatpush1.bf16.xpose.msra.mxu0 0
  %3752 = vmatprep.subr.bf16.mxu0 0
  %3753 = vmatpush1.bf16.xpose.msra.mxu0 0
  %3754 = vmatprep.subr.bf16.mxu0 0
  %3755 = vmatpush1.bf16.xpose.msra.mxu0 0
  %3756 = vmatprep.subr.bf16.mxu0 0
  %3757 = vmatpush1.bf16.xpose.msra.mxu0 0
  %3758 = vmatprep.subr.bf16.mxu0 0
  %3759 = vmatpush1.bf16.xpose.msra.mxu0 0
  %3760 = vmatprep.subr.bf16.mxu0 0
  %3761 = vmatpush1.bf16.xpose.msra.mxu0 0
  %3762 = vmatprep.subr.bf16.mxu0 0
  %3763 = vmatpush1.bf16.xpose.msra.mxu0 0
  %3764 = vmatprep.subr.bf16.mxu0 0
  %3765 = vmatpush1.bf16.xpose.msra.mxu0 0
  %3766 = vmatprep.subr.bf16.mxu0 0
  %3767 = vmatpush1.bf16.xpose.msra.mxu0 0
  %3768 = vmatprep.subr.bf16.mxu0 0
  %3769 = vmatpush1.bf16.xpose.msra.mxu0 0
  %3770 = vmatprep.subr.bf16.mxu0 0
  %3771 = vmatpush1.bf16.xpose.msra.mxu0 0
  %3772 = vmatprep.subr.bf16.mxu0 0
  %3773 = vmatpush1.bf16.xpose.msra.mxu0 0
  %3774 = vmatprep.subr.bf16.mxu0 0
  %3775 = vmatpush1.bf16.xpose.msra.mxu0 0
  %3776 = vmatprep.mubr.bf16.mxu0 0
  %3777 = vmatmul.mubr.bf16.gmra.mrb[0].mxu0 %v3739
  %v3778 = vpop.f32.mrb[0].mxu0
  %v3779 = vadd.f32 %v3579, %v3778
  %v3780 = vpop.f32.mrb[0].mxu0
  %v3781 = vpop.f32.mrb[0].mxu0
  %v3782 = vadd.f32 %v3580, %v3781
  %v3783 = vpop.f32.mrb[0].mxu0
  %3784 = vdwg.mxu0
  %3785 = vrot.lane.b32.xlu0 %v474, 104
  %v3786 = vpop.permute.xlu0 %3785
  %3787 = vrot.lane.b32.xlu0 %v482, 72
  %v3788 = vpop.permute.xlu0 %3787
  %v3790 = vsel %vm491, %v3786, 0
  %v3793 = vsel %vm491, %v3788, 0
  %3795 = vmatprep.subr.bf16.mxu0 0
  %3796 = vmatpush1.bf16.xpose.msra.mxu0 %v3793
  %3797 = vmatprep.subr.bf16.mxu0 0
  %3798 = vmatpush1.bf16.xpose.msra.mxu0 0
  %3799 = vmatprep.subr.bf16.mxu0 0
  %3800 = vmatpush1.bf16.xpose.msra.mxu0 0
  %3801 = vmatprep.subr.bf16.mxu0 0
  %3802 = vmatpush1.bf16.xpose.msra.mxu0 0
  %3803 = vmatprep.subr.bf16.mxu0 0
  %3804 = vmatpush1.bf16.xpose.msra.mxu0 0
  %3805 = vmatprep.subr.bf16.mxu0 0
  %3806 = vmatpush1.bf16.xpose.msra.mxu0 0
  %3807 = vmatprep.subr.bf16.mxu0 0
  %3808 = vmatpush1.bf16.xpose.msra.mxu0 0
  %3809 = vmatprep.subr.bf16.mxu0 0
  %3810 = vmatpush1.bf16.xpose.msra.mxu0 0
  %3811 = vmatprep.subr.bf16.mxu0 0
  %3812 = vmatpush1.bf16.xpose.msra.mxu0 0
  %3813 = vmatprep.subr.bf16.mxu0 0
  %3814 = vmatpush1.bf16.xpose.msra.mxu0 0
  %3815 = vmatprep.subr.bf16.mxu0 0
  %3816 = vmatpush1.bf16.xpose.msra.mxu0 0
  %3817 = vmatprep.subr.bf16.mxu0 0
  %3818 = vmatpush1.bf16.xpose.msra.mxu0 0
  %3819 = vmatprep.subr.bf16.mxu0 0
  %3820 = vmatpush1.bf16.xpose.msra.mxu0 0
  %3821 = vmatprep.subr.bf16.mxu0 0
  %3822 = vmatpush1.bf16.xpose.msra.mxu0 0
  %3823 = vmatprep.subr.bf16.mxu0 0
  %3824 = vmatpush1.bf16.xpose.msra.mxu0 0
  %3825 = vmatprep.subr.bf16.mxu0 0
  %3826 = vmatpush1.bf16.xpose.msra.mxu0 0
  %3827 = vmatprep.mubr.bf16.mxu0 0
  %3828 = vmatmul.mubr.bf16.gmra.mrb[0].mxu0 %v3790
  %v3829 = vpop.f32.mrb[0].mxu0
  %v3830 = vadd.f32 %v3579, %v3829
  %v3831 = vpop.f32.mrb[0].mxu0
  %v3832 = vpop.f32.mrb[0].mxu0
  %v3833 = vadd.f32 %v3580, %v3832
  %v3834 = vpop.f32.mrb[0].mxu0
  %3835 = vdwg.mxu0
  %3836 = vrot.lane.b32.xlu0 %v475, 104
  %v3837 = vpop.permute.xlu0 %3836
  %3838 = vrot.lane.b32.xlu0 %v483, 72
  %v3839 = vpop.permute.xlu0 %3838
  %v3841 = vsel %vm491, %v3837, 0
  %v3844 = vsel %vm491, %v3839, 0
  %3846 = vmatprep.subr.bf16.mxu0 0
  %3847 = vmatpush1.bf16.xpose.msra.mxu0 %v3844
  %3848 = vmatprep.subr.bf16.mxu0 0
  %3849 = vmatpush1.bf16.xpose.msra.mxu0 0
  %3850 = vmatprep.subr.bf16.mxu0 0
  %3851 = vmatpush1.bf16.xpose.msra.mxu0 0
  %3852 = vmatprep.subr.bf16.mxu0 0
  %3853 = vmatpush1.bf16.xpose.msra.mxu0 0
  %3854 = vmatprep.subr.bf16.mxu0 0
  %3855 = vmatpush1.bf16.xpose.msra.mxu0 0
  %3856 = vmatprep.subr.bf16.mxu0 0
  %3857 = vmatpush1.bf16.xpose.msra.mxu0 0
  %3858 = vmatprep.subr.bf16.mxu0 0
  %3859 = vmatpush1.bf16.xpose.msra.mxu0 0
  %3860 = vmatprep.subr.bf16.mxu0 0
  %3861 = vmatpush1.bf16.xpose.msra.mxu0 0
  %3862 = vmatprep.subr.bf16.mxu0 0
  %3863 = vmatpush1.bf16.xpose.msra.mxu0 0
  %3864 = vmatprep.subr.bf16.mxu0 0
  %3865 = vmatpush1.bf16.xpose.msra.mxu0 0
  %3866 = vmatprep.subr.bf16.mxu0 0
  %3867 = vmatpush1.bf16.xpose.msra.mxu0 0
  %3868 = vmatprep.subr.bf16.mxu0 0
  %3869 = vmatpush1.bf16.xpose.msra.mxu0 0
  %3870 = vmatprep.subr.bf16.mxu0 0
  %3871 = vmatpush1.bf16.xpose.msra.mxu0 0
  %3872 = vmatprep.subr.bf16.mxu0 0
  %3873 = vmatpush1.bf16.xpose.msra.mxu0 0
  %3874 = vmatprep.subr.bf16.mxu0 0
  %3875 = vmatpush1.bf16.xpose.msra.mxu0 0
  %3876 = vmatprep.subr.bf16.mxu0 0
  %3877 = vmatpush1.bf16.xpose.msra.mxu0 0
  %3878 = vmatprep.mubr.bf16.mxu0 0
  %3879 = vmatmul.mubr.bf16.gmra.mrb[0].mxu0 %v3841
  %v3880 = vpop.f32.mrb[0].mxu0
  %v3881 = vadd.f32 %v3579, %v3880
  %v3882 = vpop.f32.mrb[0].mxu0
  %v3883 = vpop.f32.mrb[0].mxu0
  %v3884 = vadd.f32 %v3580, %v3883
  %v3885 = vpop.f32.mrb[0].mxu0
  %3886 = vdwg.mxu0
  %3887 = vrot.lane.b32.xlu0 %v476, 104
  %v3888 = vpop.permute.xlu0 %3887
  %3889 = vrot.lane.b32.xlu0 %v484, 72
  %v3890 = vpop.permute.xlu0 %3889
  %v3892 = vsel %vm491, %v3888, 0
  %v3895 = vsel %vm491, %v3890, 0
  %3897 = vmatprep.subr.bf16.mxu0 0
  %3898 = vmatpush1.bf16.xpose.msra.mxu0 %v3895
  %3899 = vmatprep.subr.bf16.mxu0 0
  %3900 = vmatpush1.bf16.xpose.msra.mxu0 0
  %3901 = vmatprep.subr.bf16.mxu0 0
  %3902 = vmatpush1.bf16.xpose.msra.mxu0 0
  %3903 = vmatprep.subr.bf16.mxu0 0
  %3904 = vmatpush1.bf16.xpose.msra.mxu0 0
  %3905 = vmatprep.subr.bf16.mxu0 0
  %3906 = vmatpush1.bf16.xpose.msra.mxu0 0
  %3907 = vmatprep.subr.bf16.mxu0 0
  %3908 = vmatpush1.bf16.xpose.msra.mxu0 0
  %3909 = vmatprep.subr.bf16.mxu0 0
  %3910 = vmatpush1.bf16.xpose.msra.mxu0 0
  %3911 = vmatprep.subr.bf16.mxu0 0
  %3912 = vmatpush1.bf16.xpose.msra.mxu0 0
  %3913 = vmatprep.subr.bf16.mxu0 0
  %3914 = vmatpush1.bf16.xpose.msra.mxu0 0
  %3915 = vmatprep.subr.bf16.mxu0 0
  %3916 = vmatpush1.bf16.xpose.msra.mxu0 0
  %3917 = vmatprep.subr.bf16.mxu0 0
  %3918 = vmatpush1.bf16.xpose.msra.mxu0 0
  %3919 = vmatprep.subr.bf16.mxu0 0
  %3920 = vmatpush1.bf16.xpose.msra.mxu0 0
  %3921 = vmatprep.subr.bf16.mxu0 0
  %3922 = vmatpush1.bf16.xpose.msra.mxu0 0
  %3923 = vmatprep.subr.bf16.mxu0 0
  %3924 = vmatpush1.bf16.xpose.msra.mxu0 0
  %3925 = vmatprep.subr.bf16.mxu0 0
  %3926 = vmatpush1.bf16.xpose.msra.mxu0 0
  %3927 = vmatprep.subr.bf16.mxu0 0
  %3928 = vmatpush1.bf16.xpose.msra.mxu0 0
  %3929 = vmatprep.mubr.bf16.mxu0 0
  %3930 = vmatmul.mubr.bf16.gmra.mrb[0].mxu0 %v3892
  %v3931 = vpop.f32.mrb[0].mxu0
  %v3932 = vadd.f32 %v3579, %v3931
  %v3933 = vpop.f32.mrb[0].mxu0
  %v3934 = vpop.f32.mrb[0].mxu0
  %v3935 = vadd.f32 %v3580, %v3934
  %v3936 = vpop.f32.mrb[0].mxu0
  %3937 = vdwg.mxu0
  %3938 = vrot.lane.b32.xlu0 %v477, 104
  %v3939 = vpop.permute.xlu0 %3938
  %3940 = vrot.lane.b32.xlu0 %v485, 72
  %v3941 = vpop.permute.xlu0 %3940
  %v3943 = vsel %vm491, %v3939, 0
  %v3946 = vsel %vm491, %v3941, 0
  %3948 = vmatprep.subr.bf16.mxu0 0
  %3949 = vmatpush1.bf16.xpose.msra.mxu0 %v3946
  %3950 = vmatprep.subr.bf16.mxu0 0
  %3951 = vmatpush1.bf16.xpose.msra.mxu0 0
  %3952 = vmatprep.subr.bf16.mxu0 0
  %3953 = vmatpush1.bf16.xpose.msra.mxu0 0
  %3954 = vmatprep.subr.bf16.mxu0 0
  %3955 = vmatpush1.bf16.xpose.msra.mxu0 0
  %3956 = vmatprep.subr.bf16.mxu0 0
  %3957 = vmatpush1.bf16.xpose.msra.mxu0 0
  %3958 = vmatprep.subr.bf16.mxu0 0
  %3959 = vmatpush1.bf16.xpose.msra.mxu0 0
  %3960 = vmatprep.subr.bf16.mxu0 0
  %3961 = vmatpush1.bf16.xpose.msra.mxu0 0
  %3962 = vmatprep.subr.bf16.mxu0 0
  %3963 = vmatpush1.bf16.xpose.msra.mxu0 0
  %3964 = vmatprep.subr.bf16.mxu0 0
  %3965 = vmatpush1.bf16.xpose.msra.mxu0 0
  %3966 = vmatprep.subr.bf16.mxu0 0
  %3967 = vmatpush1.bf16.xpose.msra.mxu0 0
  %3968 = vmatprep.subr.bf16.mxu0 0
  %3969 = vmatpush1.bf16.xpose.msra.mxu0 0
  %3970 = vmatprep.subr.bf16.mxu0 0
  %3971 = vmatpush1.bf16.xpose.msra.mxu0 0
  %3972 = vmatprep.subr.bf16.mxu0 0
  %3973 = vmatpush1.bf16.xpose.msra.mxu0 0
  %3974 = vmatprep.subr.bf16.mxu0 0
  %3975 = vmatpush1.bf16.xpose.msra.mxu0 0
  %3976 = vmatprep.subr.bf16.mxu0 0
  %3977 = vmatpush1.bf16.xpose.msra.mxu0 0
  %3978 = vmatprep.subr.bf16.mxu0 0
  %3979 = vmatpush1.bf16.xpose.msra.mxu0 0
  %3980 = vmatprep.mubr.bf16.mxu0 0
  %3981 = vmatmul.mubr.bf16.gmra.mrb[0].mxu0 %v3943
  %v3982 = vpop.f32.mrb[0].mxu0
  %v3983 = vadd.f32 %v3579, %v3982
  %v3984 = vpop.f32.mrb[0].mxu0
  %v3985 = vpop.f32.mrb[0].mxu0
  %v3986 = vadd.f32 %v3580, %v3985
  %v3987 = vpop.f32.mrb[0].mxu0
  %3988 = vdwg.mxu0
  %v3989 = vsel %vm889, %v3626, -inf
  %3990 = vmax.xlane.f32.xlu0 %v3989
  %v3991 = vpop.xlane.xlu0 %3990
  %v3992 = vsel %vm889, %v3629, -inf
  %3993 = vmax.xlane.f32.xlu0 %v3992
  %v3994 = vpop.xlane.xlu0 %3993
  %v3995 = vsel %vm889, %v3677, -inf
  %3996 = vmax.xlane.f32.xlu0 %v3995
  %v3997 = vpop.xlane.xlu0 %3996
  %v3998 = vsel %vm889, %v3680, -inf
  %3999 = vmax.xlane.f32.xlu0 %v3998
  %v4000 = vpop.xlane.xlu0 %3999
  %v4001 = vsel %vm889, %v3728, -inf
  %4002 = vmax.xlane.f32.xlu0 %v4001
  %v4003 = vpop.xlane.xlu0 %4002
  %v4004 = vsel %vm889, %v3731, -inf
  %4005 = vmax.xlane.f32.xlu0 %v4004
  %v4006 = vpop.xlane.xlu0 %4005
  %v4007 = vsel %vm889, %v3779, -inf
  %4008 = vmax.xlane.f32.xlu0 %v4007
  %v4009 = vpop.xlane.xlu0 %4008
  %v4010 = vsel %vm889, %v3782, -inf
  %4011 = vmax.xlane.f32.xlu0 %v4010
  %v4012 = vpop.xlane.xlu0 %4011
  %v4013 = vsel %vm889, %v3830, -inf
  %4014 = vmax.xlane.f32.xlu0 %v4013
  %v4015 = vpop.xlane.xlu0 %4014
  %v4016 = vsel %vm889, %v3833, -inf
  %4017 = vmax.xlane.f32.xlu0 %v4016
  %v4018 = vpop.xlane.xlu0 %4017
  %v4019 = vsel %vm889, %v3881, -inf
  %4020 = vmax.xlane.f32.xlu0 %v4019
  %v4021 = vpop.xlane.xlu0 %4020
  %v4022 = vsel %vm889, %v3884, -inf
  %4023 = vmax.xlane.f32.xlu0 %v4022
  %v4024 = vpop.xlane.xlu0 %4023
  %v4025 = vsel %vm889, %v3932, -inf
  %4026 = vmax.xlane.f32.xlu0 %v4025
  %v4027 = vpop.xlane.xlu0 %4026
  %v4028 = vsel %vm889, %v3935, -inf
  %4029 = vmax.xlane.f32.xlu0 %v4028
  %v4030 = vpop.xlane.xlu0 %4029
  %v4031 = vsel %vm889, %v3983, -inf
  %4032 = vmax.xlane.f32.xlu0 %v4031
  %v4033 = vpop.xlane.xlu0 %4032
  %v4034 = vsel %vm889, %v3986, -inf
  %4035 = vmax.xlane.f32.xlu0 %v4034
  %v4036 = vpop.xlane.xlu0 %4035
  %v4037 = vsub.f32 %v3626, %v3991
  %v4038 = vsub.f32 %v3629, %v3994
  %v4039 = vsub.f32 %v3677, %v3997
  %v4040 = vsub.f32 %v3680, %v4000
  %v4041 = vsub.f32 %v3728, %v4003
  %v4042 = vsub.f32 %v3731, %v4006
  %v4043 = vsub.f32 %v3779, %v4009
  %v4044 = vsub.f32 %v3782, %v4012
  %v4045 = vsub.f32 %v3830, %v4015
  %v4046 = vsub.f32 %v3833, %v4018
  %v4047 = vsub.f32 %v3881, %v4021
  %v4048 = vsub.f32 %v3884, %v4024
  %v4049 = vsub.f32 %v3932, %v4027
  %v4050 = vsub.f32 %v3935, %v4030
  %v4051 = vsub.f32 %v3983, %v4033
  %v4052 = vsub.f32 %v3986, %v4036
  %v4053 = vmul.f32 %v4037, 1.442695
  %v4054 = vpow.pop %v4053
  %v4055 = vmul.f32 %v4038, 1.442695
  %v4056 = vpow.pop %v4055
  %v4057 = vmul.f32 %v4039, 1.442695
  %v4058 = vpow.pop %v4057
  %v4059 = vmul.f32 %v4040, 1.442695
  %v4060 = vpow.pop %v4059
  %v4061 = vmul.f32 %v4041, 1.442695
  %v4062 = vpow.pop %v4061
  %v4063 = vmul.f32 %v4042, 1.442695
  %v4064 = vpow.pop %v4063
  %v4065 = vmul.f32 %v4043, 1.442695
  %v4066 = vpow.pop %v4065
  %v4067 = vmul.f32 %v4044, 1.442695
  %v4068 = vpow.pop %v4067
  %v4069 = vmul.f32 %v4045, 1.442695
  %v4070 = vpow.pop %v4069
  %v4071 = vmul.f32 %v4046, 1.442695
  %v4072 = vpow.pop %v4071
  %v4073 = vmul.f32 %v4047, 1.442695
  %v4074 = vpow.pop %v4073
  %v4075 = vmul.f32 %v4048, 1.442695
  %v4076 = vpow.pop %v4075
  %v4077 = vmul.f32 %v4049, 1.442695
  %v4078 = vpow.pop %v4077
  %v4079 = vmul.f32 %v4050, 1.442695
  %v4080 = vpow.pop %v4079
  %v4081 = vmul.f32 %v4051, 1.442695
  %v4082 = vpow.pop %v4081
  %v4083 = vmul.f32 %v4052, 1.442695
  %v4084 = vpow.pop %v4083
  %v4085 = vsel %vm889, %v4054, 0.0
  %4086 = vadd.xlane.f32.xlu0 %v4085
  %v4087 = vpop.xlane.xlu0 %4086
  %v4088 = vsel %vm889, %v4056, 0.0
  %4089 = vadd.xlane.f32.xlu0 %v4088
  %v4090 = vpop.xlane.xlu0 %4089
  %v4091 = vsel %vm889, %v4058, 0.0
  %4092 = vadd.xlane.f32.xlu0 %v4091
  %v4093 = vpop.xlane.xlu0 %4092
  %v4094 = vsel %vm889, %v4060, 0.0
  %4095 = vadd.xlane.f32.xlu0 %v4094
  %v4096 = vpop.xlane.xlu0 %4095
  %v4097 = vsel %vm889, %v4062, 0.0
  %4098 = vadd.xlane.f32.xlu0 %v4097
  %v4099 = vpop.xlane.xlu0 %4098
  %v4100 = vsel %vm889, %v4064, 0.0
  %4101 = vadd.xlane.f32.xlu0 %v4100
  %v4102 = vpop.xlane.xlu0 %4101
  %v4103 = vsel %vm889, %v4066, 0.0
  %4104 = vadd.xlane.f32.xlu0 %v4103
  %v4105 = vpop.xlane.xlu0 %4104
  %v4106 = vsel %vm889, %v4068, 0.0
  %4107 = vadd.xlane.f32.xlu0 %v4106
  %v4108 = vpop.xlane.xlu0 %4107
  %v4109 = vsel %vm889, %v4070, 0.0
  %4110 = vadd.xlane.f32.xlu0 %v4109
  %v4111 = vpop.xlane.xlu0 %4110
  %v4112 = vsel %vm889, %v4072, 0.0
  %4113 = vadd.xlane.f32.xlu0 %v4112
  %v4114 = vpop.xlane.xlu0 %4113
  %v4115 = vsel %vm889, %v4074, 0.0
  %4116 = vadd.xlane.f32.xlu0 %v4115
  %v4117 = vpop.xlane.xlu0 %4116
  %v4118 = vsel %vm889, %v4076, 0.0
  %4119 = vadd.xlane.f32.xlu0 %v4118
  %v4120 = vpop.xlane.xlu0 %4119
  %v4121 = vsel %vm889, %v4078, 0.0
  %4122 = vadd.xlane.f32.xlu0 %v4121
  %v4123 = vpop.xlane.xlu0 %4122
  %v4124 = vsel %vm889, %v4080, 0.0
  %4125 = vadd.xlane.f32.xlu0 %v4124
  %v4126 = vpop.xlane.xlu0 %4125
  %v4127 = vsel %vm889, %v4082, 0.0
  %4128 = vadd.xlane.f32.xlu0 %v4127
  %v4129 = vpop.xlane.xlu0 %4128
  %v4130 = vsel %vm889, %v4084, 0.0
  %4131 = vadd.xlane.f32.xlu0 %v4130
  %v4132 = vpop.xlane.xlu0 %4131
  %v4133 = vrcp.pop %v4087
  %v4134 = vrcp.pop %v4090
  %v4135 = vrcp.pop %v4093
  %v4136 = vrcp.pop %v4096
  %v4137 = vrcp.pop %v4099
  %v4138 = vrcp.pop %v4102
  %v4139 = vrcp.pop %v4105
  %v4140 = vrcp.pop %v4108
  %v4141 = vrcp.pop %v4111
  %v4142 = vrcp.pop %v4114
  %v4143 = vrcp.pop %v4117
  %v4144 = vrcp.pop %v4120
  %v4145 = vrcp.pop %v4123
  %v4146 = vrcp.pop %v4126
  %v4147 = vrcp.pop %v4129
  %v4148 = vrcp.pop %v4132
  %v4149 = vmul.f32 %v4054, %v4133
  %v4150 = vmul.f32 %v4056, %v4134
  %v4151 = vmul.f32 %v4058, %v4135
  %v4152 = vmul.f32 %v4060, %v4136
  %v4153 = vmul.f32 %v4062, %v4137
  %v4154 = vmul.f32 %v4064, %v4138
  %v4155 = vmul.f32 %v4066, %v4139
  %v4156 = vmul.f32 %v4068, %v4140
  %v4157 = vmul.f32 %v4070, %v4141
  %v4158 = vmul.f32 %v4072, %v4142
  %v4159 = vmul.f32 %v4074, %v4143
  %v4160 = vmul.f32 %v4076, %v4144
  %v4161 = vmul.f32 %v4078, %v4145
  %v4162 = vmul.f32 %v4080, %v4146
  %v4163 = vmul.f32 %v4082, %v4147
  %v4164 = vmul.f32 %v4084, %v4148
  %v4165 = vpack.c.bf16 %v4150, %v4149
  %v4166 = vpack.c.bf16 %v4152, %v4151
  %v4167 = vpack.c.bf16 %v4154, %v4153
  %v4168 = vpack.c.bf16 %v4156, %v4155
  %v4169 = vpack.c.bf16 %v4158, %v4157
  %v4170 = vpack.c.bf16 %v4160, %v4159
  %v4171 = vpack.c.bf16 %v4162, %v4161
  %v4172 = vpack.c.bf16 %v4164, %v4163
  %4173 = vrot.lane.b32.xlu0 %v478, 40
  %v4174 = vpop.permute.xlu0 %4173
  %v4177 = vsel %vm889, %v4165, 0
  %4179 = vmatprep.subr.bf16.mxu0 0
  %4180 = vmatpush1.bf16.msra.mxu0 %v4174
  %4181 = vmatprep.subr.bf16.mxu0 0
  %4182 = vmatpush1.bf16.msra.mxu0 0
  %4183 = vmatprep.subr.bf16.mxu0 0
  %4184 = vmatpush1.bf16.msra.mxu0 0
  %4185 = vmatprep.subr.bf16.mxu0 0
  %4186 = vmatpush1.bf16.msra.mxu0 0
  %4187 = vmatprep.subr.bf16.mxu0 0
  %4188 = vmatpush1.bf16.msra.mxu0 0
  %4189 = vmatprep.subr.bf16.mxu0 0
  %4190 = vmatpush1.bf16.msra.mxu0 0
  %4191 = vmatprep.subr.bf16.mxu0 0
  %4192 = vmatpush1.bf16.msra.mxu0 0
  %4193 = vmatprep.subr.bf16.mxu0 0
  %4194 = vmatpush1.bf16.msra.mxu0 0
  %4195 = vmatprep.subr.bf16.mxu0 0
  %4196 = vmatpush1.bf16.msra.mxu0 0
  %4197 = vmatprep.subr.bf16.mxu0 0
  %4198 = vmatpush1.bf16.msra.mxu0 0
  %4199 = vmatprep.subr.bf16.mxu0 0
  %4200 = vmatpush1.bf16.msra.mxu0 0
  %4201 = vmatprep.subr.bf16.mxu0 0
  %4202 = vmatpush1.bf16.msra.mxu0 0
  %4203 = vmatprep.subr.bf16.mxu0 0
  %4204 = vmatpush1.bf16.msra.mxu0 0
  %4205 = vmatprep.subr.bf16.mxu0 0
  %4206 = vmatpush1.bf16.msra.mxu0 0
  %4207 = vmatprep.subr.bf16.mxu0 0
  %4208 = vmatpush1.bf16.msra.mxu0 0
  %4209 = vmatprep.subr.bf16.mxu0 0
  %4210 = vmatpush1.bf16.msra.mxu0 0
  %4211 = vmatprep.mubr.bf16.mxu0 0
  %4212 = vmatmul.mubr.bf16.gmra.mrb[0].mxu0 %v4177
  %v4213 = vpop.f32.mrb[0].mxu0
  %v4214 = vadd.f32 0.0, %v4213
  %v4215 = vpop.f32.mrb[0].mxu0
  %v4216 = vpop.f32.mrb[0].mxu0
  %v4217 = vadd.f32 0.0, %v4216
  %v4218 = vpop.f32.mrb[0].mxu0
  %4219 = vdwg.mxu0
  %4220 = vrot.lane.b32.xlu0 %v479, 40
  %v4221 = vpop.permute.xlu0 %4220
  %v4224 = vsel %vm889, %v4166, 0
  %4226 = vmatprep.subr.bf16.mxu0 0
  %4227 = vmatpush1.bf16.msra.mxu0 %v4221
  %4228 = vmatprep.subr.bf16.mxu0 0
  %4229 = vmatpush1.bf16.msra.mxu0 0
  %4230 = vmatprep.subr.bf16.mxu0 0
  %4231 = vmatpush1.bf16.msra.mxu0 0
  %4232 = vmatprep.subr.bf16.mxu0 0
  %4233 = vmatpush1.bf16.msra.mxu0 0
  %4234 = vmatprep.subr.bf16.mxu0 0
  %4235 = vmatpush1.bf16.msra.mxu0 0
  %4236 = vmatprep.subr.bf16.mxu0 0
  %4237 = vmatpush1.bf16.msra.mxu0 0
  %4238 = vmatprep.subr.bf16.mxu0 0
  %4239 = vmatpush1.bf16.msra.mxu0 0
  %4240 = vmatprep.subr.bf16.mxu0 0
  %4241 = vmatpush1.bf16.msra.mxu0 0
  %4242 = vmatprep.subr.bf16.mxu0 0
  %4243 = vmatpush1.bf16.msra.mxu0 0
  %4244 = vmatprep.subr.bf16.mxu0 0
  %4245 = vmatpush1.bf16.msra.mxu0 0
  %4246 = vmatprep.subr.bf16.mxu0 0
  %4247 = vmatpush1.bf16.msra.mxu0 0
  %4248 = vmatprep.subr.bf16.mxu0 0
  %4249 = vmatpush1.bf16.msra.mxu0 0
  %4250 = vmatprep.subr.bf16.mxu0 0
  %4251 = vmatpush1.bf16.msra.mxu0 0
  %4252 = vmatprep.subr.bf16.mxu0 0
  %4253 = vmatpush1.bf16.msra.mxu0 0
  %4254 = vmatprep.subr.bf16.mxu0 0
  %4255 = vmatpush1.bf16.msra.mxu0 0
  %4256 = vmatprep.subr.bf16.mxu0 0
  %4257 = vmatpush1.bf16.msra.mxu0 0
  %4258 = vmatprep.mubr.bf16.mxu0 0
  %4259 = vmatmul.mubr.bf16.gmra.mrb[0].mxu0 %v4224
  %v4260 = vpop.f32.mrb[0].mxu0
  %v4261 = vadd.f32 0.0, %v4260
  %v4262 = vpop.f32.mrb[0].mxu0
  %v4263 = vpop.f32.mrb[0].mxu0
  %v4264 = vadd.f32 0.0, %v4263
  %v4265 = vpop.f32.mrb[0].mxu0
  %4266 = vdwg.mxu0
  %4267 = vrot.lane.b32.xlu0 %v480, 40
  %v4268 = vpop.permute.xlu0 %4267
  %v4271 = vsel %vm889, %v4167, 0
  %4273 = vmatprep.subr.bf16.mxu0 0
  %4274 = vmatpush1.bf16.msra.mxu0 %v4268
  %4275 = vmatprep.subr.bf16.mxu0 0
  %4276 = vmatpush1.bf16.msra.mxu0 0
  %4277 = vmatprep.subr.bf16.mxu0 0
  %4278 = vmatpush1.bf16.msra.mxu0 0
  %4279 = vmatprep.subr.bf16.mxu0 0
  %4280 = vmatpush1.bf16.msra.mxu0 0
  %4281 = vmatprep.subr.bf16.mxu0 0
  %4282 = vmatpush1.bf16.msra.mxu0 0
  %4283 = vmatprep.subr.bf16.mxu0 0
  %4284 = vmatpush1.bf16.msra.mxu0 0
  %4285 = vmatprep.subr.bf16.mxu0 0
  %4286 = vmatpush1.bf16.msra.mxu0 0
  %4287 = vmatprep.subr.bf16.mxu0 0
  %4288 = vmatpush1.bf16.msra.mxu0 0
  %4289 = vmatprep.subr.bf16.mxu0 0
  %4290 = vmatpush1.bf16.msra.mxu0 0
  %4291 = vmatprep.subr.bf16.mxu0 0
  %4292 = vmatpush1.bf16.msra.mxu0 0
  %4293 = vmatprep.subr.bf16.mxu0 0
  %4294 = vmatpush1.bf16.msra.mxu0 0
  %4295 = vmatprep.subr.bf16.mxu0 0
  %4296 = vmatpush1.bf16.msra.mxu0 0
  %4297 = vmatprep.subr.bf16.mxu0 0
  %4298 = vmatpush1.bf16.msra.mxu0 0
  %4299 = vmatprep.subr.bf16.mxu0 0
  %4300 = vmatpush1.bf16.msra.mxu0 0
  %4301 = vmatprep.subr.bf16.mxu0 0
  %4302 = vmatpush1.bf16.msra.mxu0 0
  %4303 = vmatprep.subr.bf16.mxu0 0
  %4304 = vmatpush1.bf16.msra.mxu0 0
  %4305 = vmatprep.mubr.bf16.mxu0 0
  %4306 = vmatmul.mubr.bf16.gmra.mrb[0].mxu0 %v4271
  %v4307 = vpop.f32.mrb[0].mxu0
  %v4308 = vadd.f32 0.0, %v4307
  %v4309 = vpop.f32.mrb[0].mxu0
  %v4310 = vpop.f32.mrb[0].mxu0
  %v4311 = vadd.f32 0.0, %v4310
  %v4312 = vpop.f32.mrb[0].mxu0
  %4313 = vdwg.mxu0
  %4314 = vrot.lane.b32.xlu0 %v481, 40
  %v4315 = vpop.permute.xlu0 %4314
  %v4318 = vsel %vm889, %v4168, 0
  %4320 = vmatprep.subr.bf16.mxu0 0
  %4321 = vmatpush1.bf16.msra.mxu0 %v4315
  %4322 = vmatprep.subr.bf16.mxu0 0
  %4323 = vmatpush1.bf16.msra.mxu0 0
  %4324 = vmatprep.subr.bf16.mxu0 0
  %4325 = vmatpush1.bf16.msra.mxu0 0
  %4326 = vmatprep.subr.bf16.mxu0 0
  %4327 = vmatpush1.bf16.msra.mxu0 0
  %4328 = vmatprep.subr.bf16.mxu0 0
  %4329 = vmatpush1.bf16.msra.mxu0 0
  %4330 = vmatprep.subr.bf16.mxu0 0
  %4331 = vmatpush1.bf16.msra.mxu0 0
  %4332 = vmatprep.subr.bf16.mxu0 0
  %4333 = vmatpush1.bf16.msra.mxu0 0
  %4334 = vmatprep.subr.bf16.mxu0 0
  %4335 = vmatpush1.bf16.msra.mxu0 0
  %4336 = vmatprep.subr.bf16.mxu0 0
  %4337 = vmatpush1.bf16.msra.mxu0 0
  %4338 = vmatprep.subr.bf16.mxu0 0
  %4339 = vmatpush1.bf16.msra.mxu0 0
  %4340 = vmatprep.subr.bf16.mxu0 0
  %4341 = vmatpush1.bf16.msra.mxu0 0
  %4342 = vmatprep.subr.bf16.mxu0 0
  %4343 = vmatpush1.bf16.msra.mxu0 0
  %4344 = vmatprep.subr.bf16.mxu0 0
  %4345 = vmatpush1.bf16.msra.mxu0 0
  %4346 = vmatprep.subr.bf16.mxu0 0
  %4347 = vmatpush1.bf16.msra.mxu0 0
  %4348 = vmatprep.subr.bf16.mxu0 0
  %4349 = vmatpush1.bf16.msra.mxu0 0
  %4350 = vmatprep.subr.bf16.mxu0 0
  %4351 = vmatpush1.bf16.msra.mxu0 0
  %4352 = vmatprep.mubr.bf16.mxu0 0
  %4353 = vmatmul.mubr.bf16.gmra.mrb[0].mxu0 %v4318
  %v4354 = vpop.f32.mrb[0].mxu0
  %v4355 = vadd.f32 0.0, %v4354
  %v4356 = vpop.f32.mrb[0].mxu0
  %v4357 = vpop.f32.mrb[0].mxu0
  %v4358 = vadd.f32 0.0, %v4357
  %v4359 = vpop.f32.mrb[0].mxu0
  %4360 = vdwg.mxu0
  %4361 = vrot.lane.b32.xlu0 %v482, 40
  %v4362 = vpop.permute.xlu0 %4361
  %v4365 = vsel %vm889, %v4169, 0
  %4367 = vmatprep.subr.bf16.mxu0 0
  %4368 = vmatpush1.bf16.msra.mxu0 %v4362
  %4369 = vmatprep.subr.bf16.mxu0 0
  %4370 = vmatpush1.bf16.msra.mxu0 0
  %4371 = vmatprep.subr.bf16.mxu0 0
  %4372 = vmatpush1.bf16.msra.mxu0 0
  %4373 = vmatprep.subr.bf16.mxu0 0
  %4374 = vmatpush1.bf16.msra.mxu0 0
  %4375 = vmatprep.subr.bf16.mxu0 0
  %4376 = vmatpush1.bf16.msra.mxu0 0
  %4377 = vmatprep.subr.bf16.mxu0 0
  %4378 = vmatpush1.bf16.msra.mxu0 0
  %4379 = vmatprep.subr.bf16.mxu0 0
  %4380 = vmatpush1.bf16.msra.mxu0 0
  %4381 = vmatprep.subr.bf16.mxu0 0
  %4382 = vmatpush1.bf16.msra.mxu0 0
  %4383 = vmatprep.subr.bf16.mxu0 0
  %4384 = vmatpush1.bf16.msra.mxu0 0
  %4385 = vmatprep.subr.bf16.mxu0 0
  %4386 = vmatpush1.bf16.msra.mxu0 0
  %4387 = vmatprep.subr.bf16.mxu0 0
  %4388 = vmatpush1.bf16.msra.mxu0 0
  %4389 = vmatprep.subr.bf16.mxu0 0
  %4390 = vmatpush1.bf16.msra.mxu0 0
  %4391 = vmatprep.subr.bf16.mxu0 0
  %4392 = vmatpush1.bf16.msra.mxu0 0
  %4393 = vmatprep.subr.bf16.mxu0 0
  %4394 = vmatpush1.bf16.msra.mxu0 0
  %4395 = vmatprep.subr.bf16.mxu0 0
  %4396 = vmatpush1.bf16.msra.mxu0 0
  %4397 = vmatprep.subr.bf16.mxu0 0
  %4398 = vmatpush1.bf16.msra.mxu0 0
  %4399 = vmatprep.mubr.bf16.mxu0 0
  %4400 = vmatmul.mubr.bf16.gmra.mrb[0].mxu0 %v4365
  %v4401 = vpop.f32.mrb[0].mxu0
  %v4402 = vadd.f32 0.0, %v4401
  %v4403 = vpop.f32.mrb[0].mxu0
  %v4404 = vpop.f32.mrb[0].mxu0
  %v4405 = vadd.f32 0.0, %v4404
  %v4406 = vpop.f32.mrb[0].mxu0
  %4407 = vdwg.mxu0
  %4408 = vrot.lane.b32.xlu0 %v483, 40
  %v4409 = vpop.permute.xlu0 %4408
  %v4412 = vsel %vm889, %v4170, 0
  %4414 = vmatprep.subr.bf16.mxu0 0
  %4415 = vmatpush1.bf16.msra.mxu0 %v4409
  %4416 = vmatprep.subr.bf16.mxu0 0
  %4417 = vmatpush1.bf16.msra.mxu0 0
  %4418 = vmatprep.subr.bf16.mxu0 0
  %4419 = vmatpush1.bf16.msra.mxu0 0
  %4420 = vmatprep.subr.bf16.mxu0 0
  %4421 = vmatpush1.bf16.msra.mxu0 0
  %4422 = vmatprep.subr.bf16.mxu0 0
  %4423 = vmatpush1.bf16.msra.mxu0 0
  %4424 = vmatprep.subr.bf16.mxu0 0
  %4425 = vmatpush1.bf16.msra.mxu0 0
  %4426 = vmatprep.subr.bf16.mxu0 0
  %4427 = vmatpush1.bf16.msra.mxu0 0
  %4428 = vmatprep.subr.bf16.mxu0 0
  %4429 = vmatpush1.bf16.msra.mxu0 0
  %4430 = vmatprep.subr.bf16.mxu0 0
  %4431 = vmatpush1.bf16.msra.mxu0 0
  %4432 = vmatprep.subr.bf16.mxu0 0
  %4433 = vmatpush1.bf16.msra.mxu0 0
  %4434 = vmatprep.subr.bf16.mxu0 0
  %4435 = vmatpush1.bf16.msra.mxu0 0
  %4436 = vmatprep.subr.bf16.mxu0 0
  %4437 = vmatpush1.bf16.msra.mxu0 0
  %4438 = vmatprep.subr.bf16.mxu0 0
  %4439 = vmatpush1.bf16.msra.mxu0 0
  %4440 = vmatprep.subr.bf16.mxu0 0
  %4441 = vmatpush1.bf16.msra.mxu0 0
  %4442 = vmatprep.subr.bf16.mxu0 0
  %4443 = vmatpush1.bf16.msra.mxu0 0
  %4444 = vmatprep.subr.bf16.mxu0 0
  %4445 = vmatpush1.bf16.msra.mxu0 0
  %4446 = vmatprep.mubr.bf16.mxu0 0
  %4447 = vmatmul.mubr.bf16.gmra.mrb[0].mxu0 %v4412
  %v4448 = vpop.f32.mrb[0].mxu0
  %v4449 = vadd.f32 0.0, %v4448
  %v4450 = vpop.f32.mrb[0].mxu0
  %v4451 = vpop.f32.mrb[0].mxu0
  %v4452 = vadd.f32 0.0, %v4451
  %v4453 = vpop.f32.mrb[0].mxu0
  %4454 = vdwg.mxu0
  %4455 = vrot.lane.b32.xlu0 %v484, 40
  %v4456 = vpop.permute.xlu0 %4455
  %v4459 = vsel %vm889, %v4171, 0
  %4461 = vmatprep.subr.bf16.mxu0 0
  %4462 = vmatpush1.bf16.msra.mxu0 %v4456
  %4463 = vmatprep.subr.bf16.mxu0 0
  %4464 = vmatpush1.bf16.msra.mxu0 0
  %4465 = vmatprep.subr.bf16.mxu0 0
  %4466 = vmatpush1.bf16.msra.mxu0 0
  %4467 = vmatprep.subr.bf16.mxu0 0
  %4468 = vmatpush1.bf16.msra.mxu0 0
  %4469 = vmatprep.subr.bf16.mxu0 0
  %4470 = vmatpush1.bf16.msra.mxu0 0
  %4471 = vmatprep.subr.bf16.mxu0 0
  %4472 = vmatpush1.bf16.msra.mxu0 0
  %4473 = vmatprep.subr.bf16.mxu0 0
  %4474 = vmatpush1.bf16.msra.mxu0 0
  %4475 = vmatprep.subr.bf16.mxu0 0
  %4476 = vmatpush1.bf16.msra.mxu0 0
  %4477 = vmatprep.subr.bf16.mxu0 0
  %4478 = vmatpush1.bf16.msra.mxu0 0
  %4479 = vmatprep.subr.bf16.mxu0 0
  %4480 = vmatpush1.bf16.msra.mxu0 0
  %4481 = vmatprep.subr.bf16.mxu0 0
  %4482 = vmatpush1.bf16.msra.mxu0 0
  %4483 = vmatprep.subr.bf16.mxu0 0
  %4484 = vmatpush1.bf16.msra.mxu0 0
  %4485 = vmatprep.subr.bf16.mxu0 0
  %4486 = vmatpush1.bf16.msra.mxu0 0
  %4487 = vmatprep.subr.bf16.mxu0 0
  %4488 = vmatpush1.bf16.msra.mxu0 0
  %4489 = vmatprep.subr.bf16.mxu0 0
  %4490 = vmatpush1.bf16.msra.mxu0 0
  %4491 = vmatprep.subr.bf16.mxu0 0
  %4492 = vmatpush1.bf16.msra.mxu0 0
  %4493 = vmatprep.mubr.bf16.mxu0 0
  %4494 = vmatmul.mubr.bf16.gmra.mrb[0].mxu0 %v4459
  %v4495 = vpop.f32.mrb[0].mxu0
  %v4496 = vadd.f32 0.0, %v4495
  %v4497 = vpop.f32.mrb[0].mxu0
  %v4498 = vpop.f32.mrb[0].mxu0
  %v4499 = vadd.f32 0.0, %v4498
  %v4500 = vpop.f32.mrb[0].mxu0
  %4501 = vdwg.mxu0
  %4502 = vrot.lane.b32.xlu0 %v485, 40
  %v4503 = vpop.permute.xlu0 %4502
  %v4506 = vsel %vm889, %v4172, 0
  %4508 = vmatprep.subr.bf16.mxu0 0
  %4509 = vmatpush1.bf16.msra.mxu0 %v4503
  %4510 = vmatprep.subr.bf16.mxu0 0
  %4511 = vmatpush1.bf16.msra.mxu0 0
  %4512 = vmatprep.subr.bf16.mxu0 0
  %4513 = vmatpush1.bf16.msra.mxu0 0
  %4514 = vmatprep.subr.bf16.mxu0 0
  %4515 = vmatpush1.bf16.msra.mxu0 0
  %4516 = vmatprep.subr.bf16.mxu0 0
  %4517 = vmatpush1.bf16.msra.mxu0 0
  %4518 = vmatprep.subr.bf16.mxu0 0
  %4519 = vmatpush1.bf16.msra.mxu0 0
  %4520 = vmatprep.subr.bf16.mxu0 0
  %4521 = vmatpush1.bf16.msra.mxu0 0
  %4522 = vmatprep.subr.bf16.mxu0 0
  %4523 = vmatpush1.bf16.msra.mxu0 0
  %4524 = vmatprep.subr.bf16.mxu0 0
  %4525 = vmatpush1.bf16.msra.mxu0 0
  %4526 = vmatprep.subr.bf16.mxu0 0
  %4527 = vmatpush1.bf16.msra.mxu0 0
  %4528 = vmatprep.subr.bf16.mxu0 0
  %4529 = vmatpush1.bf16.msra.mxu0 0
  %4530 = vmatprep.subr.bf16.mxu0 0
  %4531 = vmatpush1.bf16.msra.mxu0 0
  %4532 = vmatprep.subr.bf16.mxu0 0
  %4533 = vmatpush1.bf16.msra.mxu0 0
  %4534 = vmatprep.subr.bf16.mxu0 0
  %4535 = vmatpush1.bf16.msra.mxu0 0
  %4536 = vmatprep.subr.bf16.mxu0 0
  %4537 = vmatpush1.bf16.msra.mxu0 0
  %4538 = vmatprep.subr.bf16.mxu0 0
  %4539 = vmatpush1.bf16.msra.mxu0 0
  %4540 = vmatprep.mubr.bf16.mxu0 0
  %4541 = vmatmul.mubr.bf16.gmra.mrb[0].mxu0 %v4506
  %v4542 = vpop.f32.mrb[0].mxu0
  %v4543 = vadd.f32 0.0, %v4542
  %v4544 = vpop.f32.mrb[0].mxu0
  %v4545 = vpop.f32.mrb[0].mxu0
  %v4546 = vadd.f32 0.0, %v4545
  %v4547 = vpop.f32.mrb[0].mxu0
  %4548 = vdwg.mxu0
  %4565 = vrot.lane.b32.xlu0 %v4214, 24
  %v4566 = vpop.permute.xlu0 %4565
  %4567 = vrot.lane.b32.xlu0 %v4217, 24
  %v4568 = vpop.permute.xlu0 %4567
  %4569 = vrot.lane.b32.xlu0 %v4261, 24
  %v4570 = vpop.permute.xlu0 %4569
  %4571 = vrot.lane.b32.xlu0 %v4264, 24
  %v4572 = vpop.permute.xlu0 %4571
  %4573 = vrot.lane.b32.xlu0 %v4308, 24
  %v4574 = vpop.permute.xlu0 %4573
  %4575 = vrot.lane.b32.xlu0 %v4311, 24
  %v4576 = vpop.permute.xlu0 %4575
  %4577 = vrot.lane.b32.xlu0 %v4355, 24
  %v4578 = vpop.permute.xlu0 %4577
  %4579 = vrot.lane.b32.xlu0 %v4358, 24
  %v4580 = vpop.permute.xlu0 %4579
  %4581 = vrot.lane.b32.xlu0 %v4402, 24
  %v4582 = vpop.permute.xlu0 %4581
  %4583 = vrot.lane.b32.xlu0 %v4405, 24
  %v4584 = vpop.permute.xlu0 %4583
  %4585 = vrot.lane.b32.xlu0 %v4449, 24
  %v4586 = vpop.permute.xlu0 %4585
  %4587 = vrot.lane.b32.xlu0 %v4452, 24
  %v4588 = vpop.permute.xlu0 %4587
  %4589 = vrot.lane.b32.xlu0 %v4496, 24
  %v4590 = vpop.permute.xlu0 %4589
  %4591 = vrot.lane.b32.xlu0 %v4499, 24
  %v4592 = vpop.permute.xlu0 %4591
  %4593 = vrot.lane.b32.xlu0 %v4543, 24
  %v4594 = vpop.permute.xlu0 %4593
  %4595 = vrot.lane.b32.xlu0 %v4546, 24
  %v4596 = vpop.permute.xlu0 %4595
  %vm4613 = vcmask 261312
  %4614 = vst.msk [vmem:[#allocation2] sm:$0xff] %vm4613, %v4566
  %4615 = vst.msk [vmem:[#allocation2 + $0x8] sm:$0xff] %vm4613, %v4568
  %4616 = vst.msk [vmem:[#allocation2 + $0x10] sm:$0xff] %vm4613, %v4570
  %4617 = vst.msk [vmem:[#allocation2 + $0x18] sm:$0xff] %vm4613, %v4572
  %4618 = vst.msk [vmem:[#allocation2 + $0x20] sm:$0xff] %vm4613, %v4574
  %4619 = vst.msk [vmem:[#allocation2 + $0x28] sm:$0xff] %vm4613, %v4576
  %4620 = vst.msk [vmem:[#allocation2 + $0x30] sm:$0xff] %vm4613, %v4578
  %4621 = vst.msk [vmem:[#allocation2 + $0x38] sm:$0xff] %vm4613, %v4580
  %4622 = vst.msk [vmem:[#allocation2 + $0x40] sm:$0xff] %vm4613, %v4582
  %4623 = vst.msk [vmem:[#allocation2 + $0x48] sm:$0xff] %vm4613, %v4584
  %4624 = vst.msk [vmem:[#allocation2 + $0x50] sm:$0xff] %vm4613, %v4586
  %4625 = vst.msk [vmem:[#allocation2 + $0x58] sm:$0xff] %vm4613, %v4588
  %4626 = vst.msk [vmem:[#allocation2 + $0x60] sm:$0xff] %vm4613, %v4590
  %4627 = vst.msk [vmem:[#allocation2 + $0x68] sm:$0xff] %vm4613, %v4592
  %4628 = vst.msk [vmem:[#allocation2 + $0x70] sm:$0xff] %vm4613, %v4594
  %4629 = vst.msk [vmem:[#allocation2 + $0x78] sm:$0xff] %vm4613, %v4596
  %v4630 = vld [vmem:[#allocation2] sm:$0xff]
  %v4631 = vld [vmem:[#allocation2 + $0x8] sm:$0xff]
  %v4632 = vld [vmem:[#allocation2 + $0x10] sm:$0xff]
  %v4633 = vld [vmem:[#allocation2 + $0x18] sm:$0xff]
  %v4634 = vld [vmem:[#allocation2 + $0x20] sm:$0xff]
  %v4635 = vld [vmem:[#allocation2 + $0x28] sm:$0xff]
  %v4636 = vld [vmem:[#allocation2 + $0x30] sm:$0xff]
  %v4637 = vld [vmem:[#allocation2 + $0x38] sm:$0xff]
  %v4638 = vld [vmem:[#allocation2 + $0x40] sm:$0xff]
  %v4639 = vld [vmem:[#allocation2 + $0x48] sm:$0xff]
  %v4640 = vld [vmem:[#allocation2 + $0x50] sm:$0xff]
  %v4641 = vld [vmem:[#allocation2 + $0x58] sm:$0xff]
  %v4642 = vld [vmem:[#allocation2 + $0x60] sm:$0xff]
  %v4643 = vld [vmem:[#allocation2 + $0x68] sm:$0xff]
  %v4644 = vld [vmem:[#allocation2 + $0x70] sm:$0xff]
  %v4645 = vld [vmem:[#allocation2 + $0x78] sm:$0xff]
  %v4646 = vpack.c.bf16 %v4631, %v4630
  %v4647 = vpack.c.bf16 %v4633, %v4632
  %v4648 = vpack.c.bf16 %v4635, %v4634
  %v4649 = vpack.c.bf16 %v4637, %v4636
  %v4650 = vpack.c.bf16 %v4639, %v4638
  %v4651 = vpack.c.bf16 %v4641, %v4640
  %v4652 = vpack.c.bf16 %v4643, %v4642
  %v4653 = vpack.c.bf16 %v4645, %v4644
  %v4654 = vld [vmem:[%s6] sm:$0xf]
  %v4655 = vld [vmem:[%s6 + $0x4] sm:$0xf]
  %v4656 = vld [vmem:[%s6 + $0x8] sm:$0xf]
  %v4657 = vld [vmem:[%s6 + $0xc] sm:$0xf]
  %v4658 = vld [vmem:[%s7] sm:$0x1]
  %v4660 = vlaneseq
  %v4661 = vshrl.u32 %v4660, 7
  %v4662 = vsub.s32 0, %v4661
  %v4663 = vrot.slane %v4658, %v4662
  %v4669 = vunpack.c.l.b16 %v4654
  %v4670 = vunpack.c.l.b16 %v4655
  %v4671 = vunpack.c.l.b16 %v4656
  %v4672 = vunpack.c.l.b16 %v4657
  %v4673 = vpack.c.b16 %v4670, %v4669
  %v4674 = vpack.c.b16 %v4672, %v4671
  %v4678 = vsel %vm46, %v4646, 0
  %v4681 = vsel %vm46, %v4647, 0
  %v4684 = vsel %vm46, %v4648, 0
  %v4687 = vsel %vm46, %v4649, 0
  %v4690 = vsel %vm46, %v4650, 0
  %v4693 = vsel %vm46, %v4651, 0
  %v4696 = vsel %vm46, %v4652, 0
  %v4699 = vsel %vm46, %v4653, 0
  %4701 = vmatprep.subr.bf16.mxu0 0
  %4702 = vmatpush1.bf16.msra.mxu0 %v4673
  %4703 = vmatprep.subr.bf16.mxu0 0
  %4704 = vmatpush1.bf16.msra.mxu0 %v4674
  %4705 = vmatprep.subr.bf16.mxu0 0
  %4706 = vmatpush1.bf16.msra.mxu0 0
  %4707 = vmatprep.subr.bf16.mxu0 0
  %4708 = vmatpush1.bf16.msra.mxu0 0
  %4709 = vmatprep.subr.bf16.mxu0 0
  %4710 = vmatpush1.bf16.msra.mxu0 0
  %4711 = vmatprep.subr.bf16.mxu0 0
  %4712 = vmatpush1.bf16.msra.mxu0 0
  %4713 = vmatprep.subr.bf16.mxu0 0
  %4714 = vmatpush1.bf16.msra.mxu0 0
  %4715 = vmatprep.subr.bf16.mxu0 0
  %4716 = vmatpush1.bf16.msra.mxu0 0
  %4717 = vmatprep.subr.bf16.mxu0 0
  %4718 = vmatpush1.bf16.msra.mxu0 0
  %4719 = vmatprep.subr.bf16.mxu0 0
  %4720 = vmatpush1.bf16.msra.mxu0 0
  %4721 = vmatprep.subr.bf16.mxu0 0
  %4722 = vmatpush1.bf16.msra.mxu0 0
  %4723 = vmatprep.subr.bf16.mxu0 0
  %4724 = vmatpush1.bf16.msra.mxu0 0
  %4725 = vmatprep.subr.bf16.mxu0 0
  %4726 = vmatpush1.bf16.msra.mxu0 0
  %4727 = vmatprep.subr.bf16.mxu0 0
  %4728 = vmatpush1.bf16.msra.mxu0 0
  %4729 = vmatprep.subr.bf16.mxu0 0
  %4730 = vmatpush1.bf16.msra.mxu0 0
  %4731 = vmatprep.subr.bf16.mxu0 0
  %4732 = vmatpush1.bf16.msra.mxu0 0
  %4733 = vmatprep.mubr.bf16.mxu0 0
  %4734 = vmatmul.mubr.bf16.gmra.mrb[0].mxu0 %v4678
  %v4735 = vpop.f32.mrb[0].mxu0
  %v4736 = vadd.f32 %v4663, %v4735
  %v4737 = vpop.f32.mrb[0].mxu0
  %v4738 = vpop.f32.mrb[0].mxu0
  %v4739 = vadd.f32 %v4663, %v4738
  %v4740 = vpop.f32.mrb[0].mxu0
  %4741 = vmatprep.mubr.bf16.mxu0 0
  %4742 = vmatmul.mubr.bf16.gmra.mrb[0].mxu0 %v4681
  %v4743 = vpop.f32.mrb[0].mxu0
  %v4744 = vadd.f32 %v4663, %v4743
  %v4745 = vpop.f32.mrb[0].mxu0
  %v4746 = vpop.f32.mrb[0].mxu0
  %v4747 = vadd.f32 %v4663, %v4746
  %v4748 = vpop.f32.mrb[0].mxu0
  %4749 = vmatprep.mubr.bf16.mxu0 0
  %4750 = vmatmul.mubr.bf16.gmra.mrb[0].mxu0 %v4684
  %v4751 = vpop.f32.mrb[0].mxu0
  %v4752 = vadd.f32 %v4663, %v4751
  %v4753 = vpop.f32.mrb[0].mxu0
  %v4754 = vpop.f32.mrb[0].mxu0
  %v4755 = vadd.f32 %v4663, %v4754
  %v4756 = vpop.f32.mrb[0].mxu0
  %4757 = vmatprep.mubr.bf16.mxu0 0
  %4758 = vmatmul.mubr.bf16.gmra.mrb[0].mxu0 %v4687
  %v4759 = vpop.f32.mrb[0].mxu0
  %v4760 = vadd.f32 %v4663, %v4759
  %v4761 = vpop.f32.mrb[0].mxu0
  %v4762 = vpop.f32.mrb[0].mxu0
  %v4763 = vadd.f32 %v4663, %v4762
  %v4764 = vpop.f32.mrb[0].mxu0
  %4765 = vmatprep.mubr.bf16.mxu0 0
  %4766 = vmatmul.mubr.bf16.gmra.mrb[0].mxu0 %v4690
  %v4767 = vpop.f32.mrb[0].mxu0
  %v4768 = vadd.f32 %v4663, %v4767
  %v4769 = vpop.f32.mrb[0].mxu0
  %v4770 = vpop.f32.mrb[0].mxu0
  %v4771 = vadd.f32 %v4663, %v4770
  %v4772 = vpop.f32.mrb[0].mxu0
  %4773 = vmatprep.mubr.bf16.mxu0 0
  %4774 = vmatmul.mubr.bf16.gmra.mrb[0].mxu0 %v4693
  %v4775 = vpop.f32.mrb[0].mxu0
  %v4776 = vadd.f32 %v4663, %v4775
  %v4777 = vpop.f32.mrb[0].mxu0
  %v4778 = vpop.f32.mrb[0].mxu0
  %v4779 = vadd.f32 %v4663, %v4778
  %v4780 = vpop.f32.mrb[0].mxu0
  %4781 = vmatprep.mubr.bf16.mxu0 0
  %4782 = vmatmul.mubr.bf16.gmra.mrb[0].mxu0 %v4696
  %v4783 = vpop.f32.mrb[0].mxu0
  %v4784 = vadd.f32 %v4663, %v4783
  %v4785 = vpop.f32.mrb[0].mxu0
  %v4786 = vpop.f32.mrb[0].mxu0
  %v4787 = vadd.f32 %v4663, %v4786
  %v4788 = vpop.f32.mrb[0].mxu0
  %4789 = vmatprep.mubr.bf16.mxu0 0
  %4790 = vmatmul.mubr.bf16.gmra.mrb[0].mxu0 %v4699
  %v4791 = vpop.f32.mrb[0].mxu0
  %v4792 = vadd.f32 %v4663, %v4791
  %v4793 = vpop.f32.mrb[0].mxu0
  %v4794 = vpop.f32.mrb[0].mxu0
  %v4795 = vadd.f32 %v4663, %v4794
  %v4796 = vpop.f32.mrb[0].mxu0
  %4797 = vdwg.mxu0
  %v4798 = vadd.f32 %v30, %v4736
  %v4799 = vadd.f32 %v31, %v4739
  %v4800 = vadd.f32 %v32, %v4744
  %v4801 = vadd.f32 %v33, %v4747
  %v4802 = vadd.f32 %v34, %v4752
  %v4803 = vadd.f32 %v35, %v4755
  %v4804 = vadd.f32 %v36, %v4760
  %v4805 = vadd.f32 %v37, %v4763
  %v4806 = vadd.f32 %v38, %v4768
  %v4807 = vadd.f32 %v39, %v4771
  %v4808 = vadd.f32 %v40, %v4776
  %v4809 = vadd.f32 %v41, %v4779
  %v4810 = vadd.f32 %v42, %v4784
  %v4811 = vadd.f32 %v43, %v4787
  %v4812 = vadd.f32 %v44, %v4792
  %v4813 = vadd.f32 %v45, %v4795
  %4814 = vst.msk [vmem:[%s8] sm:$0xff] %vm46, %v4798
  %4815 = vst.msk [vmem:[%s8 + $0x8] sm:$0xff] %vm46, %v4799
  %4816 = vst.msk [vmem:[%s8 + $0x10] sm:$0xff] %vm46, %v4800
  %4817 = vst.msk [vmem:[%s8 + $0x18] sm:$0xff] %vm46, %v4801
  %4818 = vst.msk [vmem:[%s8 + $0x20] sm:$0xff] %vm46, %v4802
  %4819 = vst.msk [vmem:[%s8 + $0x28] sm:$0xff] %vm46, %v4803
  %4820 = vst.msk [vmem:[%s8 + $0x30] sm:$0xff] %vm46, %v4804
  %4821 = vst.msk [vmem:[%s8 + $0x38] sm:$0xff] %vm46, %v4805
  %4822 = vst.msk [vmem:[%s8 + $0x40] sm:$0xff] %vm46, %v4806
  %4823 = vst.msk [vmem:[%s8 + $0x48] sm:$0xff] %vm46, %v4807
  %4824 = vst.msk [vmem:[%s8 + $0x50] sm:$0xff] %vm46, %v4808
  %4825 = vst.msk [vmem:[%s8 + $0x58] sm:$0xff] %vm46, %v4809
  %4826 = vst.msk [vmem:[%s8 + $0x60] sm:$0xff] %vm46, %v4810
  %4827 = vst.msk [vmem:[%s8 + $0x68] sm:$0xff] %vm46, %v4811
  %4828 = vst.msk [vmem:[%s8 + $0x70] sm:$0xff] %vm46, %v4812
  %4829 = vst.msk [vmem:[%s8 + $0x78] sm:$0xff] %vm46, %v4813
  // Predicated region
  $region34: #{tpu_custom_call.1} parent=0 // pred_check
    _
  $region35: #{tpu_custom_call.1} parent=0 // pred_check_branch
    %4831 = sbr.rel (0) target = $region37
  $region36: #{tpu_custom_call.1} parent=0 // pred_region
    _
  $region37: #{tpu_custom_call.1} parent=0 // pred_fallthru
    _
  // Predicated region
  $region38: #{tpu_custom_call.1} parent=0 // pred_check
    _
  $region39: #{tpu_custom_call.1} parent=0 // pred_check_branch
    %4833 = sbr.rel (0) target = $region41
  $region40: #{tpu_custom_call.1} parent=0 // pred_region
    _
  $region41: #{tpu_custom_call.1} parent=0 // pred_fallthru
    _

</llo_original>
